<compile_context>
chip_gen: v6e
topology: v6e:2x2x1
jax: 0.10.0
libtpu: 0.0.40
codegen_flags: <defaults>
</compile_context>

<pallas_src>
import functools

import jax
import jax.numpy as jnp
import numpy as np
from jax import lax
from jax.experimental import pallas as pl
from jax.experimental.pallas import tpu as pltpu

# ----------------------------- config (small, consistent with the module) -----
B = 2            # batch
S = 8            # sequence length
OUT = 1          # config.output_size
MAX_LEN = 64     # config.max_len (only the first S rows are used)
L = 2            # config.num_layers
H = 16           # config.hidden_dim
HH = H // 2      # hidden_dim // 2 (embed_x / embed_dx width)
MLP = 64         # config.mlp_dim
NH = 4           # config.num_heads
HD = H // NH     # head dim
LN_EPS = 1e-5    # PyTorch nn.LayerNorm default

# Row layout of the packed (NV, H) "vector blob" (all width-H parameters).
R_EMB_WX = 0                 # embed_x weight spread over lanes [0, HH)
R_EMB_WDX = 1                # embed_dx weight spread over lanes [HH, H)
R_EMB_B = 2                  # [embed_x bias | embed_dx bias]
R_LAYER0 = 3                 # per layer: ln1w, ln1b, ln2w, ln2b, out_b, m2b
ROWS_PER_LAYER = 6
R_LNF = R_LAYER0 + ROWS_PER_LAYER * L
R_LNFB = R_LNF + 1
R_HW = R_LNF + 2             # 2 rows: logits_x weight, logits_dx weight
R_HB = R_LNF + 4             # lane 0 = logits_x bias, lane 1 = logits_dx bias
NV = R_HB + 1

# Row layout of the packed (L * BROWS, BW) matmul-weight blob (BW = MLP lanes).
BW = MLP
BR_QKVW = 0                  # rows [0, H): in_proj weight, lanes [0, 3H)
BR_QKVB = BR_QKVW + H        # 1 row: in_proj bias, lanes [0, 3H)
BR_WO = BR_QKVB + 1          # rows [.., +H): out_proj weight, lanes [0, H)
BR_M1W = BR_WO + H           # rows [.., +H): mlp dense1 weight, lanes [0, MLP)
BR_M1B = BR_M1W + H          # 1 row: dense1 bias
BR_M2W = BR_M1B + 1          # rows [.., +MLP): dense2 weight, lanes [0, H)
BROWS = BR_M2W + MLP         # rows per layer (= 3H + 2 + MLP)


def _layer_norm(v, w, b):
    # one-pass variance: the two cross-lane reduces are independent
    mu = jnp.mean(v, axis=-1, keepdims=True)
    ms = jnp.mean(v * v, axis=-1, keepdims=True)
    var = ms - mu * mu
    return (v - mu) * lax.rsqrt(var + LN_EPS) * w + b


# ------------------------------------ kernel ----------------------------------
def decoder_kernel(x_ref, pos_ref, blob_ref, vec_ref, o_ref):
    bsl = x_ref.shape[0]                           # B*S rows in this (only) step
    vec = vec_ref[...]                             # (NV, H) packed small params
    x = x_ref[...]                                 # (bsl, 1)

    # build_deltas over the flattened batch: dx = 0 at every sequence start.
    row = lax.broadcasted_iota(jnp.int32, (bsl, 1), 0)
    x_prev = pltpu.roll(x, shift=1, axis=0)
    if S & (S - 1) == 0:
        seq_off = jnp.bitwise_and(row, S - 1)
    else:
        seq_off = lax.rem(row, S)
    dx = jnp.where(seq_off == 0, 0.0, x - x_prev)

    # fused embed_x / embed_dx (+bias) + pre-tiled positional embedding
    h = (x * vec[R_EMB_WX:R_EMB_WX + 1, :]
         + dx * vec[R_EMB_WDX:R_EMB_WDX + 1, :]
         + vec[R_EMB_B:R_EMB_B + 1, :]
         + pos_ref[...])                           # (bsl, H)

    # additive block-diagonal mask: rows only attend inside their own sequence
    mbias = None
    if bsl > S:
        ri = lax.broadcasted_iota(jnp.int32, (bsl, bsl), 0)
        ci = lax.broadcasted_iota(jnp.int32, (bsl, bsl), 1)
        if S & (S - 1) == 0:
            shift = S.bit_length() - 1
            same = jnp.right_shift(ri, shift) == jnp.right_shift(ci, shift)
        else:
            same = (ri // S) == (ci // S)
        mbias = jnp.where(same, 0.0, -1e30).astype(jnp.float32)   # (bsl, bsl)

    scale = 1.0 / (HD ** 0.5)

    for l in range(L):                             # static unroll over layers
        vb = R_LAYER0 + ROWS_PER_LAYER * l
        ln1w, ln1b = vec[vb + 0:vb + 1, :], vec[vb + 1:vb + 2, :]
        ln2w, ln2b = vec[vb + 2:vb + 3, :], vec[vb + 3:vb + 4, :]
        out_b, m2b = vec[vb + 4:vb + 5, :], vec[vb + 5:vb + 6, :]
        base = BROWS * l

        # ---- multi-head self-attention -------------------------------------
        y = _layer_norm(h, ln1w, ln1b)                                 # (bsl, H)
        w_qkv = blob_ref[base + BR_QKVW: base + BR_QKVW + H, :]        # (H, BW)
        b_qkv = blob_ref[base + BR_QKVB: base + BR_QKVB + 1, :]        # (1, BW)
        qkv = jnp.dot(y, w_qkv, preferred_element_type=jnp.float32) + b_qkv
        # split heads with static lane slices + leading-axis stack
        qh = jnp.stack([qkv[:, hh * HD:(hh + 1) * HD]
                        for hh in range(NH)], axis=0) * scale          # (NH,bsl,HD)
        kh = jnp.stack([qkv[:, H + hh * HD: H + (hh + 1) * HD]
                        for hh in range(NH)], axis=0)
        vh = jnp.stack([qkv[:, 2 * H + hh * HD: 2 * H + (hh + 1) * HD]
                        for hh in range(NH)], axis=0)
        s = lax.dot_general(qh, kh, (((2,), (2,)), ((0,), (0,))),
                            preferred_element_type=jnp.float32)        # (NH,bsl,bsl)
        if mbias is not None:
            s = s + mbias                          # 2-D mask broadcasts over heads
        s = s - jnp.max(s, axis=-1, keepdims=True)
        p = jnp.exp(s)
        p = p * pl.reciprocal(jnp.sum(p, axis=-1, keepdims=True), approx=True)
        ctx = lax.dot_general(p, vh, (((2,), (1,)), ((0,), (0,))),
                              preferred_element_type=jnp.float32)      # (NH,bsl,HD)
        ctx2 = jnp.concatenate([ctx[hh] for hh in range(NH)], axis=-1)  # (bsl, H)
        w_o = blob_ref[base + BR_WO: base + BR_WO + H, 0:H]            # (H, H)
        proj = jnp.dot(ctx2, w_o, preferred_element_type=jnp.float32)  # (bsl, H)
        h = h + proj + out_b                       # residual + out_proj bias

        # ---- MLP block ------------------------------------------------------
        z = _layer_norm(h, ln2w, ln2b)
        w_m1 = blob_ref[base + BR_M1W: base + BR_M1W + H, :]           # (H, MLP)
        b_m1 = blob_ref[base + BR_M1B: base + BR_M1B + 1, :]           # (1, MLP)
        z = jnp.dot(z, w_m1, preferred_element_type=jnp.float32) + b_m1
        z = jnp.maximum(z, 0.0)
        w_m2 = blob_ref[base + BR_M2W: base + BR_M2W + MLP, 0:H]       # (MLP, H)
        z = jnp.dot(z, w_m2, preferred_element_type=jnp.float32) + m2b
        h = h + z                                  # residual

    # final LayerNorm + fused logits_x / logits_dx heads -> lane-packed (bsl, 2)
    hf = _layer_norm(h, vec[R_LNF:R_LNF + 1, :], vec[R_LNFB:R_LNFB + 1, :])
    out = lax.dot_general(hf, vec[R_HW:R_HW + 2, :], (((1,), (1,)), ((), ())),
                          preferred_element_type=jnp.float32)          # (bsl, 2)
    o_ref[...] = out + vec[R_HB:R_HB + 1, 0:2]


# ---------------------------------- wrapper ------------------------------------
@jax.jit
def decoder_forward(x, packed):
    """x: (B, S, 1) f32 -> (logits_x, logits_dx), each (B, S, 1).

    Single grid step over the whole (B*S, H) problem — at this size the kernel
    is launch/latency-bound on every generation, so no grid splitting.
    """
    b, s, _ = x.shape
    assert s == S
    bsl = b * s
    x_flat = x.reshape(bsl, 1)
    pos, blob, vec = packed["pos"], packed["blob"], packed["vec"]
    assert pos.shape == (bsl, H)

    out = pl.pallas_call(
        decoder_kernel,
        grid=(1,),
        in_specs=[
            pl.BlockSpec((bsl, 1), lambda i: (0, 0)),
            pl.BlockSpec(pos.shape, lambda i: (0, 0)),
            pl.BlockSpec(blob.shape, lambda i: (0, 0)),
            pl.BlockSpec(vec.shape, lambda i: (0, 0)),
        ],
        out_specs=pl.BlockSpec((bsl, 2), lambda i: (0, 0)),
        out_shape=jax.ShapeDtypeStruct((bsl, 2), jnp.float32),
        compiler_params=pltpu.CompilerParams(dimension_semantics=("arbitrary",)),
    )(x_flat, pos, blob, vec)
    out = out.reshape(b, s, 2)
    return out[..., 0:1], out[..., 1:2]


# ------------------- deterministic PyTorch-layout parameters -------------------
def init_params(key):
    ks = iter(jax.random.split(key, 64))

    def nrm(shape, scale=0.1):
        return (jax.random.normal(next(ks), shape) * scale).astype(jnp.float32)

    p = {
        "pos": nrm((MAX_LEN, H), 0.02),
        "exw": nrm((HH, 1)), "exb": nrm((HH,), 0.01),      # embed_x (Linear(1,H/2))
        "edw": nrm((HH, 1)), "edb": nrm((HH,), 0.01),      # embed_dx
        "lnfw": 1.0 + nrm((H,), 0.01), "lnfb": nrm((H,), 0.01),
        "lxw": nrm((1, H)), "lxb": nrm((1,), 0.01),        # logits_x (Linear(H,1))
        "ldw": nrm((1, H)), "ldb": nrm((1,), 0.01),        # logits_dx
        "layers": [],
    }
    for _ in range(L):
        p["layers"].append({
            "ln1w": 1.0 + nrm((H,), 0.01), "ln1b": nrm((H,), 0.01),
            "in_w": nrm((3 * H, H)), "in_b": nrm((3 * H,), 0.01),   # MHA in_proj
            "out_w": nrm((H, H)), "out_b": nrm((H,), 0.01),         # MHA out_proj
            "ln2w": 1.0 + nrm((H,), 0.01), "ln2b": nrm((H,), 0.01),
            "m1w": nrm((MLP, H)), "m1b": nrm((MLP,), 0.01),         # MLP dense1
            "m2w": nrm((H, MLP)), "m2b": nrm((H,), 0.01),           # MLP dense2
        })
    return p


def pack_params(p, batch=B):
    """Repack PyTorch-layout parameters into the 3 consolidated kernel inputs."""
    # ---- (NV, H) vector blob -----------------------------------------------
    wx_row = jnp.zeros((H,), jnp.float32).at[:HH].set(p["exw"][:, 0])
    wdx_row = jnp.zeros((H,), jnp.float32).at[HH:].set(p["edw"][:, 0])
    eb_row = jnp.concatenate([p["exb"], p["edb"]])
    vec_rows = [wx_row, wdx_row, eb_row]

    # ---- (L*BROWS, BW) matmul-weight blob ------------------------------------
    def pad_w(a):
        a = jnp.asarray(a, jnp.float32)
        r, c = a.shape
        return jnp.zeros((r, BW), jnp.float32).at[:, :c].set(a)

    blob_rows = []
    for lp in p["layers"]:
        blob_rows += [
            pad_w(lp["in_w"].T),            # (H, 3H): y @ W, head h in lane block h
            pad_w(lp["in_b"][None, :]),     # (1, 3H)
            pad_w(lp["out_w"].T),           # (H, H)
            pad_w(lp["m1w"].T),             # (H, MLP)
            pad_w(lp["m1b"][None, :]),      # (1, MLP)
            pad_w(lp["m2w"].T),             # (MLP, H)
        ]
        vec_rows += [lp["ln1w"], lp["ln1b"], lp["ln2w"], lp["ln2b"],
                     lp["out_b"], lp["m2b"]]

    head_b = (jnp.zeros((H,), jnp.float32)
              .at[0].set(p["lxb"][0]).at[1].set(p["ldb"][0]))
    vec_rows += [p["lnfw"], p["lnfb"], p["lxw"][0], p["ldw"][0], head_b]

    vec = jnp.stack(vec_rows).astype(jnp.float32)
    assert vec.shape == (NV, H)
    blob = jnp.concatenate(blob_rows, axis=0)
    assert blob.shape == (BROWS * L, BW)

    # pre-tiled positional embedding for the flattened (B*S, H) tile
    pos_tiled = jnp.tile(p["pos"][:S], (batch, 1)).astype(jnp.float32)
    return {"pos": pos_tiled, "blob": blob, "vec": vec}


# ----------------------------- pure-JAX reference ------------------------------
def reference_forward(x, p):
    b, s, _ = x.shape
    dx = jnp.concatenate([jnp.zeros_like(x[:, :1]), x[:, 1:] - x[:, :-1]], axis=1)
    xe = x @ p["exw"].T + p["exb"]
    dxe = dx @ p["edw"].T + p["edb"]
    h = jnp.concatenate([xe, dxe], axis=-1) + p["pos"][:s]

    def ln(v, w, bb_):
        mu = jnp.mean(v, -1, keepdims=True)
        var = jnp.mean((v - mu) ** 2, -1, keepdims=True)
        return (v - mu) / jnp.sqrt(var + LN_EPS) * w + bb_

    for lp in p["layers"]:
        y = ln(h, lp["ln1w"], lp["ln1b"])
        qkv = y @ lp["in_w"].T + lp["in_b"]
        q, k, v = jnp.split(qkv, 3, axis=-1)
        q = q / jnp.sqrt(HD)
        qh = q.reshape(b, s, NH, HD).transpose(0, 2, 1, 3)
        kh = k.reshape(b, s, NH, HD).transpose(0, 2, 1, 3)
        vh = v.reshape(b, s, NH, HD).transpose(0, 2, 1, 3)
        sc = qh @ kh.transpose(0, 1, 3, 2)
        pm = jax.nn.softmax(sc, axis=-1)
        o = (pm @ vh).transpose(0, 2, 1, 3).reshape(b, s, H)
        h = h + (o @ lp["out_w"].T + lp["out_b"])
        z = ln(h, lp["ln2w"], lp["ln2b"])
        z = jax.nn.relu(z @ lp["m1w"].T + lp["m1b"]) @ lp["m2w"].T + lp["m2b"]
        h = h + z

    hf = ln(h, p["lnfw"], p["lnfb"])
    lx = hf @ p["lxw"].T + p["lxb"]
    ld = hf @ p["ldw"].T + p["ldb"]
    return lx, ld


# ------------------------------------ main --------------------------------------
if __name__ == "__main__":
    key = jax.random.PRNGKey(0)
    k_x, k_p = jax.random.split(key)
    x = jax.random.normal(k_x, (B, S, 1), dtype=jnp.float32)
    params = init_params(k_p)
    packed = pack_params(params)

    ref_x, ref_dx = reference_forward(x, params)

    logits_x, logits_dx = decoder_forward(x, packed)
    jax.block_until_ready((logits_x, logits_dx))
    # tolerance 2e-3 because the kernel uses the approximate EUP reciprocal in softmax
    np.testing.assert_allclose(np.asarray(logits_x), np.asarray(ref_x),
                               rtol=2e-3, atol=2e-3)
    np.testing.assert_allclose(np.asarray(logits_dx), np.asarray(ref_dx),
                               rtol=2e-3, atol=2e-3)

    assert logits_x.shape == (B, S, OUT) and logits_dx.shape == (B, S, OUT)
    print("KERNEL_OK")
</pallas_src>

<mosaic_0001>
module attributes {stable_mosaic.version = 11 : i64} {
  func.func @decoder_kernel(%arg0: i32, %arg1: memref<16x1xf32, #tpu.memory_space<vmem>>, %arg2: memref<16x16xf32, #tpu.memory_space<vmem>>, %arg3: memref<228x64xf32, #tpu.memory_space<vmem>>, %arg4: memref<20x16xf32, #tpu.memory_space<vmem>>, %arg5: memref<16x2xf32, #tpu.memory_space<vmem>>) attributes {dimension_semantics = [#tpu.dimension_semantics<arbitrary>], iteration_bounds = array<i64: 1>, scalar_prefetch = 0 : i64, scratch_operands = 0 : i64, tpu.core_type = #tpu.core_type<tc>, window_params = [{pipeline_mode = #tpu.pipeline_mode<synchronous>, transform_indices = @transform_0, window_bounds = array<i64: 16, 1>}, {pipeline_mode = #tpu.pipeline_mode<synchronous>, transform_indices = @transform_1, window_bounds = array<i64: 16, 16>}, {pipeline_mode = #tpu.pipeline_mode<synchronous>, transform_indices = @transform_2, window_bounds = array<i64: 228, 64>}, {pipeline_mode = #tpu.pipeline_mode<synchronous>, transform_indices = @transform_3, window_bounds = array<i64: 20, 16>}, {pipeline_mode = #tpu.pipeline_mode<synchronous>, transform_indices = @transform_4, window_bounds = array<i64: 16, 2>}]} {
    %c0 = arith.constant 0 : index
    %c0_0 = arith.constant 0 : index
    %0 = vector.load %arg4[%c0, %c0_0] : memref<20x16xf32, #tpu.memory_space<vmem>>, vector<20x16xf32>
    %c0_1 = arith.constant 0 : index
    %c0_2 = arith.constant 0 : index
    %1 = vector.load %arg1[%c0_1, %c0_2] : memref<16x1xf32, #tpu.memory_space<vmem>>, vector<16x1xf32>
    %2 = tpu.iota {dimensions = array<i32: 0>} : vector<16x1xi32>
    %c1_i32 = arith.constant 1 : i32
    %3 = tpu.dynamic_rotate %1 by %c1_i32 dim 0 : vector<16x1xf32>, i32 -> vector<16x1xf32>
    %c7_i32 = arith.constant 7 : i32
    %4 = vector.broadcast %c7_i32 : i32 to vector<16x1xi32>
    %5 = arith.andi %2, %4 : vector<16x1xi32>
    %c0_i32 = arith.constant 0 : i32
    %6 = vector.broadcast %c0_i32 : i32 to vector<16x1xi32>
    %7 = arith.cmpi eq, %5, %6 : vector<16x1xi32>
    %8 = arith.subf %1, %3 : vector<16x1xf32>
    %cst = arith.constant 0.000000e+00 : f32
    %9 = vector.broadcast %cst : f32 to vector<16x1xf32>
    %10 = arith.select %7, %9, %8 : vector<16x1xi1>, vector<16x1xf32>
    %11 = vector.extract_strided_slice %0 {offsets = [0, 0], sizes = [1, 16], strides = [1, 1]} : vector<20x16xf32> to vector<1x16xf32>
    %12 = vector.broadcast %1 : vector<16x1xf32> to vector<16x16xf32>
    %13 = vector.broadcast %11 : vector<1x16xf32> to vector<16x16xf32>
    %14 = arith.mulf %12, %13 : vector<16x16xf32>
    %15 = vector.extract_strided_slice %0 {offsets = [1, 0], sizes = [1, 16], strides = [1, 1]} : vector<20x16xf32> to vector<1x16xf32>
    %16 = vector.broadcast %10 : vector<16x1xf32> to vector<16x16xf32>
    %17 = vector.broadcast %15 : vector<1x16xf32> to vector<16x16xf32>
    %18 = arith.mulf %16, %17 : vector<16x16xf32>
    %19 = arith.addf %14, %18 : vector<16x16xf32>
    %20 = vector.extract_strided_slice %0 {offsets = [2, 0], sizes = [1, 16], strides = [1, 1]} : vector<20x16xf32> to vector<1x16xf32>
    %21 = vector.broadcast %20 : vector<1x16xf32> to vector<16x16xf32>
    %22 = arith.addf %19, %21 : vector<16x16xf32>
    %c0_3 = arith.constant 0 : index
    %c0_4 = arith.constant 0 : index
    %23 = vector.load %arg2[%c0_3, %c0_4] : memref<16x16xf32, #tpu.memory_space<vmem>>, vector<16x16xf32>
    %24 = arith.addf %22, %23 : vector<16x16xf32>
    %25 = tpu.iota {dimensions = array<i32: 0>} : vector<16x16xi32>
    %26 = tpu.iota {dimensions = array<i32: 1>} : vector<16x16xi32>
    %c3_i32 = arith.constant 3 : i32
    %27 = vector.broadcast %c3_i32 : i32 to vector<16x16xi32>
    %28 = arith.shrsi %25, %27 : vector<16x16xi32>
    %c3_i32_5 = arith.constant 3 : i32
    %29 = vector.broadcast %c3_i32_5 : i32 to vector<16x16xi32>
    %30 = arith.shrsi %26, %29 : vector<16x16xi32>
    %31 = arith.cmpi eq, %28, %30 : vector<16x16xi32>
    %cst_6 = arith.constant 0.000000e+00 : f32
    %cst_7 = arith.constant -1.000000e+30 : f32
    %32 = vector.broadcast %cst_6 : f32 to vector<16x16xf32>
    %33 = vector.broadcast %cst_7 : f32 to vector<16x16xf32>
    %34 = arith.select %31, %32, %33 : vector<16x16xi1>, vector<16x16xf32>
    %35 = vector.extract_strided_slice %0 {offsets = [3, 0], sizes = [1, 16], strides = [1, 1]} : vector<20x16xf32> to vector<1x16xf32>
    %36 = vector.extract_strided_slice %0 {offsets = [4, 0], sizes = [1, 16], strides = [1, 1]} : vector<20x16xf32> to vector<1x16xf32>
    %37 = vector.extract_strided_slice %0 {offsets = [5, 0], sizes = [1, 16], strides = [1, 1]} : vector<20x16xf32> to vector<1x16xf32>
    %38 = vector.extract_strided_slice %0 {offsets = [6, 0], sizes = [1, 16], strides = [1, 1]} : vector<20x16xf32> to vector<1x16xf32>
    %39 = vector.extract_strided_slice %0 {offsets = [7, 0], sizes = [1, 16], strides = [1, 1]} : vector<20x16xf32> to vector<1x16xf32>
    %40 = vector.extract_strided_slice %0 {offsets = [8, 0], sizes = [1, 16], strides = [1, 1]} : vector<20x16xf32> to vector<1x16xf32>
    %cst_8 = arith.constant dense<0.000000e+00> : vector<16xf32>
    %41 = vector.multi_reduction <add>, %24, %cst_8 [1] : vector<16x16xf32> to vector<16xf32>
    %42 = vector.shape_cast %41 : vector<16xf32> to vector<16x1xf32>
    %cst_9 = arith.constant 1.600000e+01 : f32
    %43 = vector.broadcast %cst_9 : f32 to vector<16x1xf32>
    %44 = arith.divf %42, %43 : vector<16x1xf32>
    %45 = arith.mulf %24, %24 : vector<16x16xf32>
    %cst_10 = arith.constant dense<0.000000e+00> : vector<16xf32>
    %46 = vector.multi_reduction <add>, %45, %cst_10 [1] : vector<16x16xf32> to vector<16xf32>
    %47 = vector.shape_cast %46 : vector<16xf32> to vector<16x1xf32>
    %cst_11 = arith.constant 1.600000e+01 : f32
    %48 = vector.broadcast %cst_11 : f32 to vector<16x1xf32>
    %49 = arith.divf %47, %48 : vector<16x1xf32>
    %50 = arith.mulf %44, %44 : vector<16x1xf32>
    %51 = arith.subf %49, %50 : vector<16x1xf32>
    %52 = vector.broadcast %44 : vector<16x1xf32> to vector<16x16xf32>
    %53 = arith.subf %24, %52 : vector<16x16xf32>
    %cst_12 = arith.constant 9.99999974E-6 : f32
    %54 = vector.broadcast %cst_12 : f32 to vector<16x1xf32>
    %55 = arith.addf %51, %54 : vector<16x1xf32>
    %56 = math.rsqrt %55 : vector<16x1xf32>
    %57 = vector.broadcast %56 : vector<16x1xf32> to vector<16x16xf32>
    %58 = arith.mulf %53, %57 : vector<16x16xf32>
    %59 = vector.broadcast %35 : vector<1x16xf32> to vector<16x16xf32>
    %60 = arith.mulf %58, %59 : vector<16x16xf32>
    %61 = vector.broadcast %36 : vector<1x16xf32> to vector<16x16xf32>
    %62 = arith.addf %60, %61 : vector<16x16xf32>
    %c0_13 = arith.constant 0 : index
    %c0_14 = arith.constant 0 : index
    %63 = vector.load %arg3[%c0_13, %c0_14] : memref<228x64xf32, #tpu.memory_space<vmem>>, vector<16x64xf32>
    %c16 = arith.constant 16 : index
    %c0_15 = arith.constant 0 : index
    %64 = vector.load %arg3[%c16, %c0_15] : memref<228x64xf32, #tpu.memory_space<vmem>>, vector<1x64xf32>
    %cst_16 = arith.constant dense<0.000000e+00> : vector<16x64xf32>
    %65 = tpu.matmul %62, %63, %cst_16 {dimension_numbers = #tpu.dot_dimension_numbers<[1], [0], [0], [1], [0, 0, 1, 1], [], []>} : vector<16x16xf32>, vector<16x64xf32>, vector<16x64xf32> -> vector<16x64xf32>
    %66 = vector.broadcast %64 : vector<1x64xf32> to vector<16x64xf32>
    %67 = arith.addf %65, %66 : vector<16x64xf32>
    %68 = vector.extract_strided_slice %67 {offsets = [0, 0], sizes = [16, 4], strides = [1, 1]} : vector<16x64xf32> to vector<16x4xf32>
    %69 = vector.extract_strided_slice %67 {offsets = [0, 4], sizes = [16, 4], strides = [1, 1]} : vector<16x64xf32> to vector<16x4xf32>
    %70 = vector.extract_strided_slice %67 {offsets = [0, 8], sizes = [16, 4], strides = [1, 1]} : vector<16x64xf32> to vector<16x4xf32>
    %71 = vector.extract_strided_slice %67 {offsets = [0, 12], sizes = [16, 4], strides = [1, 1]} : vector<16x64xf32> to vector<16x4xf32>
    %72 = vector.shape_cast %68 : vector<16x4xf32> to vector<1x16x4xf32>
    %73 = vector.shape_cast %69 : vector<16x4xf32> to vector<1x16x4xf32>
    %74 = vector.shape_cast %70 : vector<16x4xf32> to vector<1x16x4xf32>
    %75 = vector.shape_cast %71 : vector<16x4xf32> to vector<1x16x4xf32>
    %76 = tpu.concatenate %72, %73, %74, %75 in 0 : vector<1x16x4xf32>, vector<1x16x4xf32>, vector<1x16x4xf32>, vector<1x16x4xf32> -> vector<4x16x4xf32>
    %cst_17 = arith.constant 5.000000e-01 : f32
    %77 = vector.broadcast %cst_17 : f32 to vector<4x16x4xf32>
    %78 = arith.mulf %76, %77 : vector<4x16x4xf32>
    %79 = vector.extract_strided_slice %67 {offsets = [0, 16], sizes = [16, 4], strides = [1, 1]} : vector<16x64xf32> to vector<16x4xf32>
    %80 = vector.extract_strided_slice %67 {offsets = [0, 20], sizes = [16, 4], strides = [1, 1]} : vector<16x64xf32> to vector<16x4xf32>
    %81 = vector.extract_strided_slice %67 {offsets = [0, 24], sizes = [16, 4], strides = [1, 1]} : vector<16x64xf32> to vector<16x4xf32>
    %82 = vector.extract_strided_slice %67 {offsets = [0, 28], sizes = [16, 4], strides = [1, 1]} : vector<16x64xf32> to vector<16x4xf32>
    %83 = vector.shape_cast %79 : vector<16x4xf32> to vector<1x16x4xf32>
    %84 = vector.shape_cast %80 : vector<16x4xf32> to vector<1x16x4xf32>
    %85 = vector.shape_cast %81 : vector<16x4xf32> to vector<1x16x4xf32>
    %86 = vector.shape_cast %82 : vector<16x4xf32> to vector<1x16x4xf32>
    %87 = tpu.concatenate %83, %84, %85, %86 in 0 : vector<1x16x4xf32>, vector<1x16x4xf32>, vector<1x16x4xf32>, vector<1x16x4xf32> -> vector<4x16x4xf32>
    %88 = vector.extract_strided_slice %67 {offsets = [0, 32], sizes = [16, 4], strides = [1, 1]} : vector<16x64xf32> to vector<16x4xf32>
    %89 = vector.extract_strided_slice %67 {offsets = [0, 36], sizes = [16, 4], strides = [1, 1]} : vector<16x64xf32> to vector<16x4xf32>
    %90 = vector.extract_strided_slice %67 {offsets = [0, 40], sizes = [16, 4], strides = [1, 1]} : vector<16x64xf32> to vector<16x4xf32>
    %91 = vector.extract_strided_slice %67 {offsets = [0, 44], sizes = [16, 4], strides = [1, 1]} : vector<16x64xf32> to vector<16x4xf32>
    %92 = vector.shape_cast %88 : vector<16x4xf32> to vector<1x16x4xf32>
    %93 = vector.shape_cast %89 : vector<16x4xf32> to vector<1x16x4xf32>
    %94 = vector.shape_cast %90 : vector<16x4xf32> to vector<1x16x4xf32>
    %95 = vector.shape_cast %91 : vector<16x4xf32> to vector<1x16x4xf32>
    %96 = tpu.concatenate %92, %93, %94, %95 in 0 : vector<1x16x4xf32>, vector<1x16x4xf32>, vector<1x16x4xf32>, vector<1x16x4xf32> -> vector<4x16x4xf32>
    %cst_18 = arith.constant dense<0.000000e+00> : vector<4x16x16xf32>
    %97 = tpu.matmul %78, %87, %cst_18 {dimension_numbers = #tpu.dot_dimension_numbers<[2], [2], [1], [1], [0, 0, 0, 1, 1, 1], [0], [0]>} : vector<4x16x4xf32>, vector<4x16x4xf32>, vector<4x16x16xf32> -> vector<4x16x16xf32>
    %98 = vector.shape_cast %34 : vector<16x16xf32> to vector<1x16x16xf32>
    %99 = vector.broadcast %98 : vector<1x16x16xf32> to vector<4x16x16xf32>
    %100 = arith.addf %97, %99 : vector<4x16x16xf32>
    %cst_19 = arith.constant dense<0xFF800000> : vector<4x16xf32>
    %101 = vector.multi_reduction <maximumf>, %100, %cst_19 [2] : vector<4x16x16xf32> to vector<4x16xf32>
    %102 = vector.shape_cast %101 : vector<4x16xf32> to vector<4x16x1xf32>
    %103 = vector.broadcast %102 : vector<4x16x1xf32> to vector<4x16x16xf32>
    %104 = arith.subf %100, %103 : vector<4x16x16xf32>
    %105 = math.exp %104 : vector<4x16x16xf32>
    %cst_20 = arith.constant dense<0.000000e+00> : vector<4x16xf32>
    %106 = vector.multi_reduction <add>, %105, %cst_20 [2] : vector<4x16x16xf32> to vector<4x16xf32>
    %107 = vector.shape_cast %106 : vector<4x16xf32> to vector<4x16x1xf32>
    %108 = tpu.reciprocal %107 {approx = true} : vector<4x16x1xf32> -> vector<4x16x1xf32>
    %109 = vector.broadcast %108 : vector<4x16x1xf32> to vector<4x16x16xf32>
    %110 = arith.mulf %105, %109 : vector<4x16x16xf32>
    %cst_21 = arith.constant dense<0.000000e+00> : vector<4x16x4xf32>
    %111 = tpu.matmul %110, %96, %cst_21 {dimension_numbers = #tpu.dot_dimension_numbers<[2], [1], [1], [2], [0, 0, 0, 1, 1, 2], [0], [0]>} : vector<4x16x16xf32>, vector<4x16x4xf32>, vector<4x16x4xf32> -> vector<4x16x4xf32>
    %112 = vector.extract_strided_slice %111 {offsets = [0, 0, 0], sizes = [1, 16, 4], strides = [1, 1, 1]} : vector<4x16x4xf32> to vector<1x16x4xf32>
    %113 = vector.shape_cast %112 : vector<1x16x4xf32> to vector<16x4xf32>
    %114 = vector.extract_strided_slice %111 {offsets = [1, 0, 0], sizes = [1, 16, 4], strides = [1, 1, 1]} : vector<4x16x4xf32> to vector<1x16x4xf32>
    %115 = vector.shape_cast %114 : vector<1x16x4xf32> to vector<16x4xf32>
    %116 = vector.extract_strided_slice %111 {offsets = [2, 0, 0], sizes = [1, 16, 4], strides = [1, 1, 1]} : vector<4x16x4xf32> to vector<1x16x4xf32>
    %117 = vector.shape_cast %116 : vector<1x16x4xf32> to vector<16x4xf32>
    %118 = vector.extract_strided_slice %111 {offsets = [3, 0, 0], sizes = [1, 16, 4], strides = [1, 1, 1]} : vector<4x16x4xf32> to vector<1x16x4xf32>
    %119 = vector.shape_cast %118 : vector<1x16x4xf32> to vector<16x4xf32>
    %120 = tpu.concatenate %113, %115, %117, %119 in 1 : vector<16x4xf32>, vector<16x4xf32>, vector<16x4xf32>, vector<16x4xf32> -> vector<16x16xf32>
    %c17 = arith.constant 17 : index
    %c0_22 = arith.constant 0 : index
    %121 = vector.load %arg3[%c17, %c0_22] : memref<228x64xf32, #tpu.memory_space<vmem>>, vector<16x16xf32>
    %cst_23 = arith.constant dense<0.000000e+00> : vector<16x16xf32>
    %122 = tpu.matmul %120, %121, %cst_23 {dimension_numbers = #tpu.dot_dimension_numbers<[1], [0], [0], [1], [0, 0, 1, 1], [], []>} : vector<16x16xf32>, vector<16x16xf32>, vector<16x16xf32> -> vector<16x16xf32>
    %123 = arith.addf %24, %122 : vector<16x16xf32>
    %124 = vector.broadcast %39 : vector<1x16xf32> to vector<16x16xf32>
    %125 = arith.addf %123, %124 : vector<16x16xf32>
    %cst_24 = arith.constant dense<0.000000e+00> : vector<16xf32>
    %126 = vector.multi_reduction <add>, %125, %cst_24 [1] : vector<16x16xf32> to vector<16xf32>
    %127 = vector.shape_cast %126 : vector<16xf32> to vector<16x1xf32>
    %cst_25 = arith.constant 1.600000e+01 : f32
    %128 = vector.broadcast %cst_25 : f32 to vector<16x1xf32>
    %129 = arith.divf %127, %128 : vector<16x1xf32>
    %130 = arith.mulf %125, %125 : vector<16x16xf32>
    %cst_26 = arith.constant dense<0.000000e+00> : vector<16xf32>
    %131 = vector.multi_reduction <add>, %130, %cst_26 [1] : vector<16x16xf32> to vector<16xf32>
    %132 = vector.shape_cast %131 : vector<16xf32> to vector<16x1xf32>
    %cst_27 = arith.constant 1.600000e+01 : f32
    %133 = vector.broadcast %cst_27 : f32 to vector<16x1xf32>
    %134 = arith.divf %132, %133 : vector<16x1xf32>
    %135 = arith.mulf %129, %129 : vector<16x1xf32>
    %136 = arith.subf %134, %135 : vector<16x1xf32>
    %137 = vector.broadcast %129 : vector<16x1xf32> to vector<16x16xf32>
    %138 = arith.subf %125, %137 : vector<16x16xf32>
    %cst_28 = arith.constant 9.99999974E-6 : f32
    %139 = vector.broadcast %cst_28 : f32 to vector<16x1xf32>
    %140 = arith.addf %136, %139 : vector<16x1xf32>
    %141 = math.rsqrt %140 : vector<16x1xf32>
    %142 = vector.broadcast %141 : vector<16x1xf32> to vector<16x16xf32>
    %143 = arith.mulf %138, %142 : vector<16x16xf32>
    %144 = vector.broadcast %37 : vector<1x16xf32> to vector<16x16xf32>
    %145 = arith.mulf %143, %144 : vector<16x16xf32>
    %146 = vector.broadcast %38 : vector<1x16xf32> to vector<16x16xf32>
    %147 = arith.addf %145, %146 : vector<16x16xf32>
    %c33 = arith.constant 33 : index
    %c0_29 = arith.constant 0 : index
    %148 = vector.load %arg3[%c33, %c0_29] : memref<228x64xf32, #tpu.memory_space<vmem>>, vector<16x64xf32>
    %c49 = arith.constant 49 : index
    %c0_30 = arith.constant 0 : index
    %149 = vector.load %arg3[%c49, %c0_30] : memref<228x64xf32, #tpu.memory_space<vmem>>, vector<1x64xf32>
    %cst_31 = arith.constant dense<0.000000e+00> : vector<16x64xf32>
    %150 = tpu.matmul %147, %148, %cst_31 {dimension_numbers = #tpu.dot_dimension_numbers<[1], [0], [0], [1], [0, 0, 1, 1], [], []>} : vector<16x16xf32>, vector<16x64xf32>, vector<16x64xf32> -> vector<16x64xf32>
    %151 = vector.broadcast %149 : vector<1x64xf32> to vector<16x64xf32>
    %152 = arith.addf %150, %151 : vector<16x64xf32>
    %cst_32 = arith.constant 0.000000e+00 : f32
    %153 = vector.broadcast %cst_32 : f32 to vector<16x64xf32>
    %154 = arith.maximumf %152, %153 : vector<16x64xf32>
    %c50 = arith.constant 50 : index
    %c0_33 = arith.constant 0 : index
    %155 = vector.load %arg3[%c50, %c0_33] : memref<228x64xf32, #tpu.memory_space<vmem>>, vector<64x16xf32>
    %cst_34 = arith.constant dense<0.000000e+00> : vector<16x16xf32>
    %156 = tpu.matmul %154, %155, %cst_34 {dimension_numbers = #tpu.dot_dimension_numbers<[1], [0], [0], [1], [0, 0, 1, 1], [], []>} : vector<16x64xf32>, vector<64x16xf32>, vector<16x16xf32> -> vector<16x16xf32>
    %157 = vector.broadcast %40 : vector<1x16xf32> to vector<16x16xf32>
    %158 = arith.addf %156, %157 : vector<16x16xf32>
    %159 = arith.addf %125, %158 : vector<16x16xf32>
    %160 = vector.extract_strided_slice %0 {offsets = [9, 0], sizes = [1, 16], strides = [1, 1]} : vector<20x16xf32> to vector<1x16xf32>
    %161 = vector.extract_strided_slice %0 {offsets = [10, 0], sizes = [1, 16], strides = [1, 1]} : vector<20x16xf32> to vector<1x16xf32>
    %162 = vector.extract_strided_slice %0 {offsets = [11, 0], sizes = [1, 16], strides = [1, 1]} : vector<20x16xf32> to vector<1x16xf32>
    %163 = vector.extract_strided_slice %0 {offsets = [12, 0], sizes = [1, 16], strides = [1, 1]} : vector<20x16xf32> to vector<1x16xf32>
    %164 = vector.extract_strided_slice %0 {offsets = [13, 0], sizes = [1, 16], strides = [1, 1]} : vector<20x16xf32> to vector<1x16xf32>
    %165 = vector.extract_strided_slice %0 {offsets = [14, 0], sizes = [1, 16], strides = [1, 1]} : vector<20x16xf32> to vector<1x16xf32>
    %cst_35 = arith.constant dense<0.000000e+00> : vector<16xf32>
    %166 = vector.multi_reduction <add>, %159, %cst_35 [1] : vector<16x16xf32> to vector<16xf32>
    %167 = vector.shape_cast %166 : vector<16xf32> to vector<16x1xf32>
    %cst_36 = arith.constant 1.600000e+01 : f32
    %168 = vector.broadcast %cst_36 : f32 to vector<16x1xf32>
    %169 = arith.divf %167, %168 : vector<16x1xf32>
    %170 = arith.mulf %159, %159 : vector<16x16xf32>
    %cst_37 = arith.constant dense<0.000000e+00> : vector<16xf32>
    %171 = vector.multi_reduction <add>, %170, %cst_37 [1] : vector<16x16xf32> to vector<16xf32>
    %172 = vector.shape_cast %171 : vector<16xf32> to vector<16x1xf32>
    %cst_38 = arith.constant 1.600000e+01 : f32
    %173 = vector.broadcast %cst_38 : f32 to vector<16x1xf32>
    %174 = arith.divf %172, %173 : vector<16x1xf32>
    %175 = arith.mulf %169, %169 : vector<16x1xf32>
    %176 = arith.subf %174, %175 : vector<16x1xf32>
    %177 = vector.broadcast %169 : vector<16x1xf32> to vector<16x16xf32>
    %178 = arith.subf %159, %177 : vector<16x16xf32>
    %cst_39 = arith.constant 9.99999974E-6 : f32
    %179 = vector.broadcast %cst_39 : f32 to vector<16x1xf32>
    %180 = arith.addf %176, %179 : vector<16x1xf32>
    %181 = math.rsqrt %180 : vector<16x1xf32>
    %182 = vector.broadcast %181 : vector<16x1xf32> to vector<16x16xf32>
    %183 = arith.mulf %178, %182 : vector<16x16xf32>
    %184 = vector.broadcast %160 : vector<1x16xf32> to vector<16x16xf32>
    %185 = arith.mulf %183, %184 : vector<16x16xf32>
    %186 = vector.broadcast %161 : vector<1x16xf32> to vector<16x16xf32>
    %187 = arith.addf %185, %186 : vector<16x16xf32>
    %c114 = arith.constant 114 : index
    %c0_40 = arith.constant 0 : index
    %188 = vector.load %arg3[%c114, %c0_40] : memref<228x64xf32, #tpu.memory_space<vmem>>, vector<16x64xf32>
    %c130 = arith.constant 130 : index
    %c0_41 = arith.constant 0 : index
    %189 = vector.load %arg3[%c130, %c0_41] : memref<228x64xf32, #tpu.memory_space<vmem>>, vector<1x64xf32>
    %cst_42 = arith.constant dense<0.000000e+00> : vector<16x64xf32>
    %190 = tpu.matmul %187, %188, %cst_42 {dimension_numbers = #tpu.dot_dimension_numbers<[1], [0], [0], [1], [0, 0, 1, 1], [], []>} : vector<16x16xf32>, vector<16x64xf32>, vector<16x64xf32> -> vector<16x64xf32>
    %191 = vector.broadcast %189 : vector<1x64xf32> to vector<16x64xf32>
    %192 = arith.addf %190, %191 : vector<16x64xf32>
    %193 = vector.extract_strided_slice %192 {offsets = [0, 0], sizes = [16, 4], strides = [1, 1]} : vector<16x64xf32> to vector<16x4xf32>
    %194 = vector.extract_strided_slice %192 {offsets = [0, 4], sizes = [16, 4], strides = [1, 1]} : vector<16x64xf32> to vector<16x4xf32>
    %195 = vector.extract_strided_slice %192 {offsets = [0, 8], sizes = [16, 4], strides = [1, 1]} : vector<16x64xf32> to vector<16x4xf32>
    %196 = vector.extract_strided_slice %192 {offsets = [0, 12], sizes = [16, 4], strides = [1, 1]} : vector<16x64xf32> to vector<16x4xf32>
    %197 = vector.shape_cast %193 : vector<16x4xf32> to vector<1x16x4xf32>
    %198 = vector.shape_cast %194 : vector<16x4xf32> to vector<1x16x4xf32>
    %199 = vector.shape_cast %195 : vector<16x4xf32> to vector<1x16x4xf32>
    %200 = vector.shape_cast %196 : vector<16x4xf32> to vector<1x16x4xf32>
    %201 = tpu.concatenate %197, %198, %199, %200 in 0 : vector<1x16x4xf32>, vector<1x16x4xf32>, vector<1x16x4xf32>, vector<1x16x4xf32> -> vector<4x16x4xf32>
    %cst_43 = arith.constant 5.000000e-01 : f32
    %202 = vector.broadcast %cst_43 : f32 to vector<4x16x4xf32>
    %203 = arith.mulf %201, %202 : vector<4x16x4xf32>
    %204 = vector.extract_strided_slice %192 {offsets = [0, 16], sizes = [16, 4], strides = [1, 1]} : vector<16x64xf32> to vector<16x4xf32>
    %205 = vector.extract_strided_slice %192 {offsets = [0, 20], sizes = [16, 4], strides = [1, 1]} : vector<16x64xf32> to vector<16x4xf32>
    %206 = vector.extract_strided_slice %192 {offsets = [0, 24], sizes = [16, 4], strides = [1, 1]} : vector<16x64xf32> to vector<16x4xf32>
    %207 = vector.extract_strided_slice %192 {offsets = [0, 28], sizes = [16, 4], strides = [1, 1]} : vector<16x64xf32> to vector<16x4xf32>
    %208 = vector.shape_cast %204 : vector<16x4xf32> to vector<1x16x4xf32>
    %209 = vector.shape_cast %205 : vector<16x4xf32> to vector<1x16x4xf32>
    %210 = vector.shape_cast %206 : vector<16x4xf32> to vector<1x16x4xf32>
    %211 = vector.shape_cast %207 : vector<16x4xf32> to vector<1x16x4xf32>
    %212 = tpu.concatenate %208, %209, %210, %211 in 0 : vector<1x16x4xf32>, vector<1x16x4xf32>, vector<1x16x4xf32>, vector<1x16x4xf32> -> vector<4x16x4xf32>
    %213 = vector.extract_strided_slice %192 {offsets = [0, 32], sizes = [16, 4], strides = [1, 1]} : vector<16x64xf32> to vector<16x4xf32>
    %214 = vector.extract_strided_slice %192 {offsets = [0, 36], sizes = [16, 4], strides = [1, 1]} : vector<16x64xf32> to vector<16x4xf32>
    %215 = vector.extract_strided_slice %192 {offsets = [0, 40], sizes = [16, 4], strides = [1, 1]} : vector<16x64xf32> to vector<16x4xf32>
    %216 = vector.extract_strided_slice %192 {offsets = [0, 44], sizes = [16, 4], strides = [1, 1]} : vector<16x64xf32> to vector<16x4xf32>
    %217 = vector.shape_cast %213 : vector<16x4xf32> to vector<1x16x4xf32>
    %218 = vector.shape_cast %214 : vector<16x4xf32> to vector<1x16x4xf32>
    %219 = vector.shape_cast %215 : vector<16x4xf32> to vector<1x16x4xf32>
    %220 = vector.shape_cast %216 : vector<16x4xf32> to vector<1x16x4xf32>
    %221 = tpu.concatenate %217, %218, %219, %220 in 0 : vector<1x16x4xf32>, vector<1x16x4xf32>, vector<1x16x4xf32>, vector<1x16x4xf32> -> vector<4x16x4xf32>
    %cst_44 = arith.constant dense<0.000000e+00> : vector<4x16x16xf32>
    %222 = tpu.matmul %203, %212, %cst_44 {dimension_numbers = #tpu.dot_dimension_numbers<[2], [2], [1], [1], [0, 0, 0, 1, 1, 1], [0], [0]>} : vector<4x16x4xf32>, vector<4x16x4xf32>, vector<4x16x16xf32> -> vector<4x16x16xf32>
    %223 = vector.shape_cast %34 : vector<16x16xf32> to vector<1x16x16xf32>
    %224 = vector.broadcast %223 : vector<1x16x16xf32> to vector<4x16x16xf32>
    %225 = arith.addf %222, %224 : vector<4x16x16xf32>
    %cst_45 = arith.constant dense<0xFF800000> : vector<4x16xf32>
    %226 = vector.multi_reduction <maximumf>, %225, %cst_45 [2] : vector<4x16x16xf32> to vector<4x16xf32>
    %227 = vector.shape_cast %226 : vector<4x16xf32> to vector<4x16x1xf32>
    %228 = vector.broadcast %227 : vector<4x16x1xf32> to vector<4x16x16xf32>
    %229 = arith.subf %225, %228 : vector<4x16x16xf32>
    %230 = math.exp %229 : vector<4x16x16xf32>
    %cst_46 = arith.constant dense<0.000000e+00> : vector<4x16xf32>
    %231 = vector.multi_reduction <add>, %230, %cst_46 [2] : vector<4x16x16xf32> to vector<4x16xf32>
    %232 = vector.shape_cast %231 : vector<4x16xf32> to vector<4x16x1xf32>
    %233 = tpu.reciprocal %232 {approx = true} : vector<4x16x1xf32> -> vector<4x16x1xf32>
    %234 = vector.broadcast %233 : vector<4x16x1xf32> to vector<4x16x16xf32>
    %235 = arith.mulf %230, %234 : vector<4x16x16xf32>
    %cst_47 = arith.constant dense<0.000000e+00> : vector<4x16x4xf32>
    %236 = tpu.matmul %235, %221, %cst_47 {dimension_numbers = #tpu.dot_dimension_numbers<[2], [1], [1], [2], [0, 0, 0, 1, 1, 2], [0], [0]>} : vector<4x16x16xf32>, vector<4x16x4xf32>, vector<4x16x4xf32> -> vector<4x16x4xf32>
    %237 = vector.extract_strided_slice %236 {offsets = [0, 0, 0], sizes = [1, 16, 4], strides = [1, 1, 1]} : vector<4x16x4xf32> to vector<1x16x4xf32>
    %238 = vector.shape_cast %237 : vector<1x16x4xf32> to vector<16x4xf32>
    %239 = vector.extract_strided_slice %236 {offsets = [1, 0, 0], sizes = [1, 16, 4], strides = [1, 1, 1]} : vector<4x16x4xf32> to vector<1x16x4xf32>
    %240 = vector.shape_cast %239 : vector<1x16x4xf32> to vector<16x4xf32>
    %241 = vector.extract_strided_slice %236 {offsets = [2, 0, 0], sizes = [1, 16, 4], strides = [1, 1, 1]} : vector<4x16x4xf32> to vector<1x16x4xf32>
    %242 = vector.shape_cast %241 : vector<1x16x4xf32> to vector<16x4xf32>
    %243 = vector.extract_strided_slice %236 {offsets = [3, 0, 0], sizes = [1, 16, 4], strides = [1, 1, 1]} : vector<4x16x4xf32> to vector<1x16x4xf32>
    %244 = vector.shape_cast %243 : vector<1x16x4xf32> to vector<16x4xf32>
    %245 = tpu.concatenate %238, %240, %242, %244 in 1 : vector<16x4xf32>, vector<16x4xf32>, vector<16x4xf32>, vector<16x4xf32> -> vector<16x16xf32>
    %c131 = arith.constant 131 : index
    %c0_48 = arith.constant 0 : index
    %246 = vector.load %arg3[%c131, %c0_48] : memref<228x64xf32, #tpu.memory_space<vmem>>, vector<16x16xf32>
    %cst_49 = arith.constant dense<0.000000e+00> : vector<16x16xf32>
    %247 = tpu.matmul %245, %246, %cst_49 {dimension_numbers = #tpu.dot_dimension_numbers<[1], [0], [0], [1], [0, 0, 1, 1], [], []>} : vector<16x16xf32>, vector<16x16xf32>, vector<16x16xf32> -> vector<16x16xf32>
    %248 = arith.addf %159, %247 : vector<16x16xf32>
    %249 = vector.broadcast %164 : vector<1x16xf32> to vector<16x16xf32>
    %250 = arith.addf %248, %249 : vector<16x16xf32>
    %cst_50 = arith.constant dense<0.000000e+00> : vector<16xf32>
    %251 = vector.multi_reduction <add>, %250, %cst_50 [1] : vector<16x16xf32> to vector<16xf32>
    %252 = vector.shape_cast %251 : vector<16xf32> to vector<16x1xf32>
    %cst_51 = arith.constant 1.600000e+01 : f32
    %253 = vector.broadcast %cst_51 : f32 to vector<16x1xf32>
    %254 = arith.divf %252, %253 : vector<16x1xf32>
    %255 = arith.mulf %250, %250 : vector<16x16xf32>
    %cst_52 = arith.constant dense<0.000000e+00> : vector<16xf32>
    %256 = vector.multi_reduction <add>, %255, %cst_52 [1] : vector<16x16xf32> to vector<16xf32>
    %257 = vector.shape_cast %256 : vector<16xf32> to vector<16x1xf32>
    %cst_53 = arith.constant 1.600000e+01 : f32
    %258 = vector.broadcast %cst_53 : f32 to vector<16x1xf32>
    %259 = arith.divf %257, %258 : vector<16x1xf32>
    %260 = arith.mulf %254, %254 : vector<16x1xf32>
    %261 = arith.subf %259, %260 : vector<16x1xf32>
    %262 = vector.broadcast %254 : vector<16x1xf32> to vector<16x16xf32>
    %263 = arith.subf %250, %262 : vector<16x16xf32>
    %cst_54 = arith.constant 9.99999974E-6 : f32
    %264 = vector.broadcast %cst_54 : f32 to vector<16x1xf32>
    %265 = arith.addf %261, %264 : vector<16x1xf32>
    %266 = math.rsqrt %265 : vector<16x1xf32>
    %267 = vector.broadcast %266 : vector<16x1xf32> to vector<16x16xf32>
    %268 = arith.mulf %263, %267 : vector<16x16xf32>
    %269 = vector.broadcast %162 : vector<1x16xf32> to vector<16x16xf32>
    %270 = arith.mulf %268, %269 : vector<16x16xf32>
    %271 = vector.broadcast %163 : vector<1x16xf32> to vector<16x16xf32>
    %272 = arith.addf %270, %271 : vector<16x16xf32>
    %c147 = arith.constant 147 : index
    %c0_55 = arith.constant 0 : index
    %273 = vector.load %arg3[%c147, %c0_55] : memref<228x64xf32, #tpu.memory_space<vmem>>, vector<16x64xf32>
    %c163 = arith.constant 163 : index
    %c0_56 = arith.constant 0 : index
    %274 = vector.load %arg3[%c163, %c0_56] : memref<228x64xf32, #tpu.memory_space<vmem>>, vector<1x64xf32>
    %cst_57 = arith.constant dense<0.000000e+00> : vector<16x64xf32>
    %275 = tpu.matmul %272, %273, %cst_57 {dimension_numbers = #tpu.dot_dimension_numbers<[1], [0], [0], [1], [0, 0, 1, 1], [], []>} : vector<16x16xf32>, vector<16x64xf32>, vector<16x64xf32> -> vector<16x64xf32>
    %276 = vector.broadcast %274 : vector<1x64xf32> to vector<16x64xf32>
    %277 = arith.addf %275, %276 : vector<16x64xf32>
    %cst_58 = arith.constant 0.000000e+00 : f32
    %278 = vector.broadcast %cst_58 : f32 to vector<16x64xf32>
    %279 = arith.maximumf %277, %278 : vector<16x64xf32>
    %c164 = arith.constant 164 : index
    %c0_59 = arith.constant 0 : index
    %280 = vector.load %arg3[%c164, %c0_59] : memref<228x64xf32, #tpu.memory_space<vmem>>, vector<64x16xf32>
    %cst_60 = arith.constant dense<0.000000e+00> : vector<16x16xf32>
    %281 = tpu.matmul %279, %280, %cst_60 {dimension_numbers = #tpu.dot_dimension_numbers<[1], [0], [0], [1], [0, 0, 1, 1], [], []>} : vector<16x64xf32>, vector<64x16xf32>, vector<16x16xf32> -> vector<16x16xf32>
    %282 = vector.broadcast %165 : vector<1x16xf32> to vector<16x16xf32>
    %283 = arith.addf %281, %282 : vector<16x16xf32>
    %284 = arith.addf %250, %283 : vector<16x16xf32>
    %285 = vector.extract_strided_slice %0 {offsets = [15, 0], sizes = [1, 16], strides = [1, 1]} : vector<20x16xf32> to vector<1x16xf32>
    %286 = vector.extract_strided_slice %0 {offsets = [16, 0], sizes = [1, 16], strides = [1, 1]} : vector<20x16xf32> to vector<1x16xf32>
    %cst_61 = arith.constant dense<0.000000e+00> : vector<16xf32>
    %287 = vector.multi_reduction <add>, %284, %cst_61 [1] : vector<16x16xf32> to vector<16xf32>
    %288 = vector.shape_cast %287 : vector<16xf32> to vector<16x1xf32>
    %cst_62 = arith.constant 1.600000e+01 : f32
    %289 = vector.broadcast %cst_62 : f32 to vector<16x1xf32>
    %290 = arith.divf %288, %289 : vector<16x1xf32>
    %291 = arith.mulf %284, %284 : vector<16x16xf32>
    %cst_63 = arith.constant dense<0.000000e+00> : vector<16xf32>
    %292 = vector.multi_reduction <add>, %291, %cst_63 [1] : vector<16x16xf32> to vector<16xf32>
    %293 = vector.shape_cast %292 : vector<16xf32> to vector<16x1xf32>
    %cst_64 = arith.constant 1.600000e+01 : f32
    %294 = vector.broadcast %cst_64 : f32 to vector<16x1xf32>
    %295 = arith.divf %293, %294 : vector<16x1xf32>
    %296 = arith.mulf %290, %290 : vector<16x1xf32>
    %297 = arith.subf %295, %296 : vector<16x1xf32>
    %298 = vector.broadcast %290 : vector<16x1xf32> to vector<16x16xf32>
    %299 = arith.subf %284, %298 : vector<16x16xf32>
    %cst_65 = arith.constant 9.99999974E-6 : f32
    %300 = vector.broadcast %cst_65 : f32 to vector<16x1xf32>
    %301 = arith.addf %297, %300 : vector<16x1xf32>
    %302 = math.rsqrt %301 : vector<16x1xf32>
    %303 = vector.broadcast %302 : vector<16x1xf32> to vector<16x16xf32>
    %304 = arith.mulf %299, %303 : vector<16x16xf32>
    %305 = vector.broadcast %285 : vector<1x16xf32> to vector<16x16xf32>
    %306 = arith.mulf %304, %305 : vector<16x16xf32>
    %307 = vector.broadcast %286 : vector<1x16xf32> to vector<16x16xf32>
    %308 = arith.addf %306, %307 : vector<16x16xf32>
    %309 = vector.extract_strided_slice %0 {offsets = [17, 0], sizes = [2, 16], strides = [1, 1]} : vector<20x16xf32> to vector<2x16xf32>
    %cst_66 = arith.constant dense<0.000000e+00> : vector<16x2xf32>
    %310 = tpu.matmul %308, %309, %cst_66 {dimension_numbers = #tpu.dot_dimension_numbers<[1], [1], [0], [0], [0, 0, 1, 0], [], []>} : vector<16x16xf32>, vector<2x16xf32>, vector<16x2xf32> -> vector<16x2xf32>
    %311 = vector.extract_strided_slice %0 {offsets = [19, 0], sizes = [1, 2], strides = [1, 1]} : vector<20x16xf32> to vector<1x2xf32>
    %312 = vector.broadcast %311 : vector<1x2xf32> to vector<16x2xf32>
    %313 = arith.addf %310, %312 : vector<16x2xf32>
    %c0_67 = arith.constant 0 : index
    %c0_68 = arith.constant 0 : index
    %314 = vector.load %arg5[%c0_67, %c0_68] : memref<16x2xf32, #tpu.memory_space<vmem>>, vector<16x2xf32>
    tpu.vector_store %arg5[%c0_67, %c0_68], %313 {strides = array<i32>} : memref<16x2xf32, #tpu.memory_space<vmem>>, vector<16x2xf32>,
    return
  }
  func.func @transform_0(%arg0: i32) -> (i32, i32) {
    %c0_i32 = arith.constant 0 : i32
    %c0_i32_0 = arith.constant 0 : i32
    %c0_i32_1 = arith.constant 0 : i32
    return %c0_i32, %c0_i32_0 : i32, i32
  }
  func.func @transform_1(%arg0: i32) -> (i32, i32) {
    %c0_i32 = arith.constant 0 : i32
    %c0_i32_0 = arith.constant 0 : i32
    %c0_i32_1 = arith.constant 0 : i32
    return %c0_i32, %c0_i32_0 : i32, i32
  }
  func.func @transform_2(%arg0: i32) -> (i32, i32) {
    %c0_i32 = arith.constant 0 : i32
    %c0_i32_0 = arith.constant 0 : i32
    %c0_i32_1 = arith.constant 0 : i32
    return %c0_i32, %c0_i32_0 : i32, i32
  }
  func.func @transform_3(%arg0: i32) -> (i32, i32) {
    %c0_i32 = arith.constant 0 : i32
    %c0_i32_0 = arith.constant 0 : i32
    %c0_i32_1 = arith.constant 0 : i32
    return %c0_i32, %c0_i32_0 : i32, i32
  }
  func.func @transform_4(%arg0: i32) -> (i32, i32) {
    %c0_i32 = arith.constant 0 : i32
    %c0_i32_0 = arith.constant 0 : i32
    %c0_i32_1 = arith.constant 0 : i32
    return %c0_i32, %c0_i32_0 : i32, i32
  }
}

</mosaic_0001>

<llo_original>
// kernel: decoder_forward.1
$region0: #{decoder_forward.1}
  #allocation0 [shape = 'u32[]', space=smem, size = 0x4, offset = 0x4, fixed_abs, tag = 'smem constant byte address 0x4 - core index']
  #allocation1 [shape = 'u32[144,128]{1,0:T(1,128)}', space=vmem, size = 0x12000, scoped, tag = 'internal scratch']
  %s0 = inlined_call_operand.vmem [shape: f32[16,1], index: 0, kind: input, shape index: {}]
  %s1 = inlined_call_operand.vmem [shape: f32[16,16], index: 1, kind: input, shape index: {}]
  %s2 = inlined_call_operand.vmem [shape: f32[228,64], index: 2, kind: input, shape index: {}]
  %s3 = inlined_call_operand.vmem [shape: f32[20,16], index: 3, kind: input, shape index: {}]
  %s4 = inlined_call_operand.vmem [shape: f32[16,2], index: 4, kind: output, shape index: {}]
  %s5 = sld [smem:[#allocation0]]
  $region26: #{decoder_forward.1} parent=0
    _
  %s7 = ssub.s32 1, %s5
  %s8 = scalar_select 0, %s7, %s5
  // Predicated region
  $region2: #{decoder_forward.1} parent=0 // pred_check
    _
  $region3: #{decoder_forward.1} parent=0 // pred_check_branch
    %10 = sbr.rel (0) target = $region5
  $region4: #{decoder_forward.1} parent=0 // pred_region
    _
  $region5: #{decoder_forward.1} parent=0 // pred_fallthru
    _
  // Predicated region
  $region6: #{decoder_forward.1} parent=0 // pred_check
    _
  $region7: #{decoder_forward.1} parent=0 // pred_check_branch
    %12 = sbr.rel (0) target = $region9
  $region8: #{decoder_forward.1} parent=0 // pred_region
    _
  $region9: #{decoder_forward.1} parent=0 // pred_fallthru
    _
  // Predicated region
  $region10: #{decoder_forward.1} parent=0 // pred_check
    _
  $region11: #{decoder_forward.1} parent=0 // pred_check_branch
    %14 = sbr.rel (0) target = $region13
  $region12: #{decoder_forward.1} parent=0 // pred_region
    _
  $region13: #{decoder_forward.1} parent=0 // pred_fallthru
    _
  // Predicated region
  $region14: #{decoder_forward.1} parent=0 // pred_check
    _
  $region15: #{decoder_forward.1} parent=0 // pred_check_branch
    %16 = sbr.rel (0) target = $region17
  $region16: #{decoder_forward.1} parent=0 // pred_region
    _
  $region17: #{decoder_forward.1} parent=0 // pred_fallthru
    _
  %v17 = vld [vmem:[%s3] sm:$0xff]
  %v18 = vld [vmem:[%s3 + $0x8] sm:$0xff]
  %v19 = vld [vmem:[%s3 + $0x10] sm:$0xf]
  %v20 = vld [vmem:[%s0] sm:$0xff]
  %v21 = vld [vmem:[%s0 + $0x8] sm:$0xff]
  %v22 = vlaneseq
  %v23 = vshrl.u32 %v22, 7
  %v24 = vadd.s32 %v23, 8
  %v25 = vrot.slane %v20, 7
  %v26 = vrot.slane %v21, 7
  %vm27 = vcmp.lt.s32.totalorder %v23, 1
  %v28 = vsel %vm27, %v25, %v26
  %v29 = vsel %vm27, %v26, %v25
  %v30 = vand.u32 %v23, 7
  %v31 = vand.u32 %v24, 7
  %vm32 = vcmp.eq.s32.totalorder %v30, 0
  %vm33 = vcmp.eq.s32.totalorder %v31, 0
  %v34 = vsub.f32 %v20, %v29
  %v35 = vsub.f32 %v21, %v28
  %v36 = vsel %vm32, 0.0, %v34
  %v37 = vsel %vm33, 0.0, %v35
  %39 = vset.pattern.permute.xlu0 0
  %40 = vperm.xlu0 %39, %v20
  %v41 = vpop.permute.xlu0 %40
  %44 = vset.pattern.permute.xlu0 0
  %45 = vperm.xlu0 %44, %v21
  %v46 = vpop.permute.xlu0 %45
  %v48 = vlaneseq
  %v49 = vshrl.u32 %v48, 7
  %v50 = vsub.s32 0, %v49
  %v51 = vrot.slane %v17, %v50
  %v52 = vmul.f32 %v41, %v51
  %v53 = vmul.f32 %v46, %v51
  %55 = vset.pattern.permute.xlu0 0
  %56 = vperm.xlu0 %55, %v36
  %v57 = vpop.permute.xlu0 %56
  %60 = vset.pattern.permute.xlu0 0
  %61 = vperm.xlu0 %60, %v37
  %v62 = vpop.permute.xlu0 %61
  %v64 = vlaneseq
  %v65 = vshrl.u32 %v64, 7
  %v66 = vsub.s32 1, %v65
  %v67 = vrot.slane %v17, %v66
  %v68 = vmul.f32 %v57, %v67
  %v69 = vmul.f32 %v62, %v67
  %v70 = vadd.f32 %v52, %v68
  %v71 = vadd.f32 %v53, %v69
  %v72 = vlaneseq
  %v73 = vshrl.u32 %v72, 7
  %v74 = vsub.s32 2, %v73
  %v75 = vrot.slane %v17, %v74
  %v76 = vadd.f32 %v70, %v75
  %v77 = vadd.f32 %v71, %v75
  %v78 = vld [vmem:[%s1] sm:$0xff]
  %v79 = vld [vmem:[%s1 + $0x8] sm:$0xff]
  %v80 = vadd.f32 %v76, %v78
  %v81 = vadd.f32 %v77, %v79
  %v82 = vlaneseq
  %v83 = vand.u32 %v82, 127
  %v84 = vshra.s32 %v23, 3
  %v85 = vshra.s32 %v24, 3
  %v86 = vshra.s32 %v83, 3
  %vm87 = vcmp.eq.s32.totalorder %v84, %v86
  %vm88 = vcmp.eq.s32.totalorder %v85, %v86
  %v89 = vsel %vm87, 0.0, -1e+30
  %v90 = vsel %vm88, 0.0, -1e+30
  %vm91 = vcmask 130048
  %v92 = vsel %vm91, %v80, 0.0
  %93 = vadd.xlane.f32.xlu0 %v92
  %v94 = vpop.xlane.xlu0 %93
  %v95 = vsel %vm91, %v81, 0.0
  %96 = vadd.xlane.f32.xlu0 %v95
  %v97 = vpop.xlane.xlu0 %96
  %v98 = vrcp.pop 16.0
  %v99 = vmul.f32 %v94, %v98
  %v100 = vmul.f32 %v97, %v98
  %v101 = vmul.f32 %v80, %v80
  %v102 = vmul.f32 %v81, %v81
  %v103 = vsel %vm91, %v101, 0.0
  %104 = vadd.xlane.f32.xlu0 %v103
  %v105 = vpop.xlane.xlu0 %104
  %v106 = vsel %vm91, %v102, 0.0
  %107 = vadd.xlane.f32.xlu0 %v106
  %v108 = vpop.xlane.xlu0 %107
  %v109 = vmul.f32 %v105, %v98
  %v110 = vmul.f32 %v108, %v98
  %v111 = vmul.f32 %v99, %v99
  %v112 = vmul.f32 %v100, %v100
  %v113 = vsub.f32 %v109, %v111
  %v114 = vsub.f32 %v110, %v112
  %v115 = vsub.f32 %v80, %v99
  %v116 = vsub.f32 %v81, %v100
  %v117 = vadd.f32 %v113, 1e-05
  %v118 = vadd.f32 %v114, 1e-05
  %v119 = vrsqrt.pop %v117
  %v120 = vrsqrt.pop %v118
  %v121 = vmul.f32 %v115, %v119
  %v122 = vmul.f32 %v116, %v120
  %v123 = vlaneseq
  %v124 = vshrl.u32 %v123, 7
  %v125 = vsub.s32 3, %v124
  %v126 = vrot.slane %v17, %v125
  %v127 = vmul.f32 %v121, %v126
  %v128 = vmul.f32 %v122, %v126
  %v129 = vlaneseq
  %v130 = vshrl.u32 %v129, 7
  %v131 = vsub.s32 4, %v130
  %v132 = vrot.slane %v17, %v131
  %v133 = vadd.f32 %v127, %v132
  %v134 = vadd.f32 %v128, %v132
  %v135 = vld [vmem:[%s2] sm:$0xff]
  %v136 = vld [vmem:[%s2 + $0x8] sm:$0xff]
  %v137 = vld [vmem:[%s2 + $0x10] sm:$0x1]
  %v138 = vlaneseq
  %v139 = vshrl.u32 %v138, 7
  %v140 = vsub.s32 0, %v139
  %v141 = vrot.slane %v137, %v140
  %v143 = vsel %vm91, %v133, 0
  %v146 = vsel %vm91, %v134, 0
  %148 = vmatprep.subr.mxu0 0.0
  %149 = vmatpush1.msra.mxu0 0.0
  %150 = vmatprep.subr.mxu0 0.0
  %151 = vmatpush1.msra.mxu0 0.0
  %152 = vmatprep.subr.mxu0 0.0
  %153 = vmatpush1.msra.mxu0 0.0
  %154 = vmatprep.subr.mxu0 0.0
  %155 = vmatpush1.msra.mxu0 0.0
  %156 = vmatprep.subr.mxu0 0.0
  %157 = vmatpush1.msra.mxu0 0.0
  %158 = vmatprep.subr.mxu0 0.0
  %159 = vmatpush1.msra.mxu0 0.0
  %160 = vmatprep.subr.mxu0 0.0
  %161 = vmatpush1.msra.mxu0 0.0
  %162 = vmatprep.subr.mxu0 0.0
  %163 = vmatpush1.msra.mxu0 0.0
  %164 = vmatprep.subr.mxu0 0.0
  %165 = vmatpush1.msra.mxu0 0.0
  %166 = vmatprep.subr.mxu0 0.0
  %167 = vmatpush1.msra.mxu0 0.0
  %168 = vmatprep.subr.mxu0 0.0
  %169 = vmatpush1.msra.mxu0 0.0
  %170 = vmatprep.subr.mxu0 0.0
  %171 = vmatpush1.msra.mxu0 0.0
  %172 = vmatprep.subr.mxu0 0.0
  %173 = vmatpush1.msra.mxu0 0.0
  %174 = vmatprep.subr.mxu0 0.0
  %175 = vmatpush1.msra.mxu0 0.0
  %176 = vmatprep.subr.mxu0 0.0
  %177 = vmatpush1.msra.mxu0 %v136
  %178 = vmatprep.subr.mxu0 0.0
  %179 = vmatpush1.msra.mxu0 %v135
  %180 = vmatprep.subr.mxu0 0.0
  %181 = vmatpush2.msra.mxu0 0.0
  %182 = vmatprep.subr.mxu0 0.0
  %183 = vmatpush2.msra.mxu0 0.0
  %184 = vmatprep.subr.mxu0 0.0
  %185 = vmatpush2.msra.mxu0 0.0
  %186 = vmatprep.subr.mxu0 0.0
  %187 = vmatpush2.msra.mxu0 0.0
  %188 = vmatprep.subr.mxu0 0.0
  %189 = vmatpush2.msra.mxu0 0.0
  %190 = vmatprep.subr.mxu0 0.0
  %191 = vmatpush2.msra.mxu0 0.0
  %192 = vmatprep.subr.mxu0 0.0
  %193 = vmatpush2.msra.mxu0 0.0
  %194 = vmatprep.subr.mxu0 0.0
  %195 = vmatpush2.msra.mxu0 0.0
  %196 = vmatprep.subr.mxu0 0.0
  %197 = vmatpush2.msra.mxu0 0.0
  %198 = vmatprep.subr.mxu0 0.0
  %199 = vmatpush2.msra.mxu0 0.0
  %200 = vmatprep.subr.mxu0 0.0
  %201 = vmatpush2.msra.mxu0 0.0
  %202 = vmatprep.subr.mxu0 0.0
  %203 = vmatpush2.msra.mxu0 0.0
  %204 = vmatprep.subr.mxu0 0.0
  %205 = vmatpush2.msra.mxu0 0.0
  %206 = vmatprep.subr.mxu0 0.0
  %207 = vmatpush2.msra.mxu0 0.0
  %208 = vmatprep.subr.mxu0 0.0
  %209 = vmatpush2.msra.mxu0 0.0
  %210 = vmatprep.subr.mxu0 0.0
  %211 = vmatpush2.msra.mxu0 0.0
  %212 = vmatprep.mubr.f32.mxu0 0.0
  %213 = vmatmul.mubr.f32.gmra.mxu0 %v143
  %v214 = vpop.f32.mrf.mxu0
  %v215 = vadd.f32 %v141, %v214
  %v216 = vpop.f32.mrf.mxu0
  %217 = vmatprep.mubr.f32.mxu0 0.0
  %218 = vmatmul.mubr.f32.gmra.mxu0 %v146
  %v219 = vpop.f32.mrf.mxu0
  %v220 = vadd.f32 %v141, %v219
  %v221 = vpop.f32.mrf.mxu0
  %222 = vdwg.mxu0
  %225 = vrot.lane.b32.xlu0 %v215, 124
  %v226 = vpop.permute.xlu0 %225
  %227 = vrot.lane.b32.xlu0 %v220, 124
  %v228 = vpop.permute.xlu0 %227
  %231 = vrot.lane.b32.xlu0 %v215, 120
  %v232 = vpop.permute.xlu0 %231
  %233 = vrot.lane.b32.xlu0 %v220, 120
  %v234 = vpop.permute.xlu0 %233
  %237 = vrot.lane.b32.xlu0 %v215, 116
  %v238 = vpop.permute.xlu0 %237
  %239 = vrot.lane.b32.xlu0 %v220, 116
  %v240 = vpop.permute.xlu0 %239
  %v243 = vmul.f32 %v215, 0.5
  %v244 = vmul.f32 %v220, 0.5
  %v245 = vmul.f32 %v226, 0.5
  %v246 = vmul.f32 %v228, 0.5
  %v247 = vmul.f32 %v232, 0.5
  %v248 = vmul.f32 %v234, 0.5
  %v249 = vmul.f32 %v238, 0.5
  %v250 = vmul.f32 %v240, 0.5
  %251 = vrot.lane.b32.xlu0 %v215, 112
  %v252 = vpop.permute.xlu0 %251
  %253 = vrot.lane.b32.xlu0 %v220, 112
  %v254 = vpop.permute.xlu0 %253
  %vm255 = vcmask 31744
  %v257 = vsel %vm255, %v243, 0
  %v260 = vsel %vm255, %v244, 0
  %v262 = vsel %vm255, %v252, 0
  %v264 = vsel %vm255, %v254, 0
  %266 = vmatprep.subr.mxu0 0.0
  %267 = vmatpush1.xpose.msra.mxu0 0.0
  %268 = vmatprep.subr.mxu0 0.0
  %269 = vmatpush1.xpose.msra.mxu0 0.0
  %270 = vmatprep.subr.mxu0 0.0
  %271 = vmatpush1.xpose.msra.mxu0 0.0
  %272 = vmatprep.subr.mxu0 0.0
  %273 = vmatpush1.xpose.msra.mxu0 0.0
  %274 = vmatprep.subr.mxu0 0.0
  %275 = vmatpush1.xpose.msra.mxu0 0.0
  %276 = vmatprep.subr.mxu0 0.0
  %277 = vmatpush1.xpose.msra.mxu0 0.0
  %278 = vmatprep.subr.mxu0 0.0
  %279 = vmatpush1.xpose.msra.mxu0 0.0
  %280 = vmatprep.subr.mxu0 0.0
  %281 = vmatpush1.xpose.msra.mxu0 0.0
  %282 = vmatprep.subr.mxu0 0.0
  %283 = vmatpush1.xpose.msra.mxu0 0.0
  %284 = vmatprep.subr.mxu0 0.0
  %285 = vmatpush1.xpose.msra.mxu0 0.0
  %286 = vmatprep.subr.mxu0 0.0
  %287 = vmatpush1.xpose.msra.mxu0 0.0
  %288 = vmatprep.subr.mxu0 0.0
  %289 = vmatpush1.xpose.msra.mxu0 0.0
  %290 = vmatprep.subr.mxu0 0.0
  %291 = vmatpush1.xpose.msra.mxu0 0.0
  %292 = vmatprep.subr.mxu0 0.0
  %293 = vmatpush1.xpose.msra.mxu0 0.0
  %294 = vmatprep.subr.mxu0 0.0
  %295 = vmatpush1.xpose.msra.mxu0 %v264
  %296 = vmatprep.subr.mxu0 0.0
  %297 = vmatpush1.xpose.msra.mxu0 %v262
  %298 = vmatprep.subr.mxu0 0.0
  %299 = vmatpush2.xpose.msra.mxu0 0.0
  %300 = vmatprep.subr.mxu0 0.0
  %301 = vmatpush2.xpose.msra.mxu0 0.0
  %302 = vmatprep.subr.mxu0 0.0
  %303 = vmatpush2.xpose.msra.mxu0 0.0
  %304 = vmatprep.subr.mxu0 0.0
  %305 = vmatpush2.xpose.msra.mxu0 0.0
  %306 = vmatprep.subr.mxu0 0.0
  %307 = vmatpush2.xpose.msra.mxu0 0.0
  %308 = vmatprep.subr.mxu0 0.0
  %309 = vmatpush2.xpose.msra.mxu0 0.0
  %310 = vmatprep.subr.mxu0 0.0
  %311 = vmatpush2.xpose.msra.mxu0 0.0
  %312 = vmatprep.subr.mxu0 0.0
  %313 = vmatpush2.xpose.msra.mxu0 0.0
  %314 = vmatprep.subr.mxu0 0.0
  %315 = vmatpush2.xpose.msra.mxu0 0.0
  %316 = vmatprep.subr.mxu0 0.0
  %317 = vmatpush2.xpose.msra.mxu0 0.0
  %318 = vmatprep.subr.mxu0 0.0
  %319 = vmatpush2.xpose.msra.mxu0 0.0
  %320 = vmatprep.subr.mxu0 0.0
  %321 = vmatpush2.xpose.msra.mxu0 0.0
  %322 = vmatprep.subr.mxu0 0.0
  %323 = vmatpush2.xpose.msra.mxu0 0.0
  %324 = vmatprep.subr.mxu0 0.0
  %325 = vmatpush2.xpose.msra.mxu0 0.0
  %326 = vmatprep.subr.mxu0 0.0
  %327 = vmatpush2.xpose.msra.mxu0 0.0
  %328 = vmatprep.subr.mxu0 0.0
  %329 = vmatpush2.xpose.msra.mxu0 0.0
  %330 = vmatprep.mubr.f32.mxu0 0.0
  %331 = vmatmul.mubr.f32.gmra.mxu0 %v257
  %v332 = vpop.f32.mrf.mxu0
  %v333 = vadd.f32 %v89, %v332
  %v334 = vpop.f32.mrf.mxu0
  %335 = vmatprep.mubr.f32.mxu0 0.0
  %336 = vmatmul.mubr.f32.gmra.mxu0 %v260
  %v337 = vpop.f32.mrf.mxu0
  %v338 = vadd.f32 %v90, %v337
  %v339 = vpop.f32.mrf.mxu0
  %340 = vdwg.mxu0
  %341 = vrot.lane.b32.xlu0 %v226, 112
  %v342 = vpop.permute.xlu0 %341
  %343 = vrot.lane.b32.xlu0 %v228, 112
  %v344 = vpop.permute.xlu0 %343
  %v346 = vsel %vm255, %v245, 0
  %v349 = vsel %vm255, %v246, 0
  %v351 = vsel %vm255, %v342, 0
  %v353 = vsel %vm255, %v344, 0
  %355 = vmatprep.subr.mxu0 0.0
  %356 = vmatpush1.xpose.msra.mxu0 0.0
  %357 = vmatprep.subr.mxu0 0.0
  %358 = vmatpush1.xpose.msra.mxu0 0.0
  %359 = vmatprep.subr.mxu0 0.0
  %360 = vmatpush1.xpose.msra.mxu0 0.0
  %361 = vmatprep.subr.mxu0 0.0
  %362 = vmatpush1.xpose.msra.mxu0 0.0
  %363 = vmatprep.subr.mxu0 0.0
  %364 = vmatpush1.xpose.msra.mxu0 0.0
  %365 = vmatprep.subr.mxu0 0.0
  %366 = vmatpush1.xpose.msra.mxu0 0.0
  %367 = vmatprep.subr.mxu0 0.0
  %368 = vmatpush1.xpose.msra.mxu0 0.0
  %369 = vmatprep.subr.mxu0 0.0
  %370 = vmatpush1.xpose.msra.mxu0 0.0
  %371 = vmatprep.subr.mxu0 0.0
  %372 = vmatpush1.xpose.msra.mxu0 0.0
  %373 = vmatprep.subr.mxu0 0.0
  %374 = vmatpush1.xpose.msra.mxu0 0.0
  %375 = vmatprep.subr.mxu0 0.0
  %376 = vmatpush1.xpose.msra.mxu0 0.0
  %377 = vmatprep.subr.mxu0 0.0
  %378 = vmatpush1.xpose.msra.mxu0 0.0
  %379 = vmatprep.subr.mxu0 0.0
  %380 = vmatpush1.xpose.msra.mxu0 0.0
  %381 = vmatprep.subr.mxu0 0.0
  %382 = vmatpush1.xpose.msra.mxu0 0.0
  %383 = vmatprep.subr.mxu0 0.0
  %384 = vmatpush1.xpose.msra.mxu0 %v353
  %385 = vmatprep.subr.mxu0 0.0
  %386 = vmatpush1.xpose.msra.mxu0 %v351
  %387 = vmatprep.subr.mxu0 0.0
  %388 = vmatpush2.xpose.msra.mxu0 0.0
  %389 = vmatprep.subr.mxu0 0.0
  %390 = vmatpush2.xpose.msra.mxu0 0.0
  %391 = vmatprep.subr.mxu0 0.0
  %392 = vmatpush2.xpose.msra.mxu0 0.0
  %393 = vmatprep.subr.mxu0 0.0
  %394 = vmatpush2.xpose.msra.mxu0 0.0
  %395 = vmatprep.subr.mxu0 0.0
  %396 = vmatpush2.xpose.msra.mxu0 0.0
  %397 = vmatprep.subr.mxu0 0.0
  %398 = vmatpush2.xpose.msra.mxu0 0.0
  %399 = vmatprep.subr.mxu0 0.0
  %400 = vmatpush2.xpose.msra.mxu0 0.0
  %401 = vmatprep.subr.mxu0 0.0
  %402 = vmatpush2.xpose.msra.mxu0 0.0
  %403 = vmatprep.subr.mxu0 0.0
  %404 = vmatpush2.xpose.msra.mxu0 0.0
  %405 = vmatprep.subr.mxu0 0.0
  %406 = vmatpush2.xpose.msra.mxu0 0.0
  %407 = vmatprep.subr.mxu0 0.0
  %408 = vmatpush2.xpose.msra.mxu0 0.0
  %409 = vmatprep.subr.mxu0 0.0
  %410 = vmatpush2.xpose.msra.mxu0 0.0
  %411 = vmatprep.subr.mxu0 0.0
  %412 = vmatpush2.xpose.msra.mxu0 0.0
  %413 = vmatprep.subr.mxu0 0.0
  %414 = vmatpush2.xpose.msra.mxu0 0.0
  %415 = vmatprep.subr.mxu0 0.0
  %416 = vmatpush2.xpose.msra.mxu0 0.0
  %417 = vmatprep.subr.mxu0 0.0
  %418 = vmatpush2.xpose.msra.mxu0 0.0
  %419 = vmatprep.mubr.f32.mxu0 0.0
  %420 = vmatmul.mubr.f32.gmra.mxu0 %v346
  %v421 = vpop.f32.mrf.mxu0
  %v422 = vadd.f32 %v89, %v421
  %v423 = vpop.f32.mrf.mxu0
  %424 = vmatprep.mubr.f32.mxu0 0.0
  %425 = vmatmul.mubr.f32.gmra.mxu0 %v349
  %v426 = vpop.f32.mrf.mxu0
  %v427 = vadd.f32 %v90, %v426
  %v428 = vpop.f32.mrf.mxu0
  %429 = vdwg.mxu0
  %430 = vrot.lane.b32.xlu0 %v232, 112
  %v431 = vpop.permute.xlu0 %430
  %432 = vrot.lane.b32.xlu0 %v234, 112
  %v433 = vpop.permute.xlu0 %432
  %v435 = vsel %vm255, %v247, 0
  %v438 = vsel %vm255, %v248, 0
  %v440 = vsel %vm255, %v431, 0
  %v442 = vsel %vm255, %v433, 0
  %444 = vmatprep.subr.mxu0 0.0
  %445 = vmatpush1.xpose.msra.mxu0 0.0
  %446 = vmatprep.subr.mxu0 0.0
  %447 = vmatpush1.xpose.msra.mxu0 0.0
  %448 = vmatprep.subr.mxu0 0.0
  %449 = vmatpush1.xpose.msra.mxu0 0.0
  %450 = vmatprep.subr.mxu0 0.0
  %451 = vmatpush1.xpose.msra.mxu0 0.0
  %452 = vmatprep.subr.mxu0 0.0
  %453 = vmatpush1.xpose.msra.mxu0 0.0
  %454 = vmatprep.subr.mxu0 0.0
  %455 = vmatpush1.xpose.msra.mxu0 0.0
  %456 = vmatprep.subr.mxu0 0.0
  %457 = vmatpush1.xpose.msra.mxu0 0.0
  %458 = vmatprep.subr.mxu0 0.0
  %459 = vmatpush1.xpose.msra.mxu0 0.0
  %460 = vmatprep.subr.mxu0 0.0
  %461 = vmatpush1.xpose.msra.mxu0 0.0
  %462 = vmatprep.subr.mxu0 0.0
  %463 = vmatpush1.xpose.msra.mxu0 0.0
  %464 = vmatprep.subr.mxu0 0.0
  %465 = vmatpush1.xpose.msra.mxu0 0.0
  %466 = vmatprep.subr.mxu0 0.0
  %467 = vmatpush1.xpose.msra.mxu0 0.0
  %468 = vmatprep.subr.mxu0 0.0
  %469 = vmatpush1.xpose.msra.mxu0 0.0
  %470 = vmatprep.subr.mxu0 0.0
  %471 = vmatpush1.xpose.msra.mxu0 0.0
  %472 = vmatprep.subr.mxu0 0.0
  %473 = vmatpush1.xpose.msra.mxu0 %v442
  %474 = vmatprep.subr.mxu0 0.0
  %475 = vmatpush1.xpose.msra.mxu0 %v440
  %476 = vmatprep.subr.mxu0 0.0
  %477 = vmatpush2.xpose.msra.mxu0 0.0
  %478 = vmatprep.subr.mxu0 0.0
  %479 = vmatpush2.xpose.msra.mxu0 0.0
  %480 = vmatprep.subr.mxu0 0.0
  %481 = vmatpush2.xpose.msra.mxu0 0.0
  %482 = vmatprep.subr.mxu0 0.0
  %483 = vmatpush2.xpose.msra.mxu0 0.0
  %484 = vmatprep.subr.mxu0 0.0
  %485 = vmatpush2.xpose.msra.mxu0 0.0
  %486 = vmatprep.subr.mxu0 0.0
  %487 = vmatpush2.xpose.msra.mxu0 0.0
  %488 = vmatprep.subr.mxu0 0.0
  %489 = vmatpush2.xpose.msra.mxu0 0.0
  %490 = vmatprep.subr.mxu0 0.0
  %491 = vmatpush2.xpose.msra.mxu0 0.0
  %492 = vmatprep.subr.mxu0 0.0
  %493 = vmatpush2.xpose.msra.mxu0 0.0
  %494 = vmatprep.subr.mxu0 0.0
  %495 = vmatpush2.xpose.msra.mxu0 0.0
  %496 = vmatprep.subr.mxu0 0.0
  %497 = vmatpush2.xpose.msra.mxu0 0.0
  %498 = vmatprep.subr.mxu0 0.0
  %499 = vmatpush2.xpose.msra.mxu0 0.0
  %500 = vmatprep.subr.mxu0 0.0
  %501 = vmatpush2.xpose.msra.mxu0 0.0
  %502 = vmatprep.subr.mxu0 0.0
  %503 = vmatpush2.xpose.msra.mxu0 0.0
  %504 = vmatprep.subr.mxu0 0.0
  %505 = vmatpush2.xpose.msra.mxu0 0.0
  %506 = vmatprep.subr.mxu0 0.0
  %507 = vmatpush2.xpose.msra.mxu0 0.0
  %508 = vmatprep.mubr.f32.mxu0 0.0
  %509 = vmatmul.mubr.f32.gmra.mxu0 %v435
  %v510 = vpop.f32.mrf.mxu0
  %v511 = vadd.f32 %v89, %v510
  %v512 = vpop.f32.mrf.mxu0
  %513 = vmatprep.mubr.f32.mxu0 0.0
  %514 = vmatmul.mubr.f32.gmra.mxu0 %v438
  %v515 = vpop.f32.mrf.mxu0
  %v516 = vadd.f32 %v90, %v515
  %v517 = vpop.f32.mrf.mxu0
  %518 = vdwg.mxu0
  %519 = vrot.lane.b32.xlu0 %v238, 112
  %v520 = vpop.permute.xlu0 %519
  %521 = vrot.lane.b32.xlu0 %v240, 112
  %v522 = vpop.permute.xlu0 %521
  %v524 = vsel %vm255, %v249, 0
  %v527 = vsel %vm255, %v250, 0
  %v529 = vsel %vm255, %v520, 0
  %v531 = vsel %vm255, %v522, 0
  %533 = vmatprep.subr.mxu0 0.0
  %534 = vmatpush1.xpose.msra.mxu0 0.0
  %535 = vmatprep.subr.mxu0 0.0
  %536 = vmatpush1.xpose.msra.mxu0 0.0
  %537 = vmatprep.subr.mxu0 0.0
  %538 = vmatpush1.xpose.msra.mxu0 0.0
  %539 = vmatprep.subr.mxu0 0.0
  %540 = vmatpush1.xpose.msra.mxu0 0.0
  %541 = vmatprep.subr.mxu0 0.0
  %542 = vmatpush1.xpose.msra.mxu0 0.0
  %543 = vmatprep.subr.mxu0 0.0
  %544 = vmatpush1.xpose.msra.mxu0 0.0
  %545 = vmatprep.subr.mxu0 0.0
  %546 = vmatpush1.xpose.msra.mxu0 0.0
  %547 = vmatprep.subr.mxu0 0.0
  %548 = vmatpush1.xpose.msra.mxu0 0.0
  %549 = vmatprep.subr.mxu0 0.0
  %550 = vmatpush1.xpose.msra.mxu0 0.0
  %551 = vmatprep.subr.mxu0 0.0
  %552 = vmatpush1.xpose.msra.mxu0 0.0
  %553 = vmatprep.subr.mxu0 0.0
  %554 = vmatpush1.xpose.msra.mxu0 0.0
  %555 = vmatprep.subr.mxu0 0.0
  %556 = vmatpush1.xpose.msra.mxu0 0.0
  %557 = vmatprep.subr.mxu0 0.0
  %558 = vmatpush1.xpose.msra.mxu0 0.0
  %559 = vmatprep.subr.mxu0 0.0
  %560 = vmatpush1.xpose.msra.mxu0 0.0
  %561 = vmatprep.subr.mxu0 0.0
  %562 = vmatpush1.xpose.msra.mxu0 %v531
  %563 = vmatprep.subr.mxu0 0.0
  %564 = vmatpush1.xpose.msra.mxu0 %v529
  %565 = vmatprep.subr.mxu0 0.0
  %566 = vmatpush2.xpose.msra.mxu0 0.0
  %567 = vmatprep.subr.mxu0 0.0
  %568 = vmatpush2.xpose.msra.mxu0 0.0
  %569 = vmatprep.subr.mxu0 0.0
  %570 = vmatpush2.xpose.msra.mxu0 0.0
  %571 = vmatprep.subr.mxu0 0.0
  %572 = vmatpush2.xpose.msra.mxu0 0.0
  %573 = vmatprep.subr.mxu0 0.0
  %574 = vmatpush2.xpose.msra.mxu0 0.0
  %575 = vmatprep.subr.mxu0 0.0
  %576 = vmatpush2.xpose.msra.mxu0 0.0
  %577 = vmatprep.subr.mxu0 0.0
  %578 = vmatpush2.xpose.msra.mxu0 0.0
  %579 = vmatprep.subr.mxu0 0.0
  %580 = vmatpush2.xpose.msra.mxu0 0.0
  %581 = vmatprep.subr.mxu0 0.0
  %582 = vmatpush2.xpose.msra.mxu0 0.0
  %583 = vmatprep.subr.mxu0 0.0
  %584 = vmatpush2.xpose.msra.mxu0 0.0
  %585 = vmatprep.subr.mxu0 0.0
  %586 = vmatpush2.xpose.msra.mxu0 0.0
  %587 = vmatprep.subr.mxu0 0.0
  %588 = vmatpush2.xpose.msra.mxu0 0.0
  %589 = vmatprep.subr.mxu0 0.0
  %590 = vmatpush2.xpose.msra.mxu0 0.0
  %591 = vmatprep.subr.mxu0 0.0
  %592 = vmatpush2.xpose.msra.mxu0 0.0
  %593 = vmatprep.subr.mxu0 0.0
  %594 = vmatpush2.xpose.msra.mxu0 0.0
  %595 = vmatprep.subr.mxu0 0.0
  %596 = vmatpush2.xpose.msra.mxu0 0.0
  %597 = vmatprep.mubr.f32.mxu0 0.0
  %598 = vmatmul.mubr.f32.gmra.mxu0 %v524
  %v599 = vpop.f32.mrf.mxu0
  %v600 = vadd.f32 %v89, %v599
  %v601 = vpop.f32.mrf.mxu0
  %602 = vmatprep.mubr.f32.mxu0 0.0
  %603 = vmatmul.mubr.f32.gmra.mxu0 %v527
  %v604 = vpop.f32.mrf.mxu0
  %v605 = vadd.f32 %v90, %v604
  %v606 = vpop.f32.mrf.mxu0
  %607 = vdwg.mxu0
  %v608 = vsel %vm91, %v333, -inf
  %609 = vmax.xlane.f32.xlu0 %v608
  %v610 = vpop.xlane.xlu0 %609
  %v611 = vsel %vm91, %v338, -inf
  %612 = vmax.xlane.f32.xlu0 %v611
  %v613 = vpop.xlane.xlu0 %612
  %v614 = vsel %vm91, %v422, -inf
  %615 = vmax.xlane.f32.xlu0 %v614
  %v616 = vpop.xlane.xlu0 %615
  %v617 = vsel %vm91, %v427, -inf
  %618 = vmax.xlane.f32.xlu0 %v617
  %v619 = vpop.xlane.xlu0 %618
  %v620 = vsel %vm91, %v511, -inf
  %621 = vmax.xlane.f32.xlu0 %v620
  %v622 = vpop.xlane.xlu0 %621
  %v623 = vsel %vm91, %v516, -inf
  %624 = vmax.xlane.f32.xlu0 %v623
  %v625 = vpop.xlane.xlu0 %624
  %v626 = vsel %vm91, %v600, -inf
  %627 = vmax.xlane.f32.xlu0 %v626
  %v628 = vpop.xlane.xlu0 %627
  %v629 = vsel %vm91, %v605, -inf
  %630 = vmax.xlane.f32.xlu0 %v629
  %v631 = vpop.xlane.xlu0 %630
  %v632 = vsub.f32 %v333, %v610
  %v633 = vsub.f32 %v338, %v613
  %v634 = vsub.f32 %v422, %v616
  %v635 = vsub.f32 %v427, %v619
  %v636 = vsub.f32 %v511, %v622
  %v637 = vsub.f32 %v516, %v625
  %v638 = vsub.f32 %v600, %v628
  %v639 = vsub.f32 %v605, %v631
  %v640 = vmul.f32 %v632, 1.442695
  %v641 = vpow.pop %v640
  %v642 = vmul.f32 %v633, 1.442695
  %v643 = vpow.pop %v642
  %v644 = vmul.f32 %v634, 1.442695
  %v645 = vpow.pop %v644
  %v646 = vmul.f32 %v635, 1.442695
  %v647 = vpow.pop %v646
  %v648 = vmul.f32 %v636, 1.442695
  %v649 = vpow.pop %v648
  %v650 = vmul.f32 %v637, 1.442695
  %v651 = vpow.pop %v650
  %v652 = vmul.f32 %v638, 1.442695
  %v653 = vpow.pop %v652
  %v654 = vmul.f32 %v639, 1.442695
  %v655 = vpow.pop %v654
  %v656 = vsel %vm91, %v641, 0.0
  %657 = vadd.xlane.f32.xlu0 %v656
  %v658 = vpop.xlane.xlu0 %657
  %v659 = vsel %vm91, %v643, 0.0
  %660 = vadd.xlane.f32.xlu0 %v659
  %v661 = vpop.xlane.xlu0 %660
  %v662 = vsel %vm91, %v645, 0.0
  %663 = vadd.xlane.f32.xlu0 %v662
  %v664 = vpop.xlane.xlu0 %663
  %v665 = vsel %vm91, %v647, 0.0
  %666 = vadd.xlane.f32.xlu0 %v665
  %v667 = vpop.xlane.xlu0 %666
  %v668 = vsel %vm91, %v649, 0.0
  %669 = vadd.xlane.f32.xlu0 %v668
  %v670 = vpop.xlane.xlu0 %669
  %v671 = vsel %vm91, %v651, 0.0
  %672 = vadd.xlane.f32.xlu0 %v671
  %v673 = vpop.xlane.xlu0 %672
  %v674 = vsel %vm91, %v653, 0.0
  %675 = vadd.xlane.f32.xlu0 %v674
  %v676 = vpop.xlane.xlu0 %675
  %v677 = vsel %vm91, %v655, 0.0
  %678 = vadd.xlane.f32.xlu0 %v677
  %v679 = vpop.xlane.xlu0 %678
  %v680 = vrcp.pop %v658
  %v681 = vrcp.pop %v661
  %v682 = vrcp.pop %v664
  %v683 = vrcp.pop %v667
  %v684 = vrcp.pop %v670
  %v685 = vrcp.pop %v673
  %v686 = vrcp.pop %v676
  %v687 = vrcp.pop %v679
  %v688 = vmul.f32 %v641, %v680
  %v689 = vmul.f32 %v643, %v681
  %v690 = vmul.f32 %v645, %v682
  %v691 = vmul.f32 %v647, %v683
  %v692 = vmul.f32 %v649, %v684
  %v693 = vmul.f32 %v651, %v685
  %v694 = vmul.f32 %v653, %v686
  %v695 = vmul.f32 %v655, %v687
  %696 = vrot.lane.b32.xlu0 %v215, 96
  %v697 = vpop.permute.xlu0 %696
  %698 = vrot.lane.b32.xlu0 %v220, 96
  %v699 = vpop.permute.xlu0 %698
  %v703 = vsel %vm91, %v688, 0
  %v706 = vsel %vm91, %v689, 0
  %708 = vmatprep.subr.mxu0 0.0
  %709 = vmatpush1.msra.mxu0 0.0
  %710 = vmatprep.subr.mxu0 0.0
  %711 = vmatpush1.msra.mxu0 0.0
  %712 = vmatprep.subr.mxu0 0.0
  %713 = vmatpush1.msra.mxu0 0.0
  %714 = vmatprep.subr.mxu0 0.0
  %715 = vmatpush1.msra.mxu0 0.0
  %716 = vmatprep.subr.mxu0 0.0
  %717 = vmatpush1.msra.mxu0 0.0
  %718 = vmatprep.subr.mxu0 0.0
  %719 = vmatpush1.msra.mxu0 0.0
  %720 = vmatprep.subr.mxu0 0.0
  %721 = vmatpush1.msra.mxu0 0.0
  %722 = vmatprep.subr.mxu0 0.0
  %723 = vmatpush1.msra.mxu0 0.0
  %724 = vmatprep.subr.mxu0 0.0
  %725 = vmatpush1.msra.mxu0 0.0
  %726 = vmatprep.subr.mxu0 0.0
  %727 = vmatpush1.msra.mxu0 0.0
  %728 = vmatprep.subr.mxu0 0.0
  %729 = vmatpush1.msra.mxu0 0.0
  %730 = vmatprep.subr.mxu0 0.0
  %731 = vmatpush1.msra.mxu0 0.0
  %732 = vmatprep.subr.mxu0 0.0
  %733 = vmatpush1.msra.mxu0 0.0
  %734 = vmatprep.subr.mxu0 0.0
  %735 = vmatpush1.msra.mxu0 0.0
  %736 = vmatprep.subr.mxu0 0.0
  %737 = vmatpush1.msra.mxu0 %v699
  %738 = vmatprep.subr.mxu0 0.0
  %739 = vmatpush1.msra.mxu0 %v697
  %740 = vmatprep.subr.mxu0 0.0
  %741 = vmatpush2.msra.mxu0 0.0
  %742 = vmatprep.subr.mxu0 0.0
  %743 = vmatpush2.msra.mxu0 0.0
  %744 = vmatprep.subr.mxu0 0.0
  %745 = vmatpush2.msra.mxu0 0.0
  %746 = vmatprep.subr.mxu0 0.0
  %747 = vmatpush2.msra.mxu0 0.0
  %748 = vmatprep.subr.mxu0 0.0
  %749 = vmatpush2.msra.mxu0 0.0
  %750 = vmatprep.subr.mxu0 0.0
  %751 = vmatpush2.msra.mxu0 0.0
  %752 = vmatprep.subr.mxu0 0.0
  %753 = vmatpush2.msra.mxu0 0.0
  %754 = vmatprep.subr.mxu0 0.0
  %755 = vmatpush2.msra.mxu0 0.0
  %756 = vmatprep.subr.mxu0 0.0
  %757 = vmatpush2.msra.mxu0 0.0
  %758 = vmatprep.subr.mxu0 0.0
  %759 = vmatpush2.msra.mxu0 0.0
  %760 = vmatprep.subr.mxu0 0.0
  %761 = vmatpush2.msra.mxu0 0.0
  %762 = vmatprep.subr.mxu0 0.0
  %763 = vmatpush2.msra.mxu0 0.0
  %764 = vmatprep.subr.mxu0 0.0
  %765 = vmatpush2.msra.mxu0 0.0
  %766 = vmatprep.subr.mxu0 0.0
  %767 = vmatpush2.msra.mxu0 0.0
  %768 = vmatprep.subr.mxu0 0.0
  %769 = vmatpush2.msra.mxu0 0.0
  %770 = vmatprep.subr.mxu0 0.0
  %771 = vmatpush2.msra.mxu0 0.0
  %772 = vmatprep.mubr.f32.mxu0 0.0
  %773 = vmatmul.mubr.f32.gmra.mxu0 %v703
  %v774 = vpop.f32.mrf.mxu0
  %v775 = vadd.f32 0.0, %v774
  %v776 = vpop.f32.mrf.mxu0
  %777 = vmatprep.mubr.f32.mxu0 0.0
  %778 = vmatmul.mubr.f32.gmra.mxu0 %v706
  %v779 = vpop.f32.mrf.mxu0
  %v780 = vadd.f32 0.0, %v779
  %v781 = vpop.f32.mrf.mxu0
  %782 = vdwg.mxu0
  %783 = vrot.lane.b32.xlu0 %v226, 96
  %v784 = vpop.permute.xlu0 %783
  %785 = vrot.lane.b32.xlu0 %v228, 96
  %v786 = vpop.permute.xlu0 %785
  %v790 = vsel %vm91, %v690, 0
  %v793 = vsel %vm91, %v691, 0
  %795 = vmatprep.subr.mxu0 0.0
  %796 = vmatpush1.msra.mxu0 0.0
  %797 = vmatprep.subr.mxu0 0.0
  %798 = vmatpush1.msra.mxu0 0.0
  %799 = vmatprep.subr.mxu0 0.0
  %800 = vmatpush1.msra.mxu0 0.0
  %801 = vmatprep.subr.mxu0 0.0
  %802 = vmatpush1.msra.mxu0 0.0
  %803 = vmatprep.subr.mxu0 0.0
  %804 = vmatpush1.msra.mxu0 0.0
  %805 = vmatprep.subr.mxu0 0.0
  %806 = vmatpush1.msra.mxu0 0.0
  %807 = vmatprep.subr.mxu0 0.0
  %808 = vmatpush1.msra.mxu0 0.0
  %809 = vmatprep.subr.mxu0 0.0
  %810 = vmatpush1.msra.mxu0 0.0
  %811 = vmatprep.subr.mxu0 0.0
  %812 = vmatpush1.msra.mxu0 0.0
  %813 = vmatprep.subr.mxu0 0.0
  %814 = vmatpush1.msra.mxu0 0.0
  %815 = vmatprep.subr.mxu0 0.0
  %816 = vmatpush1.msra.mxu0 0.0
  %817 = vmatprep.subr.mxu0 0.0
  %818 = vmatpush1.msra.mxu0 0.0
  %819 = vmatprep.subr.mxu0 0.0
  %820 = vmatpush1.msra.mxu0 0.0
  %821 = vmatprep.subr.mxu0 0.0
  %822 = vmatpush1.msra.mxu0 0.0
  %823 = vmatprep.subr.mxu0 0.0
  %824 = vmatpush1.msra.mxu0 %v786
  %825 = vmatprep.subr.mxu0 0.0
  %826 = vmatpush1.msra.mxu0 %v784
  %827 = vmatprep.subr.mxu0 0.0
  %828 = vmatpush2.msra.mxu0 0.0
  %829 = vmatprep.subr.mxu0 0.0
  %830 = vmatpush2.msra.mxu0 0.0
  %831 = vmatprep.subr.mxu0 0.0
  %832 = vmatpush2.msra.mxu0 0.0
  %833 = vmatprep.subr.mxu0 0.0
  %834 = vmatpush2.msra.mxu0 0.0
  %835 = vmatprep.subr.mxu0 0.0
  %836 = vmatpush2.msra.mxu0 0.0
  %837 = vmatprep.subr.mxu0 0.0
  %838 = vmatpush2.msra.mxu0 0.0
  %839 = vmatprep.subr.mxu0 0.0
  %840 = vmatpush2.msra.mxu0 0.0
  %841 = vmatprep.subr.mxu0 0.0
  %842 = vmatpush2.msra.mxu0 0.0
  %843 = vmatprep.subr.mxu0 0.0
  %844 = vmatpush2.msra.mxu0 0.0
  %845 = vmatprep.subr.mxu0 0.0
  %846 = vmatpush2.msra.mxu0 0.0
  %847 = vmatprep.subr.mxu0 0.0
  %848 = vmatpush2.msra.mxu0 0.0
  %849 = vmatprep.subr.mxu0 0.0
  %850 = vmatpush2.msra.mxu0 0.0
  %851 = vmatprep.subr.mxu0 0.0
  %852 = vmatpush2.msra.mxu0 0.0
  %853 = vmatprep.subr.mxu0 0.0
  %854 = vmatpush2.msra.mxu0 0.0
  %855 = vmatprep.subr.mxu0 0.0
  %856 = vmatpush2.msra.mxu0 0.0
  %857 = vmatprep.subr.mxu0 0.0
  %858 = vmatpush2.msra.mxu0 0.0
  %859 = vmatprep.mubr.f32.mxu0 0.0
  %860 = vmatmul.mubr.f32.gmra.mxu0 %v790
  %v861 = vpop.f32.mrf.mxu0
  %v862 = vadd.f32 0.0, %v861
  %v863 = vpop.f32.mrf.mxu0
  %864 = vmatprep.mubr.f32.mxu0 0.0
  %865 = vmatmul.mubr.f32.gmra.mxu0 %v793
  %v866 = vpop.f32.mrf.mxu0
  %v867 = vadd.f32 0.0, %v866
  %v868 = vpop.f32.mrf.mxu0
  %869 = vdwg.mxu0
  %870 = vrot.lane.b32.xlu0 %v232, 96
  %v871 = vpop.permute.xlu0 %870
  %872 = vrot.lane.b32.xlu0 %v234, 96
  %v873 = vpop.permute.xlu0 %872
  %v877 = vsel %vm91, %v692, 0
  %v880 = vsel %vm91, %v693, 0
  %882 = vmatprep.subr.mxu0 0.0
  %883 = vmatpush1.msra.mxu0 0.0
  %884 = vmatprep.subr.mxu0 0.0
  %885 = vmatpush1.msra.mxu0 0.0
  %886 = vmatprep.subr.mxu0 0.0
  %887 = vmatpush1.msra.mxu0 0.0
  %888 = vmatprep.subr.mxu0 0.0
  %889 = vmatpush1.msra.mxu0 0.0
  %890 = vmatprep.subr.mxu0 0.0
  %891 = vmatpush1.msra.mxu0 0.0
  %892 = vmatprep.subr.mxu0 0.0
  %893 = vmatpush1.msra.mxu0 0.0
  %894 = vmatprep.subr.mxu0 0.0
  %895 = vmatpush1.msra.mxu0 0.0
  %896 = vmatprep.subr.mxu0 0.0
  %897 = vmatpush1.msra.mxu0 0.0
  %898 = vmatprep.subr.mxu0 0.0
  %899 = vmatpush1.msra.mxu0 0.0
  %900 = vmatprep.subr.mxu0 0.0
  %901 = vmatpush1.msra.mxu0 0.0
  %902 = vmatprep.subr.mxu0 0.0
  %903 = vmatpush1.msra.mxu0 0.0
  %904 = vmatprep.subr.mxu0 0.0
  %905 = vmatpush1.msra.mxu0 0.0
  %906 = vmatprep.subr.mxu0 0.0
  %907 = vmatpush1.msra.mxu0 0.0
  %908 = vmatprep.subr.mxu0 0.0
  %909 = vmatpush1.msra.mxu0 0.0
  %910 = vmatprep.subr.mxu0 0.0
  %911 = vmatpush1.msra.mxu0 %v873
  %912 = vmatprep.subr.mxu0 0.0
  %913 = vmatpush1.msra.mxu0 %v871
  %914 = vmatprep.subr.mxu0 0.0
  %915 = vmatpush2.msra.mxu0 0.0
  %916 = vmatprep.subr.mxu0 0.0
  %917 = vmatpush2.msra.mxu0 0.0
  %918 = vmatprep.subr.mxu0 0.0
  %919 = vmatpush2.msra.mxu0 0.0
  %920 = vmatprep.subr.mxu0 0.0
  %921 = vmatpush2.msra.mxu0 0.0
  %922 = vmatprep.subr.mxu0 0.0
  %923 = vmatpush2.msra.mxu0 0.0
  %924 = vmatprep.subr.mxu0 0.0
  %925 = vmatpush2.msra.mxu0 0.0
  %926 = vmatprep.subr.mxu0 0.0
  %927 = vmatpush2.msra.mxu0 0.0
  %928 = vmatprep.subr.mxu0 0.0
  %929 = vmatpush2.msra.mxu0 0.0
  %930 = vmatprep.subr.mxu0 0.0
  %931 = vmatpush2.msra.mxu0 0.0
  %932 = vmatprep.subr.mxu0 0.0
  %933 = vmatpush2.msra.mxu0 0.0
  %934 = vmatprep.subr.mxu0 0.0
  %935 = vmatpush2.msra.mxu0 0.0
  %936 = vmatprep.subr.mxu0 0.0
  %937 = vmatpush2.msra.mxu0 0.0
  %938 = vmatprep.subr.mxu0 0.0
  %939 = vmatpush2.msra.mxu0 0.0
  %940 = vmatprep.subr.mxu0 0.0
  %941 = vmatpush2.msra.mxu0 0.0
  %942 = vmatprep.subr.mxu0 0.0
  %943 = vmatpush2.msra.mxu0 0.0
  %944 = vmatprep.subr.mxu0 0.0
  %945 = vmatpush2.msra.mxu0 0.0
  %946 = vmatprep.mubr.f32.mxu0 0.0
  %947 = vmatmul.mubr.f32.gmra.mxu0 %v877
  %v948 = vpop.f32.mrf.mxu0
  %v949 = vadd.f32 0.0, %v948
  %v950 = vpop.f32.mrf.mxu0
  %951 = vmatprep.mubr.f32.mxu0 0.0
  %952 = vmatmul.mubr.f32.gmra.mxu0 %v880
  %v953 = vpop.f32.mrf.mxu0
  %v954 = vadd.f32 0.0, %v953
  %v955 = vpop.f32.mrf.mxu0
  %956 = vdwg.mxu0
  %957 = vrot.lane.b32.xlu0 %v238, 96
  %v958 = vpop.permute.xlu0 %957
  %959 = vrot.lane.b32.xlu0 %v240, 96
  %v960 = vpop.permute.xlu0 %959
  %v964 = vsel %vm91, %v694, 0
  %v967 = vsel %vm91, %v695, 0
  %969 = vmatprep.subr.mxu0 0.0
  %970 = vmatpush1.msra.mxu0 0.0
  %971 = vmatprep.subr.mxu0 0.0
  %972 = vmatpush1.msra.mxu0 0.0
  %973 = vmatprep.subr.mxu0 0.0
  %974 = vmatpush1.msra.mxu0 0.0
  %975 = vmatprep.subr.mxu0 0.0
  %976 = vmatpush1.msra.mxu0 0.0
  %977 = vmatprep.subr.mxu0 0.0
  %978 = vmatpush1.msra.mxu0 0.0
  %979 = vmatprep.subr.mxu0 0.0
  %980 = vmatpush1.msra.mxu0 0.0
  %981 = vmatprep.subr.mxu0 0.0
  %982 = vmatpush1.msra.mxu0 0.0
  %983 = vmatprep.subr.mxu0 0.0
  %984 = vmatpush1.msra.mxu0 0.0
  %985 = vmatprep.subr.mxu0 0.0
  %986 = vmatpush1.msra.mxu0 0.0
  %987 = vmatprep.subr.mxu0 0.0
  %988 = vmatpush1.msra.mxu0 0.0
  %989 = vmatprep.subr.mxu0 0.0
  %990 = vmatpush1.msra.mxu0 0.0
  %991 = vmatprep.subr.mxu0 0.0
  %992 = vmatpush1.msra.mxu0 0.0
  %993 = vmatprep.subr.mxu0 0.0
  %994 = vmatpush1.msra.mxu0 0.0
  %995 = vmatprep.subr.mxu0 0.0
  %996 = vmatpush1.msra.mxu0 0.0
  %997 = vmatprep.subr.mxu0 0.0
  %998 = vmatpush1.msra.mxu0 %v960
  %999 = vmatprep.subr.mxu0 0.0
  %1000 = vmatpush1.msra.mxu0 %v958
  %1001 = vmatprep.subr.mxu0 0.0
  %1002 = vmatpush2.msra.mxu0 0.0
  %1003 = vmatprep.subr.mxu0 0.0
  %1004 = vmatpush2.msra.mxu0 0.0
  %1005 = vmatprep.subr.mxu0 0.0
  %1006 = vmatpush2.msra.mxu0 0.0
  %1007 = vmatprep.subr.mxu0 0.0
  %1008 = vmatpush2.msra.mxu0 0.0
  %1009 = vmatprep.subr.mxu0 0.0
  %1010 = vmatpush2.msra.mxu0 0.0
  %1011 = vmatprep.subr.mxu0 0.0
  %1012 = vmatpush2.msra.mxu0 0.0
  %1013 = vmatprep.subr.mxu0 0.0
  %1014 = vmatpush2.msra.mxu0 0.0
  %1015 = vmatprep.subr.mxu0 0.0
  %1016 = vmatpush2.msra.mxu0 0.0
  %1017 = vmatprep.subr.mxu0 0.0
  %1018 = vmatpush2.msra.mxu0 0.0
  %1019 = vmatprep.subr.mxu0 0.0
  %1020 = vmatpush2.msra.mxu0 0.0
  %1021 = vmatprep.subr.mxu0 0.0
  %1022 = vmatpush2.msra.mxu0 0.0
  %1023 = vmatprep.subr.mxu0 0.0
  %1024 = vmatpush2.msra.mxu0 0.0
  %1025 = vmatprep.subr.mxu0 0.0
  %1026 = vmatpush2.msra.mxu0 0.0
  %1027 = vmatprep.subr.mxu0 0.0
  %1028 = vmatpush2.msra.mxu0 0.0
  %1029 = vmatprep.subr.mxu0 0.0
  %1030 = vmatpush2.msra.mxu0 0.0
  %1031 = vmatprep.subr.mxu0 0.0
  %1032 = vmatpush2.msra.mxu0 0.0
  %1033 = vmatprep.mubr.f32.mxu0 0.0
  %1034 = vmatmul.mubr.f32.gmra.mxu0 %v964
  %v1035 = vpop.f32.mrf.mxu0
  %v1036 = vadd.f32 0.0, %v1035
  %v1037 = vpop.f32.mrf.mxu0
  %1038 = vmatprep.mubr.f32.mxu0 0.0
  %1039 = vmatmul.mubr.f32.gmra.mxu0 %v967
  %v1040 = vpop.f32.mrf.mxu0
  %v1041 = vadd.f32 0.0, %v1040
  %v1042 = vpop.f32.mrf.mxu0
  %1043 = vdwg.mxu0
  %1046 = vrot.lane.b32.xlu0 %v862, 4
  %v1047 = vpop.permute.xlu0 %1046
  %1048 = vrot.lane.b32.xlu0 %v867, 4
  %v1049 = vpop.permute.xlu0 %1048
  %1054 = vrot.lane.b32.xlu0 %v949, 8
  %v1055 = vpop.permute.xlu0 %1054
  %1056 = vrot.lane.b32.xlu0 %v954, 8
  %v1057 = vpop.permute.xlu0 %1056
  %1062 = vrot.lane.b32.xlu0 %v1036, 12
  %v1063 = vpop.permute.xlu0 %1062
  %1064 = vrot.lane.b32.xlu0 %v1041, 12
  %v1065 = vpop.permute.xlu0 %1064
  %v1068 = vsel %vm255, %v775, %v1047
  %v1069 = vsel %vm255, %v780, %v1049
  %vm1070 = vcmask 64512
  %v1071 = vsel %vm1070, %v1068, %v1055
  %v1072 = vsel %vm1070, %v1069, %v1057
  %vm1073 = vcmask 97280
  %v1074 = vsel %vm1073, %v1071, %v1063
  %v1075 = vsel %vm1073, %v1072, %v1065
  %v1076 = vld [vmem:[%s2 + $0x11] sm:$0xff]
  %v1077 = vld [vmem:[%s2 + $0x19] sm:$0xff]
  %v1079 = vsel %vm91, %v1074, 0
  %v1082 = vsel %vm91, %v1075, 0
  %1084 = vmatprep.subr.mxu0 0.0
  %1085 = vmatpush1.msra.mxu0 0.0
  %1086 = vmatprep.subr.mxu0 0.0
  %1087 = vmatpush1.msra.mxu0 0.0
  %1088 = vmatprep.subr.mxu0 0.0
  %1089 = vmatpush1.msra.mxu0 0.0
  %1090 = vmatprep.subr.mxu0 0.0
  %1091 = vmatpush1.msra.mxu0 0.0
  %1092 = vmatprep.subr.mxu0 0.0
  %1093 = vmatpush1.msra.mxu0 0.0
  %1094 = vmatprep.subr.mxu0 0.0
  %1095 = vmatpush1.msra.mxu0 0.0
  %1096 = vmatprep.subr.mxu0 0.0
  %1097 = vmatpush1.msra.mxu0 0.0
  %1098 = vmatprep.subr.mxu0 0.0
  %1099 = vmatpush1.msra.mxu0 0.0
  %1100 = vmatprep.subr.mxu0 0.0
  %1101 = vmatpush1.msra.mxu0 0.0
  %1102 = vmatprep.subr.mxu0 0.0
  %1103 = vmatpush1.msra.mxu0 0.0
  %1104 = vmatprep.subr.mxu0 0.0
  %1105 = vmatpush1.msra.mxu0 0.0
  %1106 = vmatprep.subr.mxu0 0.0
  %1107 = vmatpush1.msra.mxu0 0.0
  %1108 = vmatprep.subr.mxu0 0.0
  %1109 = vmatpush1.msra.mxu0 0.0
  %1110 = vmatprep.subr.mxu0 0.0
  %1111 = vmatpush1.msra.mxu0 0.0
  %1112 = vmatprep.subr.mxu0 0.0
  %1113 = vmatpush1.msra.mxu0 %v1077
  %1114 = vmatprep.subr.mxu0 0.0
  %1115 = vmatpush1.msra.mxu0 %v1076
  %1116 = vmatprep.subr.mxu0 0.0
  %1117 = vmatpush2.msra.mxu0 0.0
  %1118 = vmatprep.subr.mxu0 0.0
  %1119 = vmatpush2.msra.mxu0 0.0
  %1120 = vmatprep.subr.mxu0 0.0
  %1121 = vmatpush2.msra.mxu0 0.0
  %1122 = vmatprep.subr.mxu0 0.0
  %1123 = vmatpush2.msra.mxu0 0.0
  %1124 = vmatprep.subr.mxu0 0.0
  %1125 = vmatpush2.msra.mxu0 0.0
  %1126 = vmatprep.subr.mxu0 0.0
  %1127 = vmatpush2.msra.mxu0 0.0
  %1128 = vmatprep.subr.mxu0 0.0
  %1129 = vmatpush2.msra.mxu0 0.0
  %1130 = vmatprep.subr.mxu0 0.0
  %1131 = vmatpush2.msra.mxu0 0.0
  %1132 = vmatprep.subr.mxu0 0.0
  %1133 = vmatpush2.msra.mxu0 0.0
  %1134 = vmatprep.subr.mxu0 0.0
  %1135 = vmatpush2.msra.mxu0 0.0
  %1136 = vmatprep.subr.mxu0 0.0
  %1137 = vmatpush2.msra.mxu0 0.0
  %1138 = vmatprep.subr.mxu0 0.0
  %1139 = vmatpush2.msra.mxu0 0.0
  %1140 = vmatprep.subr.mxu0 0.0
  %1141 = vmatpush2.msra.mxu0 0.0
  %1142 = vmatprep.subr.mxu0 0.0
  %1143 = vmatpush2.msra.mxu0 0.0
  %1144 = vmatprep.subr.mxu0 0.0
  %1145 = vmatpush2.msra.mxu0 0.0
  %1146 = vmatprep.subr.mxu0 0.0
  %1147 = vmatpush2.msra.mxu0 0.0
  %1148 = vmatprep.mubr.f32.mxu0 0.0
  %1149 = vmatmul.mubr.f32.gmra.mxu0 %v1079
  %v1150 = vpop.f32.mrf.mxu0
  %v1151 = vadd.f32 0.0, %v1150
  %v1152 = vpop.f32.mrf.mxu0
  %1153 = vmatprep.mubr.f32.mxu0 0.0
  %1154 = vmatmul.mubr.f32.gmra.mxu0 %v1082
  %v1155 = vpop.f32.mrf.mxu0
  %v1156 = vadd.f32 0.0, %v1155
  %v1157 = vpop.f32.mrf.mxu0
  %1158 = vdwg.mxu0
  %v1159 = vadd.f32 %v80, %v1151
  %v1160 = vadd.f32 %v81, %v1156
  %v1161 = vlaneseq
  %v1162 = vshrl.u32 %v1161, 7
  %v1163 = vsub.s32 7, %v1162
  %v1164 = vrot.slane %v17, %v1163
  %v1165 = vadd.f32 %v1159, %v1164
  %v1166 = vadd.f32 %v1160, %v1164
  %v1167 = vsel %vm91, %v1165, 0.0
  %1168 = vadd.xlane.f32.xlu0 %v1167
  %v1169 = vpop.xlane.xlu0 %1168
  %v1170 = vsel %vm91, %v1166, 0.0
  %1171 = vadd.xlane.f32.xlu0 %v1170
  %v1172 = vpop.xlane.xlu0 %1171
  %v1173 = vmul.f32 %v1169, %v98
  %v1174 = vmul.f32 %v1172, %v98
  %v1175 = vmul.f32 %v1165, %v1165
  %v1176 = vmul.f32 %v1166, %v1166
  %v1177 = vsel %vm91, %v1175, 0.0
  %1178 = vadd.xlane.f32.xlu0 %v1177
  %v1179 = vpop.xlane.xlu0 %1178
  %v1180 = vsel %vm91, %v1176, 0.0
  %1181 = vadd.xlane.f32.xlu0 %v1180
  %v1182 = vpop.xlane.xlu0 %1181
  %v1183 = vmul.f32 %v1179, %v98
  %v1184 = vmul.f32 %v1182, %v98
  %v1185 = vmul.f32 %v1173, %v1173
  %v1186 = vmul.f32 %v1174, %v1174
  %v1187 = vsub.f32 %v1183, %v1185
  %v1188 = vsub.f32 %v1184, %v1186
  %v1189 = vsub.f32 %v1165, %v1173
  %v1190 = vsub.f32 %v1166, %v1174
  %v1191 = vadd.f32 %v1187, 1e-05
  %v1192 = vadd.f32 %v1188, 1e-05
  %v1193 = vrsqrt.pop %v1191
  %v1194 = vrsqrt.pop %v1192
  %v1195 = vmul.f32 %v1189, %v1193
  %v1196 = vmul.f32 %v1190, %v1194
  %v1197 = vlaneseq
  %v1198 = vshrl.u32 %v1197, 7
  %v1199 = vsub.s32 5, %v1198
  %v1200 = vrot.slane %v17, %v1199
  %v1201 = vmul.f32 %v1195, %v1200
  %v1202 = vmul.f32 %v1196, %v1200
  %v1203 = vlaneseq
  %v1204 = vshrl.u32 %v1203, 7
  %v1205 = vsub.s32 6, %v1204
  %v1206 = vrot.slane %v17, %v1205
  %v1207 = vadd.f32 %v1201, %v1206
  %v1208 = vadd.f32 %v1202, %v1206
  %v1209 = vld [vmem:[%s2 + $0x21] sm:$0xff]
  %v1210 = vld [vmem:[%s2 + $0x29] sm:$0xff]
  %v1211 = vld [vmem:[%s2 + $0x31] sm:$0x1]
  %v1212 = vlaneseq
  %v1213 = vshrl.u32 %v1212, 7
  %v1214 = vsub.s32 0, %v1213
  %v1215 = vrot.slane %v1211, %v1214
  %v1217 = vsel %vm91, %v1207, 0
  %v1220 = vsel %vm91, %v1208, 0
  %1222 = vmatprep.subr.mxu0 0.0
  %1223 = vmatpush1.msra.mxu0 0.0
  %1224 = vmatprep.subr.mxu0 0.0
  %1225 = vmatpush1.msra.mxu0 0.0
  %1226 = vmatprep.subr.mxu0 0.0
  %1227 = vmatpush1.msra.mxu0 0.0
  %1228 = vmatprep.subr.mxu0 0.0
  %1229 = vmatpush1.msra.mxu0 0.0
  %1230 = vmatprep.subr.mxu0 0.0
  %1231 = vmatpush1.msra.mxu0 0.0
  %1232 = vmatprep.subr.mxu0 0.0
  %1233 = vmatpush1.msra.mxu0 0.0
  %1234 = vmatprep.subr.mxu0 0.0
  %1235 = vmatpush1.msra.mxu0 0.0
  %1236 = vmatprep.subr.mxu0 0.0
  %1237 = vmatpush1.msra.mxu0 0.0
  %1238 = vmatprep.subr.mxu0 0.0
  %1239 = vmatpush1.msra.mxu0 0.0
  %1240 = vmatprep.subr.mxu0 0.0
  %1241 = vmatpush1.msra.mxu0 0.0
  %1242 = vmatprep.subr.mxu0 0.0
  %1243 = vmatpush1.msra.mxu0 0.0
  %1244 = vmatprep.subr.mxu0 0.0
  %1245 = vmatpush1.msra.mxu0 0.0
  %1246 = vmatprep.subr.mxu0 0.0
  %1247 = vmatpush1.msra.mxu0 0.0
  %1248 = vmatprep.subr.mxu0 0.0
  %1249 = vmatpush1.msra.mxu0 0.0
  %1250 = vmatprep.subr.mxu0 0.0
  %1251 = vmatpush1.msra.mxu0 %v1210
  %1252 = vmatprep.subr.mxu0 0.0
  %1253 = vmatpush1.msra.mxu0 %v1209
  %1254 = vmatprep.subr.mxu0 0.0
  %1255 = vmatpush2.msra.mxu0 0.0
  %1256 = vmatprep.subr.mxu0 0.0
  %1257 = vmatpush2.msra.mxu0 0.0
  %1258 = vmatprep.subr.mxu0 0.0
  %1259 = vmatpush2.msra.mxu0 0.0
  %1260 = vmatprep.subr.mxu0 0.0
  %1261 = vmatpush2.msra.mxu0 0.0
  %1262 = vmatprep.subr.mxu0 0.0
  %1263 = vmatpush2.msra.mxu0 0.0
  %1264 = vmatprep.subr.mxu0 0.0
  %1265 = vmatpush2.msra.mxu0 0.0
  %1266 = vmatprep.subr.mxu0 0.0
  %1267 = vmatpush2.msra.mxu0 0.0
  %1268 = vmatprep.subr.mxu0 0.0
  %1269 = vmatpush2.msra.mxu0 0.0
  %1270 = vmatprep.subr.mxu0 0.0
  %1271 = vmatpush2.msra.mxu0 0.0
  %1272 = vmatprep.subr.mxu0 0.0
  %1273 = vmatpush2.msra.mxu0 0.0
  %1274 = vmatprep.subr.mxu0 0.0
  %1275 = vmatpush2.msra.mxu0 0.0
  %1276 = vmatprep.subr.mxu0 0.0
  %1277 = vmatpush2.msra.mxu0 0.0
  %1278 = vmatprep.subr.mxu0 0.0
  %1279 = vmatpush2.msra.mxu0 0.0
  %1280 = vmatprep.subr.mxu0 0.0
  %1281 = vmatpush2.msra.mxu0 0.0
  %1282 = vmatprep.subr.mxu0 0.0
  %1283 = vmatpush2.msra.mxu0 0.0
  %1284 = vmatprep.subr.mxu0 0.0
  %1285 = vmatpush2.msra.mxu0 0.0
  %1286 = vmatprep.mubr.f32.mxu0 0.0
  %1287 = vmatmul.mubr.f32.gmra.mxu0 %v1217
  %v1288 = vpop.f32.mrf.mxu0
  %v1289 = vadd.f32 %v1215, %v1288
  %v1290 = vpop.f32.mrf.mxu0
  %1291 = vmatprep.mubr.f32.mxu0 0.0
  %1292 = vmatmul.mubr.f32.gmra.mxu0 %v1220
  %v1293 = vpop.f32.mrf.mxu0
  %v1294 = vadd.f32 %v1215, %v1293
  %v1295 = vpop.f32.mrf.mxu0
  %1296 = vdwg.mxu0
  %v1297 = vmax.f32 %v1289, 0.0
  %v1298 = vmax.f32 %v1294, 0.0
  %v1299 = vld [vmem:[%s2 + $0x32] sm:$0xff]
  %v1300 = vld [vmem:[%s2 + $0x3a] sm:$0xff]
  %v1301 = vld [vmem:[%s2 + $0x42] sm:$0xff]
  %v1302 = vld [vmem:[%s2 + $0x4a] sm:$0xff]
  %v1303 = vld [vmem:[%s2 + $0x52] sm:$0xff]
  %v1304 = vld [vmem:[%s2 + $0x5a] sm:$0xff]
  %v1305 = vld [vmem:[%s2 + $0x62] sm:$0xff]
  %v1306 = vld [vmem:[%s2 + $0x6a] sm:$0xff]
  %v1307 = vlaneseq
  %v1308 = vshrl.u32 %v1307, 7
  %v1309 = vsub.s32 0, %v1308
  %v1310 = vrot.slane %v18, %v1309
  %vm1311 = vcmask 523264
  %v1313 = vsel %vm1311, %v1297, 0
  %v1316 = vsel %vm1311, %v1298, 0
  %1318 = vmatprep.subr.mxu0 0.0
  %1319 = vmatpush1.msra.mxu0 0.0
  %1320 = vmatprep.subr.mxu0 0.0
  %1321 = vmatpush1.msra.mxu0 0.0
  %1322 = vmatprep.subr.mxu0 0.0
  %1323 = vmatpush1.msra.mxu0 0.0
  %1324 = vmatprep.subr.mxu0 0.0
  %1325 = vmatpush1.msra.mxu0 0.0
  %1326 = vmatprep.subr.mxu0 0.0
  %1327 = vmatpush1.msra.mxu0 0.0
  %1328 = vmatprep.subr.mxu0 0.0
  %1329 = vmatpush1.msra.mxu0 0.0
  %1330 = vmatprep.subr.mxu0 0.0
  %1331 = vmatpush1.msra.mxu0 0.0
  %1332 = vmatprep.subr.mxu0 0.0
  %1333 = vmatpush1.msra.mxu0 0.0
  %1334 = vmatprep.subr.mxu0 0.0
  %1335 = vmatpush1.msra.mxu0 %v1306
  %1336 = vmatprep.subr.mxu0 0.0
  %1337 = vmatpush1.msra.mxu0 %v1305
  %1338 = vmatprep.subr.mxu0 0.0
  %1339 = vmatpush1.msra.mxu0 %v1304
  %1340 = vmatprep.subr.mxu0 0.0
  %1341 = vmatpush1.msra.mxu0 %v1303
  %1342 = vmatprep.subr.mxu0 0.0
  %1343 = vmatpush1.msra.mxu0 %v1302
  %1344 = vmatprep.subr.mxu0 0.0
  %1345 = vmatpush1.msra.mxu0 %v1301
  %1346 = vmatprep.subr.mxu0 0.0
  %1347 = vmatpush1.msra.mxu0 %v1300
  %1348 = vmatprep.subr.mxu0 0.0
  %1349 = vmatpush1.msra.mxu0 %v1299
  %1350 = vmatprep.subr.mxu0 0.0
  %1351 = vmatpush2.msra.mxu0 0.0
  %1352 = vmatprep.subr.mxu0 0.0
  %1353 = vmatpush2.msra.mxu0 0.0
  %1354 = vmatprep.subr.mxu0 0.0
  %1355 = vmatpush2.msra.mxu0 0.0
  %1356 = vmatprep.subr.mxu0 0.0
  %1357 = vmatpush2.msra.mxu0 0.0
  %1358 = vmatprep.subr.mxu0 0.0
  %1359 = vmatpush2.msra.mxu0 0.0
  %1360 = vmatprep.subr.mxu0 0.0
  %1361 = vmatpush2.msra.mxu0 0.0
  %1362 = vmatprep.subr.mxu0 0.0
  %1363 = vmatpush2.msra.mxu0 0.0
  %1364 = vmatprep.subr.mxu0 0.0
  %1365 = vmatpush2.msra.mxu0 0.0
  %1366 = vmatprep.subr.mxu0 0.0
  %1367 = vmatpush2.msra.mxu0 0.0
  %1368 = vmatprep.subr.mxu0 0.0
  %1369 = vmatpush2.msra.mxu0 0.0
  %1370 = vmatprep.subr.mxu0 0.0
  %1371 = vmatpush2.msra.mxu0 0.0
  %1372 = vmatprep.subr.mxu0 0.0
  %1373 = vmatpush2.msra.mxu0 0.0
  %1374 = vmatprep.subr.mxu0 0.0
  %1375 = vmatpush2.msra.mxu0 0.0
  %1376 = vmatprep.subr.mxu0 0.0
  %1377 = vmatpush2.msra.mxu0 0.0
  %1378 = vmatprep.subr.mxu0 0.0
  %1379 = vmatpush2.msra.mxu0 0.0
  %1380 = vmatprep.subr.mxu0 0.0
  %1381 = vmatpush2.msra.mxu0 0.0
  %1382 = vmatprep.mubr.f32.mxu0 0.0
  %1383 = vmatmul.mubr.f32.gmra.mxu0 %v1313
  %v1384 = vpop.f32.mrf.mxu0
  %v1385 = vadd.f32 %v1310, %v1384
  %v1386 = vpop.f32.mrf.mxu0
  %1387 = vmatprep.mubr.f32.mxu0 0.0
  %1388 = vmatmul.mubr.f32.gmra.mxu0 %v1316
  %v1389 = vpop.f32.mrf.mxu0
  %v1390 = vadd.f32 %v1310, %v1389
  %v1391 = vpop.f32.mrf.mxu0
  %1392 = vdwg.mxu0
  %v1393 = vadd.f32 %v1165, %v1385
  %v1394 = vadd.f32 %v1166, %v1390
  %v1395 = vsel %vm91, %v1393, 0.0
  %1396 = vadd.xlane.f32.xlu0 %v1395
  %v1397 = vpop.xlane.xlu0 %1396
  %v1398 = vsel %vm91, %v1394, 0.0
  %1399 = vadd.xlane.f32.xlu0 %v1398
  %v1400 = vpop.xlane.xlu0 %1399
  %v1401 = vmul.f32 %v1397, %v98
  %v1402 = vmul.f32 %v1400, %v98
  %v1403 = vmul.f32 %v1393, %v1393
  %v1404 = vmul.f32 %v1394, %v1394
  %v1405 = vsel %vm91, %v1403, 0.0
  %1406 = vadd.xlane.f32.xlu0 %v1405
  %v1407 = vpop.xlane.xlu0 %1406
  %v1408 = vsel %vm91, %v1404, 0.0
  %1409 = vadd.xlane.f32.xlu0 %v1408
  %v1410 = vpop.xlane.xlu0 %1409
  %v1411 = vmul.f32 %v1407, %v98
  %v1412 = vmul.f32 %v1410, %v98
  %v1413 = vmul.f32 %v1401, %v1401
  %v1414 = vmul.f32 %v1402, %v1402
  %v1415 = vsub.f32 %v1411, %v1413
  %v1416 = vsub.f32 %v1412, %v1414
  %v1417 = vsub.f32 %v1393, %v1401
  %v1418 = vsub.f32 %v1394, %v1402
  %v1419 = vadd.f32 %v1415, 1e-05
  %v1420 = vadd.f32 %v1416, 1e-05
  %v1421 = vrsqrt.pop %v1419
  %v1422 = vrsqrt.pop %v1420
  %v1423 = vmul.f32 %v1417, %v1421
  %v1424 = vmul.f32 %v1418, %v1422
  %v1425 = vlaneseq
  %v1426 = vshrl.u32 %v1425, 7
  %v1427 = vsub.s32 1, %v1426
  %v1428 = vrot.slane %v18, %v1427
  %v1429 = vmul.f32 %v1423, %v1428
  %v1430 = vmul.f32 %v1424, %v1428
  %v1431 = vlaneseq
  %v1432 = vshrl.u32 %v1431, 7
  %v1433 = vsub.s32 2, %v1432
  %v1434 = vrot.slane %v18, %v1433
  %v1435 = vadd.f32 %v1429, %v1434
  %v1436 = vadd.f32 %v1430, %v1434
  %v1437 = vld [vmem:[%s2 + $0x72] sm:$0xff]
  %v1438 = vld [vmem:[%s2 + $0x7a] sm:$0xff]
  %v1439 = vld [vmem:[%s2 + $0x82] sm:$0x1]
  %v1440 = vlaneseq
  %v1441 = vshrl.u32 %v1440, 7
  %v1442 = vsub.s32 0, %v1441
  %v1443 = vrot.slane %v1439, %v1442
  %v1445 = vsel %vm91, %v1435, 0
  %v1448 = vsel %vm91, %v1436, 0
  %1450 = vmatprep.subr.mxu0 0.0
  %1451 = vmatpush1.msra.mxu0 0.0
  %1452 = vmatprep.subr.mxu0 0.0
  %1453 = vmatpush1.msra.mxu0 0.0
  %1454 = vmatprep.subr.mxu0 0.0
  %1455 = vmatpush1.msra.mxu0 0.0
  %1456 = vmatprep.subr.mxu0 0.0
  %1457 = vmatpush1.msra.mxu0 0.0
  %1458 = vmatprep.subr.mxu0 0.0
  %1459 = vmatpush1.msra.mxu0 0.0
  %1460 = vmatprep.subr.mxu0 0.0
  %1461 = vmatpush1.msra.mxu0 0.0
  %1462 = vmatprep.subr.mxu0 0.0
  %1463 = vmatpush1.msra.mxu0 0.0
  %1464 = vmatprep.subr.mxu0 0.0
  %1465 = vmatpush1.msra.mxu0 0.0
  %1466 = vmatprep.subr.mxu0 0.0
  %1467 = vmatpush1.msra.mxu0 0.0
  %1468 = vmatprep.subr.mxu0 0.0
  %1469 = vmatpush1.msra.mxu0 0.0
  %1470 = vmatprep.subr.mxu0 0.0
  %1471 = vmatpush1.msra.mxu0 0.0
  %1472 = vmatprep.subr.mxu0 0.0
  %1473 = vmatpush1.msra.mxu0 0.0
  %1474 = vmatprep.subr.mxu0 0.0
  %1475 = vmatpush1.msra.mxu0 0.0
  %1476 = vmatprep.subr.mxu0 0.0
  %1477 = vmatpush1.msra.mxu0 0.0
  %1478 = vmatprep.subr.mxu0 0.0
  %1479 = vmatpush1.msra.mxu0 %v1438
  %1480 = vmatprep.subr.mxu0 0.0
  %1481 = vmatpush1.msra.mxu0 %v1437
  %1482 = vmatprep.subr.mxu0 0.0
  %1483 = vmatpush2.msra.mxu0 0.0
  %1484 = vmatprep.subr.mxu0 0.0
  %1485 = vmatpush2.msra.mxu0 0.0
  %1486 = vmatprep.subr.mxu0 0.0
  %1487 = vmatpush2.msra.mxu0 0.0
  %1488 = vmatprep.subr.mxu0 0.0
  %1489 = vmatpush2.msra.mxu0 0.0
  %1490 = vmatprep.subr.mxu0 0.0
  %1491 = vmatpush2.msra.mxu0 0.0
  %1492 = vmatprep.subr.mxu0 0.0
  %1493 = vmatpush2.msra.mxu0 0.0
  %1494 = vmatprep.subr.mxu0 0.0
  %1495 = vmatpush2.msra.mxu0 0.0
  %1496 = vmatprep.subr.mxu0 0.0
  %1497 = vmatpush2.msra.mxu0 0.0
  %1498 = vmatprep.subr.mxu0 0.0
  %1499 = vmatpush2.msra.mxu0 0.0
  %1500 = vmatprep.subr.mxu0 0.0
  %1501 = vmatpush2.msra.mxu0 0.0
  %1502 = vmatprep.subr.mxu0 0.0
  %1503 = vmatpush2.msra.mxu0 0.0
  %1504 = vmatprep.subr.mxu0 0.0
  %1505 = vmatpush2.msra.mxu0 0.0
  %1506 = vmatprep.subr.mxu0 0.0
  %1507 = vmatpush2.msra.mxu0 0.0
  %1508 = vmatprep.subr.mxu0 0.0
  %1509 = vmatpush2.msra.mxu0 0.0
  %1510 = vmatprep.subr.mxu0 0.0
  %1511 = vmatpush2.msra.mxu0 0.0
  %1512 = vmatprep.subr.mxu0 0.0
  %1513 = vmatpush2.msra.mxu0 0.0
  %1514 = vmatprep.mubr.f32.mxu0 0.0
  %1515 = vmatmul.mubr.f32.gmra.mxu0 %v1445
  %v1516 = vpop.f32.mrf.mxu0
  %v1517 = vadd.f32 %v1443, %v1516
  %v1518 = vpop.f32.mrf.mxu0
  %1519 = vmatprep.mubr.f32.mxu0 0.0
  %1520 = vmatmul.mubr.f32.gmra.mxu0 %v1448
  %v1521 = vpop.f32.mrf.mxu0
  %v1522 = vadd.f32 %v1443, %v1521
  %v1523 = vpop.f32.mrf.mxu0
  %1524 = vdwg.mxu0
  %1527 = vrot.lane.b32.xlu0 %v1517, 124
  %v1528 = vpop.permute.xlu0 %1527
  %1529 = vrot.lane.b32.xlu0 %v1522, 124
  %v1530 = vpop.permute.xlu0 %1529
  %1533 = vrot.lane.b32.xlu0 %v1517, 120
  %v1534 = vpop.permute.xlu0 %1533
  %1535 = vrot.lane.b32.xlu0 %v1522, 120
  %v1536 = vpop.permute.xlu0 %1535
  %1539 = vrot.lane.b32.xlu0 %v1517, 116
  %v1540 = vpop.permute.xlu0 %1539
  %1541 = vrot.lane.b32.xlu0 %v1522, 116
  %v1542 = vpop.permute.xlu0 %1541
  %v1545 = vmul.f32 %v1517, 0.5
  %v1546 = vmul.f32 %v1522, 0.5
  %v1547 = vmul.f32 %v1528, 0.5
  %v1548 = vmul.f32 %v1530, 0.5
  %v1549 = vmul.f32 %v1534, 0.5
  %v1550 = vmul.f32 %v1536, 0.5
  %v1551 = vmul.f32 %v1540, 0.5
  %v1552 = vmul.f32 %v1542, 0.5
  %1553 = vrot.lane.b32.xlu0 %v1517, 112
  %v1554 = vpop.permute.xlu0 %1553
  %1555 = vrot.lane.b32.xlu0 %v1522, 112
  %v1556 = vpop.permute.xlu0 %1555
  %v1558 = vsel %vm255, %v1545, 0
  %v1561 = vsel %vm255, %v1546, 0
  %v1563 = vsel %vm255, %v1554, 0
  %v1565 = vsel %vm255, %v1556, 0
  %1567 = vmatprep.subr.mxu0 0.0
  %1568 = vmatpush1.xpose.msra.mxu0 0.0
  %1569 = vmatprep.subr.mxu0 0.0
  %1570 = vmatpush1.xpose.msra.mxu0 0.0
  %1571 = vmatprep.subr.mxu0 0.0
  %1572 = vmatpush1.xpose.msra.mxu0 0.0
  %1573 = vmatprep.subr.mxu0 0.0
  %1574 = vmatpush1.xpose.msra.mxu0 0.0
  %1575 = vmatprep.subr.mxu0 0.0
  %1576 = vmatpush1.xpose.msra.mxu0 0.0
  %1577 = vmatprep.subr.mxu0 0.0
  %1578 = vmatpush1.xpose.msra.mxu0 0.0
  %1579 = vmatprep.subr.mxu0 0.0
  %1580 = vmatpush1.xpose.msra.mxu0 0.0
  %1581 = vmatprep.subr.mxu0 0.0
  %1582 = vmatpush1.xpose.msra.mxu0 0.0
  %1583 = vmatprep.subr.mxu0 0.0
  %1584 = vmatpush1.xpose.msra.mxu0 0.0
  %1585 = vmatprep.subr.mxu0 0.0
  %1586 = vmatpush1.xpose.msra.mxu0 0.0
  %1587 = vmatprep.subr.mxu0 0.0
  %1588 = vmatpush1.xpose.msra.mxu0 0.0
  %1589 = vmatprep.subr.mxu0 0.0
  %1590 = vmatpush1.xpose.msra.mxu0 0.0
  %1591 = vmatprep.subr.mxu0 0.0
  %1592 = vmatpush1.xpose.msra.mxu0 0.0
  %1593 = vmatprep.subr.mxu0 0.0
  %1594 = vmatpush1.xpose.msra.mxu0 0.0
  %1595 = vmatprep.subr.mxu0 0.0
  %1596 = vmatpush1.xpose.msra.mxu0 %v1565
  %1597 = vmatprep.subr.mxu0 0.0
  %1598 = vmatpush1.xpose.msra.mxu0 %v1563
  %1599 = vmatprep.subr.mxu0 0.0
  %1600 = vmatpush2.xpose.msra.mxu0 0.0
  %1601 = vmatprep.subr.mxu0 0.0
  %1602 = vmatpush2.xpose.msra.mxu0 0.0
  %1603 = vmatprep.subr.mxu0 0.0
  %1604 = vmatpush2.xpose.msra.mxu0 0.0
  %1605 = vmatprep.subr.mxu0 0.0
  %1606 = vmatpush2.xpose.msra.mxu0 0.0
  %1607 = vmatprep.subr.mxu0 0.0
  %1608 = vmatpush2.xpose.msra.mxu0 0.0
  %1609 = vmatprep.subr.mxu0 0.0
  %1610 = vmatpush2.xpose.msra.mxu0 0.0
  %1611 = vmatprep.subr.mxu0 0.0
  %1612 = vmatpush2.xpose.msra.mxu0 0.0
  %1613 = vmatprep.subr.mxu0 0.0
  %1614 = vmatpush2.xpose.msra.mxu0 0.0
  %1615 = vmatprep.subr.mxu0 0.0
  %1616 = vmatpush2.xpose.msra.mxu0 0.0
  %1617 = vmatprep.subr.mxu0 0.0
  %1618 = vmatpush2.xpose.msra.mxu0 0.0
  %1619 = vmatprep.subr.mxu0 0.0
  %1620 = vmatpush2.xpose.msra.mxu0 0.0
  %1621 = vmatprep.subr.mxu0 0.0
  %1622 = vmatpush2.xpose.msra.mxu0 0.0
  %1623 = vmatprep.subr.mxu0 0.0
  %1624 = vmatpush2.xpose.msra.mxu0 0.0
  %1625 = vmatprep.subr.mxu0 0.0
  %1626 = vmatpush2.xpose.msra.mxu0 0.0
  %1627 = vmatprep.subr.mxu0 0.0
  %1628 = vmatpush2.xpose.msra.mxu0 0.0
  %1629 = vmatprep.subr.mxu0 0.0
  %1630 = vmatpush2.xpose.msra.mxu0 0.0
  %1631 = vmatprep.mubr.f32.mxu0 0.0
  %1632 = vmatmul.mubr.f32.gmra.mxu0 %v1558
  %v1633 = vpop.f32.mrf.mxu0
  %v1634 = vadd.f32 %v89, %v1633
  %v1635 = vpop.f32.mrf.mxu0
  %1636 = vmatprep.mubr.f32.mxu0 0.0
  %1637 = vmatmul.mubr.f32.gmra.mxu0 %v1561
  %v1638 = vpop.f32.mrf.mxu0
  %v1639 = vadd.f32 %v90, %v1638
  %v1640 = vpop.f32.mrf.mxu0
  %1641 = vdwg.mxu0
  %1642 = vrot.lane.b32.xlu0 %v1528, 112
  %v1643 = vpop.permute.xlu0 %1642
  %1644 = vrot.lane.b32.xlu0 %v1530, 112
  %v1645 = vpop.permute.xlu0 %1644
  %v1647 = vsel %vm255, %v1547, 0
  %v1650 = vsel %vm255, %v1548, 0
  %v1652 = vsel %vm255, %v1643, 0
  %v1654 = vsel %vm255, %v1645, 0
  %1656 = vmatprep.subr.mxu0 0.0
  %1657 = vmatpush1.xpose.msra.mxu0 0.0
  %1658 = vmatprep.subr.mxu0 0.0
  %1659 = vmatpush1.xpose.msra.mxu0 0.0
  %1660 = vmatprep.subr.mxu0 0.0
  %1661 = vmatpush1.xpose.msra.mxu0 0.0
  %1662 = vmatprep.subr.mxu0 0.0
  %1663 = vmatpush1.xpose.msra.mxu0 0.0
  %1664 = vmatprep.subr.mxu0 0.0
  %1665 = vmatpush1.xpose.msra.mxu0 0.0
  %1666 = vmatprep.subr.mxu0 0.0
  %1667 = vmatpush1.xpose.msra.mxu0 0.0
  %1668 = vmatprep.subr.mxu0 0.0
  %1669 = vmatpush1.xpose.msra.mxu0 0.0
  %1670 = vmatprep.subr.mxu0 0.0
  %1671 = vmatpush1.xpose.msra.mxu0 0.0
  %1672 = vmatprep.subr.mxu0 0.0
  %1673 = vmatpush1.xpose.msra.mxu0 0.0
  %1674 = vmatprep.subr.mxu0 0.0
  %1675 = vmatpush1.xpose.msra.mxu0 0.0
  %1676 = vmatprep.subr.mxu0 0.0
  %1677 = vmatpush1.xpose.msra.mxu0 0.0
  %1678 = vmatprep.subr.mxu0 0.0
  %1679 = vmatpush1.xpose.msra.mxu0 0.0
  %1680 = vmatprep.subr.mxu0 0.0
  %1681 = vmatpush1.xpose.msra.mxu0 0.0
  %1682 = vmatprep.subr.mxu0 0.0
  %1683 = vmatpush1.xpose.msra.mxu0 0.0
  %1684 = vmatprep.subr.mxu0 0.0
  %1685 = vmatpush1.xpose.msra.mxu0 %v1654
  %1686 = vmatprep.subr.mxu0 0.0
  %1687 = vmatpush1.xpose.msra.mxu0 %v1652
  %1688 = vmatprep.subr.mxu0 0.0
  %1689 = vmatpush2.xpose.msra.mxu0 0.0
  %1690 = vmatprep.subr.mxu0 0.0
  %1691 = vmatpush2.xpose.msra.mxu0 0.0
  %1692 = vmatprep.subr.mxu0 0.0
  %1693 = vmatpush2.xpose.msra.mxu0 0.0
  %1694 = vmatprep.subr.mxu0 0.0
  %1695 = vmatpush2.xpose.msra.mxu0 0.0
  %1696 = vmatprep.subr.mxu0 0.0
  %1697 = vmatpush2.xpose.msra.mxu0 0.0
  %1698 = vmatprep.subr.mxu0 0.0
  %1699 = vmatpush2.xpose.msra.mxu0 0.0
  %1700 = vmatprep.subr.mxu0 0.0
  %1701 = vmatpush2.xpose.msra.mxu0 0.0
  %1702 = vmatprep.subr.mxu0 0.0
  %1703 = vmatpush2.xpose.msra.mxu0 0.0
  %1704 = vmatprep.subr.mxu0 0.0
  %1705 = vmatpush2.xpose.msra.mxu0 0.0
  %1706 = vmatprep.subr.mxu0 0.0
  %1707 = vmatpush2.xpose.msra.mxu0 0.0
  %1708 = vmatprep.subr.mxu0 0.0
  %1709 = vmatpush2.xpose.msra.mxu0 0.0
  %1710 = vmatprep.subr.mxu0 0.0
  %1711 = vmatpush2.xpose.msra.mxu0 0.0
  %1712 = vmatprep.subr.mxu0 0.0
  %1713 = vmatpush2.xpose.msra.mxu0 0.0
  %1714 = vmatprep.subr.mxu0 0.0
  %1715 = vmatpush2.xpose.msra.mxu0 0.0
  %1716 = vmatprep.subr.mxu0 0.0
  %1717 = vmatpush2.xpose.msra.mxu0 0.0
  %1718 = vmatprep.subr.mxu0 0.0
  %1719 = vmatpush2.xpose.msra.mxu0 0.0
  %1720 = vmatprep.mubr.f32.mxu0 0.0
  %1721 = vmatmul.mubr.f32.gmra.mxu0 %v1647
  %v1722 = vpop.f32.mrf.mxu0
  %v1723 = vadd.f32 %v89, %v1722
  %v1724 = vpop.f32.mrf.mxu0
  %1725 = vmatprep.mubr.f32.mxu0 0.0
  %1726 = vmatmul.mubr.f32.gmra.mxu0 %v1650
  %v1727 = vpop.f32.mrf.mxu0
  %v1728 = vadd.f32 %v90, %v1727
  %v1729 = vpop.f32.mrf.mxu0
  %1730 = vdwg.mxu0
  %1731 = vrot.lane.b32.xlu0 %v1534, 112
  %v1732 = vpop.permute.xlu0 %1731
  %1733 = vrot.lane.b32.xlu0 %v1536, 112
  %v1734 = vpop.permute.xlu0 %1733
  %v1736 = vsel %vm255, %v1549, 0
  %v1739 = vsel %vm255, %v1550, 0
  %v1741 = vsel %vm255, %v1732, 0
  %v1743 = vsel %vm255, %v1734, 0
  %1745 = vmatprep.subr.mxu0 0.0
  %1746 = vmatpush1.xpose.msra.mxu0 0.0
  %1747 = vmatprep.subr.mxu0 0.0
  %1748 = vmatpush1.xpose.msra.mxu0 0.0
  %1749 = vmatprep.subr.mxu0 0.0
  %1750 = vmatpush1.xpose.msra.mxu0 0.0
  %1751 = vmatprep.subr.mxu0 0.0
  %1752 = vmatpush1.xpose.msra.mxu0 0.0
  %1753 = vmatprep.subr.mxu0 0.0
  %1754 = vmatpush1.xpose.msra.mxu0 0.0
  %1755 = vmatprep.subr.mxu0 0.0
  %1756 = vmatpush1.xpose.msra.mxu0 0.0
  %1757 = vmatprep.subr.mxu0 0.0
  %1758 = vmatpush1.xpose.msra.mxu0 0.0
  %1759 = vmatprep.subr.mxu0 0.0
  %1760 = vmatpush1.xpose.msra.mxu0 0.0
  %1761 = vmatprep.subr.mxu0 0.0
  %1762 = vmatpush1.xpose.msra.mxu0 0.0
  %1763 = vmatprep.subr.mxu0 0.0
  %1764 = vmatpush1.xpose.msra.mxu0 0.0
  %1765 = vmatprep.subr.mxu0 0.0
  %1766 = vmatpush1.xpose.msra.mxu0 0.0
  %1767 = vmatprep.subr.mxu0 0.0
  %1768 = vmatpush1.xpose.msra.mxu0 0.0
  %1769 = vmatprep.subr.mxu0 0.0
  %1770 = vmatpush1.xpose.msra.mxu0 0.0
  %1771 = vmatprep.subr.mxu0 0.0
  %1772 = vmatpush1.xpose.msra.mxu0 0.0
  %1773 = vmatprep.subr.mxu0 0.0
  %1774 = vmatpush1.xpose.msra.mxu0 %v1743
  %1775 = vmatprep.subr.mxu0 0.0
  %1776 = vmatpush1.xpose.msra.mxu0 %v1741
  %1777 = vmatprep.subr.mxu0 0.0
  %1778 = vmatpush2.xpose.msra.mxu0 0.0
  %1779 = vmatprep.subr.mxu0 0.0
  %1780 = vmatpush2.xpose.msra.mxu0 0.0
  %1781 = vmatprep.subr.mxu0 0.0
  %1782 = vmatpush2.xpose.msra.mxu0 0.0
  %1783 = vmatprep.subr.mxu0 0.0
  %1784 = vmatpush2.xpose.msra.mxu0 0.0
  %1785 = vmatprep.subr.mxu0 0.0
  %1786 = vmatpush2.xpose.msra.mxu0 0.0
  %1787 = vmatprep.subr.mxu0 0.0
  %1788 = vmatpush2.xpose.msra.mxu0 0.0
  %1789 = vmatprep.subr.mxu0 0.0
  %1790 = vmatpush2.xpose.msra.mxu0 0.0
  %1791 = vmatprep.subr.mxu0 0.0
  %1792 = vmatpush2.xpose.msra.mxu0 0.0
  %1793 = vmatprep.subr.mxu0 0.0
  %1794 = vmatpush2.xpose.msra.mxu0 0.0
  %1795 = vmatprep.subr.mxu0 0.0
  %1796 = vmatpush2.xpose.msra.mxu0 0.0
  %1797 = vmatprep.subr.mxu0 0.0
  %1798 = vmatpush2.xpose.msra.mxu0 0.0
  %1799 = vmatprep.subr.mxu0 0.0
  %1800 = vmatpush2.xpose.msra.mxu0 0.0
  %1801 = vmatprep.subr.mxu0 0.0
  %1802 = vmatpush2.xpose.msra.mxu0 0.0
  %1803 = vmatprep.subr.mxu0 0.0
  %1804 = vmatpush2.xpose.msra.mxu0 0.0
  %1805 = vmatprep.subr.mxu0 0.0
  %1806 = vmatpush2.xpose.msra.mxu0 0.0
  %1807 = vmatprep.subr.mxu0 0.0
  %1808 = vmatpush2.xpose.msra.mxu0 0.0
  %1809 = vmatprep.mubr.f32.mxu0 0.0
  %1810 = vmatmul.mubr.f32.gmra.mxu0 %v1736
  %v1811 = vpop.f32.mrf.mxu0
  %v1812 = vadd.f32 %v89, %v1811
  %v1813 = vpop.f32.mrf.mxu0
  %1814 = vmatprep.mubr.f32.mxu0 0.0
  %1815 = vmatmul.mubr.f32.gmra.mxu0 %v1739
  %v1816 = vpop.f32.mrf.mxu0
  %v1817 = vadd.f32 %v90, %v1816
  %v1818 = vpop.f32.mrf.mxu0
  %1819 = vdwg.mxu0
  %1820 = vrot.lane.b32.xlu0 %v1540, 112
  %v1821 = vpop.permute.xlu0 %1820
  %1822 = vrot.lane.b32.xlu0 %v1542, 112
  %v1823 = vpop.permute.xlu0 %1822
  %v1825 = vsel %vm255, %v1551, 0
  %v1828 = vsel %vm255, %v1552, 0
  %v1830 = vsel %vm255, %v1821, 0
  %v1832 = vsel %vm255, %v1823, 0
  %1834 = vmatprep.subr.mxu0 0.0
  %1835 = vmatpush1.xpose.msra.mxu0 0.0
  %1836 = vmatprep.subr.mxu0 0.0
  %1837 = vmatpush1.xpose.msra.mxu0 0.0
  %1838 = vmatprep.subr.mxu0 0.0
  %1839 = vmatpush1.xpose.msra.mxu0 0.0
  %1840 = vmatprep.subr.mxu0 0.0
  %1841 = vmatpush1.xpose.msra.mxu0 0.0
  %1842 = vmatprep.subr.mxu0 0.0
  %1843 = vmatpush1.xpose.msra.mxu0 0.0
  %1844 = vmatprep.subr.mxu0 0.0
  %1845 = vmatpush1.xpose.msra.mxu0 0.0
  %1846 = vmatprep.subr.mxu0 0.0
  %1847 = vmatpush1.xpose.msra.mxu0 0.0
  %1848 = vmatprep.subr.mxu0 0.0
  %1849 = vmatpush1.xpose.msra.mxu0 0.0
  %1850 = vmatprep.subr.mxu0 0.0
  %1851 = vmatpush1.xpose.msra.mxu0 0.0
  %1852 = vmatprep.subr.mxu0 0.0
  %1853 = vmatpush1.xpose.msra.mxu0 0.0
  %1854 = vmatprep.subr.mxu0 0.0
  %1855 = vmatpush1.xpose.msra.mxu0 0.0
  %1856 = vmatprep.subr.mxu0 0.0
  %1857 = vmatpush1.xpose.msra.mxu0 0.0
  %1858 = vmatprep.subr.mxu0 0.0
  %1859 = vmatpush1.xpose.msra.mxu0 0.0
  %1860 = vmatprep.subr.mxu0 0.0
  %1861 = vmatpush1.xpose.msra.mxu0 0.0
  %1862 = vmatprep.subr.mxu0 0.0
  %1863 = vmatpush1.xpose.msra.mxu0 %v1832
  %1864 = vmatprep.subr.mxu0 0.0
  %1865 = vmatpush1.xpose.msra.mxu0 %v1830
  %1866 = vmatprep.subr.mxu0 0.0
  %1867 = vmatpush2.xpose.msra.mxu0 0.0
  %1868 = vmatprep.subr.mxu0 0.0
  %1869 = vmatpush2.xpose.msra.mxu0 0.0
  %1870 = vmatprep.subr.mxu0 0.0
  %1871 = vmatpush2.xpose.msra.mxu0 0.0
  %1872 = vmatprep.subr.mxu0 0.0
  %1873 = vmatpush2.xpose.msra.mxu0 0.0
  %1874 = vmatprep.subr.mxu0 0.0
  %1875 = vmatpush2.xpose.msra.mxu0 0.0
  %1876 = vmatprep.subr.mxu0 0.0
  %1877 = vmatpush2.xpose.msra.mxu0 0.0
  %1878 = vmatprep.subr.mxu0 0.0
  %1879 = vmatpush2.xpose.msra.mxu0 0.0
  %1880 = vmatprep.subr.mxu0 0.0
  %1881 = vmatpush2.xpose.msra.mxu0 0.0
  %1882 = vmatprep.subr.mxu0 0.0
  %1883 = vmatpush2.xpose.msra.mxu0 0.0
  %1884 = vmatprep.subr.mxu0 0.0
  %1885 = vmatpush2.xpose.msra.mxu0 0.0
  %1886 = vmatprep.subr.mxu0 0.0
  %1887 = vmatpush2.xpose.msra.mxu0 0.0
  %1888 = vmatprep.subr.mxu0 0.0
  %1889 = vmatpush2.xpose.msra.mxu0 0.0
  %1890 = vmatprep.subr.mxu0 0.0
  %1891 = vmatpush2.xpose.msra.mxu0 0.0
  %1892 = vmatprep.subr.mxu0 0.0
  %1893 = vmatpush2.xpose.msra.mxu0 0.0
  %1894 = vmatprep.subr.mxu0 0.0
  %1895 = vmatpush2.xpose.msra.mxu0 0.0
  %1896 = vmatprep.subr.mxu0 0.0
  %1897 = vmatpush2.xpose.msra.mxu0 0.0
  %1898 = vmatprep.mubr.f32.mxu0 0.0
  %1899 = vmatmul.mubr.f32.gmra.mxu0 %v1825
  %v1900 = vpop.f32.mrf.mxu0
  %v1901 = vadd.f32 %v89, %v1900
  %v1902 = vpop.f32.mrf.mxu0
  %1903 = vmatprep.mubr.f32.mxu0 0.0
  %1904 = vmatmul.mubr.f32.gmra.mxu0 %v1828
  %v1905 = vpop.f32.mrf.mxu0
  %v1906 = vadd.f32 %v90, %v1905
  %v1907 = vpop.f32.mrf.mxu0
  %1908 = vdwg.mxu0
  %v1909 = vsel %vm91, %v1634, -inf
  %1910 = vmax.xlane.f32.xlu0 %v1909
  %v1911 = vpop.xlane.xlu0 %1910
  %v1912 = vsel %vm91, %v1639, -inf
  %1913 = vmax.xlane.f32.xlu0 %v1912
  %v1914 = vpop.xlane.xlu0 %1913
  %v1915 = vsel %vm91, %v1723, -inf
  %1916 = vmax.xlane.f32.xlu0 %v1915
  %v1917 = vpop.xlane.xlu0 %1916
  %v1918 = vsel %vm91, %v1728, -inf
  %1919 = vmax.xlane.f32.xlu0 %v1918
  %v1920 = vpop.xlane.xlu0 %1919
  %v1921 = vsel %vm91, %v1812, -inf
  %1922 = vmax.xlane.f32.xlu0 %v1921
  %v1923 = vpop.xlane.xlu0 %1922
  %v1924 = vsel %vm91, %v1817, -inf
  %1925 = vmax.xlane.f32.xlu0 %v1924
  %v1926 = vpop.xlane.xlu0 %1925
  %v1927 = vsel %vm91, %v1901, -inf
  %1928 = vmax.xlane.f32.xlu0 %v1927
  %v1929 = vpop.xlane.xlu0 %1928
  %v1930 = vsel %vm91, %v1906, -inf
  %1931 = vmax.xlane.f32.xlu0 %v1930
  %v1932 = vpop.xlane.xlu0 %1931
  %v1933 = vsub.f32 %v1634, %v1911
  %v1934 = vsub.f32 %v1639, %v1914
  %v1935 = vsub.f32 %v1723, %v1917
  %v1936 = vsub.f32 %v1728, %v1920
  %v1937 = vsub.f32 %v1812, %v1923
  %v1938 = vsub.f32 %v1817, %v1926
  %v1939 = vsub.f32 %v1901, %v1929
  %v1940 = vsub.f32 %v1906, %v1932
  %v1941 = vmul.f32 %v1933, 1.442695
  %v1942 = vpow.pop %v1941
  %v1943 = vmul.f32 %v1934, 1.442695
  %v1944 = vpow.pop %v1943
  %v1945 = vmul.f32 %v1935, 1.442695
  %v1946 = vpow.pop %v1945
  %v1947 = vmul.f32 %v1936, 1.442695
  %v1948 = vpow.pop %v1947
  %v1949 = vmul.f32 %v1937, 1.442695
  %v1950 = vpow.pop %v1949
  %v1951 = vmul.f32 %v1938, 1.442695
  %v1952 = vpow.pop %v1951
  %v1953 = vmul.f32 %v1939, 1.442695
  %v1954 = vpow.pop %v1953
  %v1955 = vmul.f32 %v1940, 1.442695
  %v1956 = vpow.pop %v1955
  %v1957 = vsel %vm91, %v1942, 0.0
  %1958 = vadd.xlane.f32.xlu0 %v1957
  %v1959 = vpop.xlane.xlu0 %1958
  %v1960 = vsel %vm91, %v1944, 0.0
  %1961 = vadd.xlane.f32.xlu0 %v1960
  %v1962 = vpop.xlane.xlu0 %1961
  %v1963 = vsel %vm91, %v1946, 0.0
  %1964 = vadd.xlane.f32.xlu0 %v1963
  %v1965 = vpop.xlane.xlu0 %1964
  %v1966 = vsel %vm91, %v1948, 0.0
  %1967 = vadd.xlane.f32.xlu0 %v1966
  %v1968 = vpop.xlane.xlu0 %1967
  %v1969 = vsel %vm91, %v1950, 0.0
  %1970 = vadd.xlane.f32.xlu0 %v1969
  %v1971 = vpop.xlane.xlu0 %1970
  %v1972 = vsel %vm91, %v1952, 0.0
  %1973 = vadd.xlane.f32.xlu0 %v1972
  %v1974 = vpop.xlane.xlu0 %1973
  %v1975 = vsel %vm91, %v1954, 0.0
  %1976 = vadd.xlane.f32.xlu0 %v1975
  %v1977 = vpop.xlane.xlu0 %1976
  %v1978 = vsel %vm91, %v1956, 0.0
  %1979 = vadd.xlane.f32.xlu0 %v1978
  %v1980 = vpop.xlane.xlu0 %1979
  %v1981 = vrcp.pop %v1959
  %v1982 = vrcp.pop %v1962
  %v1983 = vrcp.pop %v1965
  %v1984 = vrcp.pop %v1968
  %v1985 = vrcp.pop %v1971
  %v1986 = vrcp.pop %v1974
  %v1987 = vrcp.pop %v1977
  %v1988 = vrcp.pop %v1980
  %v1989 = vmul.f32 %v1942, %v1981
  %v1990 = vmul.f32 %v1944, %v1982
  %v1991 = vmul.f32 %v1946, %v1983
  %v1992 = vmul.f32 %v1948, %v1984
  %v1993 = vmul.f32 %v1950, %v1985
  %v1994 = vmul.f32 %v1952, %v1986
  %v1995 = vmul.f32 %v1954, %v1987
  %v1996 = vmul.f32 %v1956, %v1988
  %1997 = vrot.lane.b32.xlu0 %v1517, 96
  %v1998 = vpop.permute.xlu0 %1997
  %1999 = vrot.lane.b32.xlu0 %v1522, 96
  %v2000 = vpop.permute.xlu0 %1999
  %v2004 = vsel %vm91, %v1989, 0
  %v2007 = vsel %vm91, %v1990, 0
  %2009 = vmatprep.subr.mxu0 0.0
  %2010 = vmatpush1.msra.mxu0 0.0
  %2011 = vmatprep.subr.mxu0 0.0
  %2012 = vmatpush1.msra.mxu0 0.0
  %2013 = vmatprep.subr.mxu0 0.0
  %2014 = vmatpush1.msra.mxu0 0.0
  %2015 = vmatprep.subr.mxu0 0.0
  %2016 = vmatpush1.msra.mxu0 0.0
  %2017 = vmatprep.subr.mxu0 0.0
  %2018 = vmatpush1.msra.mxu0 0.0
  %2019 = vmatprep.subr.mxu0 0.0
  %2020 = vmatpush1.msra.mxu0 0.0
  %2021 = vmatprep.subr.mxu0 0.0
  %2022 = vmatpush1.msra.mxu0 0.0
  %2023 = vmatprep.subr.mxu0 0.0
  %2024 = vmatpush1.msra.mxu0 0.0
  %2025 = vmatprep.subr.mxu0 0.0
  %2026 = vmatpush1.msra.mxu0 0.0
  %2027 = vmatprep.subr.mxu0 0.0
  %2028 = vmatpush1.msra.mxu0 0.0
  %2029 = vmatprep.subr.mxu0 0.0
  %2030 = vmatpush1.msra.mxu0 0.0
  %2031 = vmatprep.subr.mxu0 0.0
  %2032 = vmatpush1.msra.mxu0 0.0
  %2033 = vmatprep.subr.mxu0 0.0
  %2034 = vmatpush1.msra.mxu0 0.0
  %2035 = vmatprep.subr.mxu0 0.0
  %2036 = vmatpush1.msra.mxu0 0.0
  %2037 = vmatprep.subr.mxu0 0.0
  %2038 = vmatpush1.msra.mxu0 %v2000
  %2039 = vmatprep.subr.mxu0 0.0
  %2040 = vmatpush1.msra.mxu0 %v1998
  %2041 = vmatprep.subr.mxu0 0.0
  %2042 = vmatpush2.msra.mxu0 0.0
  %2043 = vmatprep.subr.mxu0 0.0
  %2044 = vmatpush2.msra.mxu0 0.0
  %2045 = vmatprep.subr.mxu0 0.0
  %2046 = vmatpush2.msra.mxu0 0.0
  %2047 = vmatprep.subr.mxu0 0.0
  %2048 = vmatpush2.msra.mxu0 0.0
  %2049 = vmatprep.subr.mxu0 0.0
  %2050 = vmatpush2.msra.mxu0 0.0
  %2051 = vmatprep.subr.mxu0 0.0
  %2052 = vmatpush2.msra.mxu0 0.0
  %2053 = vmatprep.subr.mxu0 0.0
  %2054 = vmatpush2.msra.mxu0 0.0
  %2055 = vmatprep.subr.mxu0 0.0
  %2056 = vmatpush2.msra.mxu0 0.0
  %2057 = vmatprep.subr.mxu0 0.0
  %2058 = vmatpush2.msra.mxu0 0.0
  %2059 = vmatprep.subr.mxu0 0.0
  %2060 = vmatpush2.msra.mxu0 0.0
  %2061 = vmatprep.subr.mxu0 0.0
  %2062 = vmatpush2.msra.mxu0 0.0
  %2063 = vmatprep.subr.mxu0 0.0
  %2064 = vmatpush2.msra.mxu0 0.0
  %2065 = vmatprep.subr.mxu0 0.0
  %2066 = vmatpush2.msra.mxu0 0.0
  %2067 = vmatprep.subr.mxu0 0.0
  %2068 = vmatpush2.msra.mxu0 0.0
  %2069 = vmatprep.subr.mxu0 0.0
  %2070 = vmatpush2.msra.mxu0 0.0
  %2071 = vmatprep.subr.mxu0 0.0
  %2072 = vmatpush2.msra.mxu0 0.0
  %2073 = vmatprep.mubr.f32.mxu0 0.0
  %2074 = vmatmul.mubr.f32.gmra.mxu0 %v2004
  %v2075 = vpop.f32.mrf.mxu0
  %v2076 = vadd.f32 0.0, %v2075
  %v2077 = vpop.f32.mrf.mxu0
  %2078 = vmatprep.mubr.f32.mxu0 0.0
  %2079 = vmatmul.mubr.f32.gmra.mxu0 %v2007
  %v2080 = vpop.f32.mrf.mxu0
  %v2081 = vadd.f32 0.0, %v2080
  %v2082 = vpop.f32.mrf.mxu0
  %2083 = vdwg.mxu0
  %2084 = vrot.lane.b32.xlu0 %v1528, 96
  %v2085 = vpop.permute.xlu0 %2084
  %2086 = vrot.lane.b32.xlu0 %v1530, 96
  %v2087 = vpop.permute.xlu0 %2086
  %v2091 = vsel %vm91, %v1991, 0
  %v2094 = vsel %vm91, %v1992, 0
  %2096 = vmatprep.subr.mxu0 0.0
  %2097 = vmatpush1.msra.mxu0 0.0
  %2098 = vmatprep.subr.mxu0 0.0
  %2099 = vmatpush1.msra.mxu0 0.0
  %2100 = vmatprep.subr.mxu0 0.0
  %2101 = vmatpush1.msra.mxu0 0.0
  %2102 = vmatprep.subr.mxu0 0.0
  %2103 = vmatpush1.msra.mxu0 0.0
  %2104 = vmatprep.subr.mxu0 0.0
  %2105 = vmatpush1.msra.mxu0 0.0
  %2106 = vmatprep.subr.mxu0 0.0
  %2107 = vmatpush1.msra.mxu0 0.0
  %2108 = vmatprep.subr.mxu0 0.0
  %2109 = vmatpush1.msra.mxu0 0.0
  %2110 = vmatprep.subr.mxu0 0.0
  %2111 = vmatpush1.msra.mxu0 0.0
  %2112 = vmatprep.subr.mxu0 0.0
  %2113 = vmatpush1.msra.mxu0 0.0
  %2114 = vmatprep.subr.mxu0 0.0
  %2115 = vmatpush1.msra.mxu0 0.0
  %2116 = vmatprep.subr.mxu0 0.0
  %2117 = vmatpush1.msra.mxu0 0.0
  %2118 = vmatprep.subr.mxu0 0.0
  %2119 = vmatpush1.msra.mxu0 0.0
  %2120 = vmatprep.subr.mxu0 0.0
  %2121 = vmatpush1.msra.mxu0 0.0
  %2122 = vmatprep.subr.mxu0 0.0
  %2123 = vmatpush1.msra.mxu0 0.0
  %2124 = vmatprep.subr.mxu0 0.0
  %2125 = vmatpush1.msra.mxu0 %v2087
  %2126 = vmatprep.subr.mxu0 0.0
  %2127 = vmatpush1.msra.mxu0 %v2085
  %2128 = vmatprep.subr.mxu0 0.0
  %2129 = vmatpush2.msra.mxu0 0.0
  %2130 = vmatprep.subr.mxu0 0.0
  %2131 = vmatpush2.msra.mxu0 0.0
  %2132 = vmatprep.subr.mxu0 0.0
  %2133 = vmatpush2.msra.mxu0 0.0
  %2134 = vmatprep.subr.mxu0 0.0
  %2135 = vmatpush2.msra.mxu0 0.0
  %2136 = vmatprep.subr.mxu0 0.0
  %2137 = vmatpush2.msra.mxu0 0.0
  %2138 = vmatprep.subr.mxu0 0.0
  %2139 = vmatpush2.msra.mxu0 0.0
  %2140 = vmatprep.subr.mxu0 0.0
  %2141 = vmatpush2.msra.mxu0 0.0
  %2142 = vmatprep.subr.mxu0 0.0
  %2143 = vmatpush2.msra.mxu0 0.0
  %2144 = vmatprep.subr.mxu0 0.0
  %2145 = vmatpush2.msra.mxu0 0.0
  %2146 = vmatprep.subr.mxu0 0.0
  %2147 = vmatpush2.msra.mxu0 0.0
  %2148 = vmatprep.subr.mxu0 0.0
  %2149 = vmatpush2.msra.mxu0 0.0
  %2150 = vmatprep.subr.mxu0 0.0
  %2151 = vmatpush2.msra.mxu0 0.0
  %2152 = vmatprep.subr.mxu0 0.0
  %2153 = vmatpush2.msra.mxu0 0.0
  %2154 = vmatprep.subr.mxu0 0.0
  %2155 = vmatpush2.msra.mxu0 0.0
  %2156 = vmatprep.subr.mxu0 0.0
  %2157 = vmatpush2.msra.mxu0 0.0
  %2158 = vmatprep.subr.mxu0 0.0
  %2159 = vmatpush2.msra.mxu0 0.0
  %2160 = vmatprep.mubr.f32.mxu0 0.0
  %2161 = vmatmul.mubr.f32.gmra.mxu0 %v2091
  %v2162 = vpop.f32.mrf.mxu0
  %v2163 = vadd.f32 0.0, %v2162
  %v2164 = vpop.f32.mrf.mxu0
  %2165 = vmatprep.mubr.f32.mxu0 0.0
  %2166 = vmatmul.mubr.f32.gmra.mxu0 %v2094
  %v2167 = vpop.f32.mrf.mxu0
  %v2168 = vadd.f32 0.0, %v2167
  %v2169 = vpop.f32.mrf.mxu0
  %2170 = vdwg.mxu0
  %2171 = vrot.lane.b32.xlu0 %v1534, 96
  %v2172 = vpop.permute.xlu0 %2171
  %2173 = vrot.lane.b32.xlu0 %v1536, 96
  %v2174 = vpop.permute.xlu0 %2173
  %v2178 = vsel %vm91, %v1993, 0
  %v2181 = vsel %vm91, %v1994, 0
  %2183 = vmatprep.subr.mxu0 0.0
  %2184 = vmatpush1.msra.mxu0 0.0
  %2185 = vmatprep.subr.mxu0 0.0
  %2186 = vmatpush1.msra.mxu0 0.0
  %2187 = vmatprep.subr.mxu0 0.0
  %2188 = vmatpush1.msra.mxu0 0.0
  %2189 = vmatprep.subr.mxu0 0.0
  %2190 = vmatpush1.msra.mxu0 0.0
  %2191 = vmatprep.subr.mxu0 0.0
  %2192 = vmatpush1.msra.mxu0 0.0
  %2193 = vmatprep.subr.mxu0 0.0
  %2194 = vmatpush1.msra.mxu0 0.0
  %2195 = vmatprep.subr.mxu0 0.0
  %2196 = vmatpush1.msra.mxu0 0.0
  %2197 = vmatprep.subr.mxu0 0.0
  %2198 = vmatpush1.msra.mxu0 0.0
  %2199 = vmatprep.subr.mxu0 0.0
  %2200 = vmatpush1.msra.mxu0 0.0
  %2201 = vmatprep.subr.mxu0 0.0
  %2202 = vmatpush1.msra.mxu0 0.0
  %2203 = vmatprep.subr.mxu0 0.0
  %2204 = vmatpush1.msra.mxu0 0.0
  %2205 = vmatprep.subr.mxu0 0.0
  %2206 = vmatpush1.msra.mxu0 0.0
  %2207 = vmatprep.subr.mxu0 0.0
  %2208 = vmatpush1.msra.mxu0 0.0
  %2209 = vmatprep.subr.mxu0 0.0
  %2210 = vmatpush1.msra.mxu0 0.0
  %2211 = vmatprep.subr.mxu0 0.0
  %2212 = vmatpush1.msra.mxu0 %v2174
  %2213 = vmatprep.subr.mxu0 0.0
  %2214 = vmatpush1.msra.mxu0 %v2172
  %2215 = vmatprep.subr.mxu0 0.0
  %2216 = vmatpush2.msra.mxu0 0.0
  %2217 = vmatprep.subr.mxu0 0.0
  %2218 = vmatpush2.msra.mxu0 0.0
  %2219 = vmatprep.subr.mxu0 0.0
  %2220 = vmatpush2.msra.mxu0 0.0
  %2221 = vmatprep.subr.mxu0 0.0
  %2222 = vmatpush2.msra.mxu0 0.0
  %2223 = vmatprep.subr.mxu0 0.0
  %2224 = vmatpush2.msra.mxu0 0.0
  %2225 = vmatprep.subr.mxu0 0.0
  %2226 = vmatpush2.msra.mxu0 0.0
  %2227 = vmatprep.subr.mxu0 0.0
  %2228 = vmatpush2.msra.mxu0 0.0
  %2229 = vmatprep.subr.mxu0 0.0
  %2230 = vmatpush2.msra.mxu0 0.0
  %2231 = vmatprep.subr.mxu0 0.0
  %2232 = vmatpush2.msra.mxu0 0.0
  %2233 = vmatprep.subr.mxu0 0.0
  %2234 = vmatpush2.msra.mxu0 0.0
  %2235 = vmatprep.subr.mxu0 0.0
  %2236 = vmatpush2.msra.mxu0 0.0
  %2237 = vmatprep.subr.mxu0 0.0
  %2238 = vmatpush2.msra.mxu0 0.0
  %2239 = vmatprep.subr.mxu0 0.0
  %2240 = vmatpush2.msra.mxu0 0.0
  %2241 = vmatprep.subr.mxu0 0.0
  %2242 = vmatpush2.msra.mxu0 0.0
  %2243 = vmatprep.subr.mxu0 0.0
  %2244 = vmatpush2.msra.mxu0 0.0
  %2245 = vmatprep.subr.mxu0 0.0
  %2246 = vmatpush2.msra.mxu0 0.0
  %2247 = vmatprep.mubr.f32.mxu0 0.0
  %2248 = vmatmul.mubr.f32.gmra.mxu0 %v2178
  %v2249 = vpop.f32.mrf.mxu0
  %v2250 = vadd.f32 0.0, %v2249
  %v2251 = vpop.f32.mrf.mxu0
  %2252 = vmatprep.mubr.f32.mxu0 0.0
  %2253 = vmatmul.mubr.f32.gmra.mxu0 %v2181
  %v2254 = vpop.f32.mrf.mxu0
  %v2255 = vadd.f32 0.0, %v2254
  %v2256 = vpop.f32.mrf.mxu0
  %2257 = vdwg.mxu0
  %2258 = vrot.lane.b32.xlu0 %v1540, 96
  %v2259 = vpop.permute.xlu0 %2258
  %2260 = vrot.lane.b32.xlu0 %v1542, 96
  %v2261 = vpop.permute.xlu0 %2260
  %v2265 = vsel %vm91, %v1995, 0
  %v2268 = vsel %vm91, %v1996, 0
  %2270 = vmatprep.subr.mxu0 0.0
  %2271 = vmatpush1.msra.mxu0 0.0
  %2272 = vmatprep.subr.mxu0 0.0
  %2273 = vmatpush1.msra.mxu0 0.0
  %2274 = vmatprep.subr.mxu0 0.0
  %2275 = vmatpush1.msra.mxu0 0.0
  %2276 = vmatprep.subr.mxu0 0.0
  %2277 = vmatpush1.msra.mxu0 0.0
  %2278 = vmatprep.subr.mxu0 0.0
  %2279 = vmatpush1.msra.mxu0 0.0
  %2280 = vmatprep.subr.mxu0 0.0
  %2281 = vmatpush1.msra.mxu0 0.0
  %2282 = vmatprep.subr.mxu0 0.0
  %2283 = vmatpush1.msra.mxu0 0.0
  %2284 = vmatprep.subr.mxu0 0.0
  %2285 = vmatpush1.msra.mxu0 0.0
  %2286 = vmatprep.subr.mxu0 0.0
  %2287 = vmatpush1.msra.mxu0 0.0
  %2288 = vmatprep.subr.mxu0 0.0
  %2289 = vmatpush1.msra.mxu0 0.0
  %2290 = vmatprep.subr.mxu0 0.0
  %2291 = vmatpush1.msra.mxu0 0.0
  %2292 = vmatprep.subr.mxu0 0.0
  %2293 = vmatpush1.msra.mxu0 0.0
  %2294 = vmatprep.subr.mxu0 0.0
  %2295 = vmatpush1.msra.mxu0 0.0
  %2296 = vmatprep.subr.mxu0 0.0
  %2297 = vmatpush1.msra.mxu0 0.0
  %2298 = vmatprep.subr.mxu0 0.0
  %2299 = vmatpush1.msra.mxu0 %v2261
  %2300 = vmatprep.subr.mxu0 0.0
  %2301 = vmatpush1.msra.mxu0 %v2259
  %2302 = vmatprep.subr.mxu0 0.0
  %2303 = vmatpush2.msra.mxu0 0.0
  %2304 = vmatprep.subr.mxu0 0.0
  %2305 = vmatpush2.msra.mxu0 0.0
  %2306 = vmatprep.subr.mxu0 0.0
  %2307 = vmatpush2.msra.mxu0 0.0
  %2308 = vmatprep.subr.mxu0 0.0
  %2309 = vmatpush2.msra.mxu0 0.0
  %2310 = vmatprep.subr.mxu0 0.0
  %2311 = vmatpush2.msra.mxu0 0.0
  %2312 = vmatprep.subr.mxu0 0.0
  %2313 = vmatpush2.msra.mxu0 0.0
  %2314 = vmatprep.subr.mxu0 0.0
  %2315 = vmatpush2.msra.mxu0 0.0
  %2316 = vmatprep.subr.mxu0 0.0
  %2317 = vmatpush2.msra.mxu0 0.0
  %2318 = vmatprep.subr.mxu0 0.0
  %2319 = vmatpush2.msra.mxu0 0.0
  %2320 = vmatprep.subr.mxu0 0.0
  %2321 = vmatpush2.msra.mxu0 0.0
  %2322 = vmatprep.subr.mxu0 0.0
  %2323 = vmatpush2.msra.mxu0 0.0
  %2324 = vmatprep.subr.mxu0 0.0
  %2325 = vmatpush2.msra.mxu0 0.0
  %2326 = vmatprep.subr.mxu0 0.0
  %2327 = vmatpush2.msra.mxu0 0.0
  %2328 = vmatprep.subr.mxu0 0.0
  %2329 = vmatpush2.msra.mxu0 0.0
  %2330 = vmatprep.subr.mxu0 0.0
  %2331 = vmatpush2.msra.mxu0 0.0
  %2332 = vmatprep.subr.mxu0 0.0
  %2333 = vmatpush2.msra.mxu0 0.0
  %2334 = vmatprep.mubr.f32.mxu0 0.0
  %2335 = vmatmul.mubr.f32.gmra.mxu0 %v2265
  %v2336 = vpop.f32.mrf.mxu0
  %v2337 = vadd.f32 0.0, %v2336
  %v2338 = vpop.f32.mrf.mxu0
  %2339 = vmatprep.mubr.f32.mxu0 0.0
  %2340 = vmatmul.mubr.f32.gmra.mxu0 %v2268
  %v2341 = vpop.f32.mrf.mxu0
  %v2342 = vadd.f32 0.0, %v2341
  %v2343 = vpop.f32.mrf.mxu0
  %2344 = vdwg.mxu0
  %2347 = vrot.lane.b32.xlu0 %v2163, 4
  %v2348 = vpop.permute.xlu0 %2347
  %2349 = vrot.lane.b32.xlu0 %v2168, 4
  %v2350 = vpop.permute.xlu0 %2349
  %2355 = vrot.lane.b32.xlu0 %v2250, 8
  %v2356 = vpop.permute.xlu0 %2355
  %2357 = vrot.lane.b32.xlu0 %v2255, 8
  %v2358 = vpop.permute.xlu0 %2357
  %2363 = vrot.lane.b32.xlu0 %v2337, 12
  %v2364 = vpop.permute.xlu0 %2363
  %2365 = vrot.lane.b32.xlu0 %v2342, 12
  %v2366 = vpop.permute.xlu0 %2365
  %v2369 = vsel %vm255, %v2076, %v2348
  %v2370 = vsel %vm255, %v2081, %v2350
  %v2371 = vsel %vm1070, %v2369, %v2356
  %v2372 = vsel %vm1070, %v2370, %v2358
  %v2373 = vsel %vm1073, %v2371, %v2364
  %v2374 = vsel %vm1073, %v2372, %v2366
  %v2375 = vld [vmem:[%s2 + $0x83] sm:$0xff]
  %v2376 = vld [vmem:[%s2 + $0x8b] sm:$0xff]
  %v2378 = vsel %vm91, %v2373, 0
  %v2381 = vsel %vm91, %v2374, 0
  %2383 = vmatprep.subr.mxu0 0.0
  %2384 = vmatpush1.msra.mxu0 0.0
  %2385 = vmatprep.subr.mxu0 0.0
  %2386 = vmatpush1.msra.mxu0 0.0
  %2387 = vmatprep.subr.mxu0 0.0
  %2388 = vmatpush1.msra.mxu0 0.0
  %2389 = vmatprep.subr.mxu0 0.0
  %2390 = vmatpush1.msra.mxu0 0.0
  %2391 = vmatprep.subr.mxu0 0.0
  %2392 = vmatpush1.msra.mxu0 0.0
  %2393 = vmatprep.subr.mxu0 0.0
  %2394 = vmatpush1.msra.mxu0 0.0
  %2395 = vmatprep.subr.mxu0 0.0
  %2396 = vmatpush1.msra.mxu0 0.0
  %2397 = vmatprep.subr.mxu0 0.0
  %2398 = vmatpush1.msra.mxu0 0.0
  %2399 = vmatprep.subr.mxu0 0.0
  %2400 = vmatpush1.msra.mxu0 0.0
  %2401 = vmatprep.subr.mxu0 0.0
  %2402 = vmatpush1.msra.mxu0 0.0
  %2403 = vmatprep.subr.mxu0 0.0
  %2404 = vmatpush1.msra.mxu0 0.0
  %2405 = vmatprep.subr.mxu0 0.0
  %2406 = vmatpush1.msra.mxu0 0.0
  %2407 = vmatprep.subr.mxu0 0.0
  %2408 = vmatpush1.msra.mxu0 0.0
  %2409 = vmatprep.subr.mxu0 0.0
  %2410 = vmatpush1.msra.mxu0 0.0
  %2411 = vmatprep.subr.mxu0 0.0
  %2412 = vmatpush1.msra.mxu0 %v2376
  %2413 = vmatprep.subr.mxu0 0.0
  %2414 = vmatpush1.msra.mxu0 %v2375
  %2415 = vmatprep.subr.mxu0 0.0
  %2416 = vmatpush2.msra.mxu0 0.0
  %2417 = vmatprep.subr.mxu0 0.0
  %2418 = vmatpush2.msra.mxu0 0.0
  %2419 = vmatprep.subr.mxu0 0.0
  %2420 = vmatpush2.msra.mxu0 0.0
  %2421 = vmatprep.subr.mxu0 0.0
  %2422 = vmatpush2.msra.mxu0 0.0
  %2423 = vmatprep.subr.mxu0 0.0
  %2424 = vmatpush2.msra.mxu0 0.0
  %2425 = vmatprep.subr.mxu0 0.0
  %2426 = vmatpush2.msra.mxu0 0.0
  %2427 = vmatprep.subr.mxu0 0.0
  %2428 = vmatpush2.msra.mxu0 0.0
  %2429 = vmatprep.subr.mxu0 0.0
  %2430 = vmatpush2.msra.mxu0 0.0
  %2431 = vmatprep.subr.mxu0 0.0
  %2432 = vmatpush2.msra.mxu0 0.0
  %2433 = vmatprep.subr.mxu0 0.0
  %2434 = vmatpush2.msra.mxu0 0.0
  %2435 = vmatprep.subr.mxu0 0.0
  %2436 = vmatpush2.msra.mxu0 0.0
  %2437 = vmatprep.subr.mxu0 0.0
  %2438 = vmatpush2.msra.mxu0 0.0
  %2439 = vmatprep.subr.mxu0 0.0
  %2440 = vmatpush2.msra.mxu0 0.0
  %2441 = vmatprep.subr.mxu0 0.0
  %2442 = vmatpush2.msra.mxu0 0.0
  %2443 = vmatprep.subr.mxu0 0.0
  %2444 = vmatpush2.msra.mxu0 0.0
  %2445 = vmatprep.subr.mxu0 0.0
  %2446 = vmatpush2.msra.mxu0 0.0
  %2447 = vmatprep.mubr.f32.mxu0 0.0
  %2448 = vmatmul.mubr.f32.gmra.mxu0 %v2378
  %v2449 = vpop.f32.mrf.mxu0
  %v2450 = vadd.f32 0.0, %v2449
  %v2451 = vpop.f32.mrf.mxu0
  %2452 = vmatprep.mubr.f32.mxu0 0.0
  %2453 = vmatmul.mubr.f32.gmra.mxu0 %v2381
  %v2454 = vpop.f32.mrf.mxu0
  %v2455 = vadd.f32 0.0, %v2454
  %v2456 = vpop.f32.mrf.mxu0
  %2457 = vdwg.mxu0
  %v2458 = vadd.f32 %v1393, %v2450
  %v2459 = vadd.f32 %v1394, %v2455
  %v2460 = vlaneseq
  %v2461 = vshrl.u32 %v2460, 7
  %v2462 = vsub.s32 5, %v2461
  %v2463 = vrot.slane %v18, %v2462
  %v2464 = vadd.f32 %v2458, %v2463
  %v2465 = vadd.f32 %v2459, %v2463
  %v2466 = vsel %vm91, %v2464, 0.0
  %2467 = vadd.xlane.f32.xlu0 %v2466
  %v2468 = vpop.xlane.xlu0 %2467
  %v2469 = vsel %vm91, %v2465, 0.0
  %2470 = vadd.xlane.f32.xlu0 %v2469
  %v2471 = vpop.xlane.xlu0 %2470
  %v2472 = vmul.f32 %v2468, %v98
  %v2473 = vmul.f32 %v2471, %v98
  %v2474 = vmul.f32 %v2464, %v2464
  %v2475 = vmul.f32 %v2465, %v2465
  %v2476 = vsel %vm91, %v2474, 0.0
  %2477 = vadd.xlane.f32.xlu0 %v2476
  %v2478 = vpop.xlane.xlu0 %2477
  %v2479 = vsel %vm91, %v2475, 0.0
  %2480 = vadd.xlane.f32.xlu0 %v2479
  %v2481 = vpop.xlane.xlu0 %2480
  %v2482 = vmul.f32 %v2478, %v98
  %v2483 = vmul.f32 %v2481, %v98
  %v2484 = vmul.f32 %v2472, %v2472
  %v2485 = vmul.f32 %v2473, %v2473
  %v2486 = vsub.f32 %v2482, %v2484
  %v2487 = vsub.f32 %v2483, %v2485
  %v2488 = vsub.f32 %v2464, %v2472
  %v2489 = vsub.f32 %v2465, %v2473
  %v2490 = vadd.f32 %v2486, 1e-05
  %v2491 = vadd.f32 %v2487, 1e-05
  %v2492 = vrsqrt.pop %v2490
  %v2493 = vrsqrt.pop %v2491
  %v2494 = vmul.f32 %v2488, %v2492
  %v2495 = vmul.f32 %v2489, %v2493
  %v2496 = vlaneseq
  %v2497 = vshrl.u32 %v2496, 7
  %v2498 = vsub.s32 3, %v2497
  %v2499 = vrot.slane %v18, %v2498
  %v2500 = vmul.f32 %v2494, %v2499
  %v2501 = vmul.f32 %v2495, %v2499
  %v2502 = vlaneseq
  %v2503 = vshrl.u32 %v2502, 7
  %v2504 = vsub.s32 4, %v2503
  %v2505 = vrot.slane %v18, %v2504
  %v2506 = vadd.f32 %v2500, %v2505
  %v2507 = vadd.f32 %v2501, %v2505
  %v2508 = vld [vmem:[%s2 + $0x93] sm:$0xff]
  %v2509 = vld [vmem:[%s2 + $0x9b] sm:$0xff]
  %v2510 = vld [vmem:[%s2 + $0xa3] sm:$0x1]
  %v2511 = vlaneseq
  %v2512 = vshrl.u32 %v2511, 7
  %v2513 = vsub.s32 0, %v2512
  %v2514 = vrot.slane %v2510, %v2513
  %v2516 = vsel %vm91, %v2506, 0
  %v2519 = vsel %vm91, %v2507, 0
  %2521 = vmatprep.subr.mxu0 0.0
  %2522 = vmatpush1.msra.mxu0 0.0
  %2523 = vmatprep.subr.mxu0 0.0
  %2524 = vmatpush1.msra.mxu0 0.0
  %2525 = vmatprep.subr.mxu0 0.0
  %2526 = vmatpush1.msra.mxu0 0.0
  %2527 = vmatprep.subr.mxu0 0.0
  %2528 = vmatpush1.msra.mxu0 0.0
  %2529 = vmatprep.subr.mxu0 0.0
  %2530 = vmatpush1.msra.mxu0 0.0
  %2531 = vmatprep.subr.mxu0 0.0
  %2532 = vmatpush1.msra.mxu0 0.0
  %2533 = vmatprep.subr.mxu0 0.0
  %2534 = vmatpush1.msra.mxu0 0.0
  %2535 = vmatprep.subr.mxu0 0.0
  %2536 = vmatpush1.msra.mxu0 0.0
  %2537 = vmatprep.subr.mxu0 0.0
  %2538 = vmatpush1.msra.mxu0 0.0
  %2539 = vmatprep.subr.mxu0 0.0
  %2540 = vmatpush1.msra.mxu0 0.0
  %2541 = vmatprep.subr.mxu0 0.0
  %2542 = vmatpush1.msra.mxu0 0.0
  %2543 = vmatprep.subr.mxu0 0.0
  %2544 = vmatpush1.msra.mxu0 0.0
  %2545 = vmatprep.subr.mxu0 0.0
  %2546 = vmatpush1.msra.mxu0 0.0
  %2547 = vmatprep.subr.mxu0 0.0
  %2548 = vmatpush1.msra.mxu0 0.0
  %2549 = vmatprep.subr.mxu0 0.0
  %2550 = vmatpush1.msra.mxu0 %v2509
  %2551 = vmatprep.subr.mxu0 0.0
  %2552 = vmatpush1.msra.mxu0 %v2508
  %2553 = vmatprep.subr.mxu0 0.0
  %2554 = vmatpush2.msra.mxu0 0.0
  %2555 = vmatprep.subr.mxu0 0.0
  %2556 = vmatpush2.msra.mxu0 0.0
  %2557 = vmatprep.subr.mxu0 0.0
  %2558 = vmatpush2.msra.mxu0 0.0
  %2559 = vmatprep.subr.mxu0 0.0
  %2560 = vmatpush2.msra.mxu0 0.0
  %2561 = vmatprep.subr.mxu0 0.0
  %2562 = vmatpush2.msra.mxu0 0.0
  %2563 = vmatprep.subr.mxu0 0.0
  %2564 = vmatpush2.msra.mxu0 0.0
  %2565 = vmatprep.subr.mxu0 0.0
  %2566 = vmatpush2.msra.mxu0 0.0
  %2567 = vmatprep.subr.mxu0 0.0
  %2568 = vmatpush2.msra.mxu0 0.0
  %2569 = vmatprep.subr.mxu0 0.0
  %2570 = vmatpush2.msra.mxu0 0.0
  %2571 = vmatprep.subr.mxu0 0.0
  %2572 = vmatpush2.msra.mxu0 0.0
  %2573 = vmatprep.subr.mxu0 0.0
  %2574 = vmatpush2.msra.mxu0 0.0
  %2575 = vmatprep.subr.mxu0 0.0
  %2576 = vmatpush2.msra.mxu0 0.0
  %2577 = vmatprep.subr.mxu0 0.0
  %2578 = vmatpush2.msra.mxu0 0.0
  %2579 = vmatprep.subr.mxu0 0.0
  %2580 = vmatpush2.msra.mxu0 0.0
  %2581 = vmatprep.subr.mxu0 0.0
  %2582 = vmatpush2.msra.mxu0 0.0
  %2583 = vmatprep.subr.mxu0 0.0
  %2584 = vmatpush2.msra.mxu0 0.0
  %2585 = vmatprep.mubr.f32.mxu0 0.0
  %2586 = vmatmul.mubr.f32.gmra.mxu0 %v2516
  %v2587 = vpop.f32.mrf.mxu0
  %v2588 = vadd.f32 %v2514, %v2587
  %v2589 = vpop.f32.mrf.mxu0
  %2590 = vmatprep.mubr.f32.mxu0 0.0
  %2591 = vmatmul.mubr.f32.gmra.mxu0 %v2519
  %v2592 = vpop.f32.mrf.mxu0
  %v2593 = vadd.f32 %v2514, %v2592
  %v2594 = vpop.f32.mrf.mxu0
  %2595 = vdwg.mxu0
  %v2596 = vmax.f32 %v2588, 0.0
  %v2597 = vmax.f32 %v2593, 0.0
  %v2598 = vld [vmem:[%s2 + $0xa4] sm:$0xff]
  %v2599 = vld [vmem:[%s2 + $0xac] sm:$0xff]
  %v2600 = vld [vmem:[%s2 + $0xb4] sm:$0xff]
  %v2601 = vld [vmem:[%s2 + $0xbc] sm:$0xff]
  %v2602 = vld [vmem:[%s2 + $0xc4] sm:$0xff]
  %v2603 = vld [vmem:[%s2 + $0xcc] sm:$0xff]
  %v2604 = vld [vmem:[%s2 + $0xd4] sm:$0xff]
  %v2605 = vld [vmem:[%s2 + $0xdc] sm:$0xff]
  %v2606 = vlaneseq
  %v2607 = vshrl.u32 %v2606, 7
  %v2608 = vsub.s32 6, %v2607
  %v2609 = vrot.slane %v18, %v2608
  %v2611 = vsel %vm1311, %v2596, 0
  %v2614 = vsel %vm1311, %v2597, 0
  %2616 = vmatprep.subr.mxu0 0.0
  %2617 = vmatpush1.msra.mxu0 0.0
  %2618 = vmatprep.subr.mxu0 0.0
  %2619 = vmatpush1.msra.mxu0 0.0
  %2620 = vmatprep.subr.mxu0 0.0
  %2621 = vmatpush1.msra.mxu0 0.0
  %2622 = vmatprep.subr.mxu0 0.0
  %2623 = vmatpush1.msra.mxu0 0.0
  %2624 = vmatprep.subr.mxu0 0.0
  %2625 = vmatpush1.msra.mxu0 0.0
  %2626 = vmatprep.subr.mxu0 0.0
  %2627 = vmatpush1.msra.mxu0 0.0
  %2628 = vmatprep.subr.mxu0 0.0
  %2629 = vmatpush1.msra.mxu0 0.0
  %2630 = vmatprep.subr.mxu0 0.0
  %2631 = vmatpush1.msra.mxu0 0.0
  %2632 = vmatprep.subr.mxu0 0.0
  %2633 = vmatpush1.msra.mxu0 %v2605
  %2634 = vmatprep.subr.mxu0 0.0
  %2635 = vmatpush1.msra.mxu0 %v2604
  %2636 = vmatprep.subr.mxu0 0.0
  %2637 = vmatpush1.msra.mxu0 %v2603
  %2638 = vmatprep.subr.mxu0 0.0
  %2639 = vmatpush1.msra.mxu0 %v2602
  %2640 = vmatprep.subr.mxu0 0.0
  %2641 = vmatpush1.msra.mxu0 %v2601
  %2642 = vmatprep.subr.mxu0 0.0
  %2643 = vmatpush1.msra.mxu0 %v2600
  %2644 = vmatprep.subr.mxu0 0.0
  %2645 = vmatpush1.msra.mxu0 %v2599
  %2646 = vmatprep.subr.mxu0 0.0
  %2647 = vmatpush1.msra.mxu0 %v2598
  %2648 = vmatprep.subr.mxu0 0.0
  %2649 = vmatpush2.msra.mxu0 0.0
  %2650 = vmatprep.subr.mxu0 0.0
  %2651 = vmatpush2.msra.mxu0 0.0
  %2652 = vmatprep.subr.mxu0 0.0
  %2653 = vmatpush2.msra.mxu0 0.0
  %2654 = vmatprep.subr.mxu0 0.0
  %2655 = vmatpush2.msra.mxu0 0.0
  %2656 = vmatprep.subr.mxu0 0.0
  %2657 = vmatpush2.msra.mxu0 0.0
  %2658 = vmatprep.subr.mxu0 0.0
  %2659 = vmatpush2.msra.mxu0 0.0
  %2660 = vmatprep.subr.mxu0 0.0
  %2661 = vmatpush2.msra.mxu0 0.0
  %2662 = vmatprep.subr.mxu0 0.0
  %2663 = vmatpush2.msra.mxu0 0.0
  %2664 = vmatprep.subr.mxu0 0.0
  %2665 = vmatpush2.msra.mxu0 0.0
  %2666 = vmatprep.subr.mxu0 0.0
  %2667 = vmatpush2.msra.mxu0 0.0
  %2668 = vmatprep.subr.mxu0 0.0
  %2669 = vmatpush2.msra.mxu0 0.0
  %2670 = vmatprep.subr.mxu0 0.0
  %2671 = vmatpush2.msra.mxu0 0.0
  %2672 = vmatprep.subr.mxu0 0.0
  %2673 = vmatpush2.msra.mxu0 0.0
  %2674 = vmatprep.subr.mxu0 0.0
  %2675 = vmatpush2.msra.mxu0 0.0
  %2676 = vmatprep.subr.mxu0 0.0
  %2677 = vmatpush2.msra.mxu0 0.0
  %2678 = vmatprep.subr.mxu0 0.0
  %2679 = vmatpush2.msra.mxu0 0.0
  %2680 = vmatprep.mubr.f32.mxu0 0.0
  %2681 = vmatmul.mubr.f32.gmra.mxu0 %v2611
  %v2682 = vpop.f32.mrf.mxu0
  %v2683 = vadd.f32 %v2609, %v2682
  %v2684 = vpop.f32.mrf.mxu0
  %2685 = vmatprep.mubr.f32.mxu0 0.0
  %2686 = vmatmul.mubr.f32.gmra.mxu0 %v2614
  %v2687 = vpop.f32.mrf.mxu0
  %v2688 = vadd.f32 %v2609, %v2687
  %v2689 = vpop.f32.mrf.mxu0
  %2690 = vdwg.mxu0
  %v2691 = vadd.f32 %v2464, %v2683
  %v2692 = vadd.f32 %v2465, %v2688
  %v2693 = vsel %vm91, %v2691, 0.0
  %2694 = vadd.xlane.f32.xlu0 %v2693
  %v2695 = vpop.xlane.xlu0 %2694
  %v2696 = vsel %vm91, %v2692, 0.0
  %2697 = vadd.xlane.f32.xlu0 %v2696
  %v2698 = vpop.xlane.xlu0 %2697
  %v2699 = vmul.f32 %v2695, %v98
  %v2700 = vmul.f32 %v2698, %v98
  %v2701 = vmul.f32 %v2691, %v2691
  %v2702 = vmul.f32 %v2692, %v2692
  %v2703 = vsel %vm91, %v2701, 0.0
  %2704 = vadd.xlane.f32.xlu0 %v2703
  %v2705 = vpop.xlane.xlu0 %2704
  %v2706 = vsel %vm91, %v2702, 0.0
  %2707 = vadd.xlane.f32.xlu0 %v2706
  %v2708 = vpop.xlane.xlu0 %2707
  %v2709 = vmul.f32 %v2705, %v98
  %v2710 = vmul.f32 %v2708, %v98
  %v2711 = vmul.f32 %v2699, %v2699
  %v2712 = vmul.f32 %v2700, %v2700
  %v2713 = vsub.f32 %v2709, %v2711
  %v2714 = vsub.f32 %v2710, %v2712
  %v2715 = vsub.f32 %v2691, %v2699
  %v2716 = vsub.f32 %v2692, %v2700
  %v2717 = vadd.f32 %v2713, 1e-05
  %v2718 = vadd.f32 %v2714, 1e-05
  %v2719 = vrsqrt.pop %v2717
  %v2720 = vrsqrt.pop %v2718
  %v2721 = vmul.f32 %v2715, %v2719
  %v2722 = vmul.f32 %v2716, %v2720
  %v2723 = vlaneseq
  %v2724 = vshrl.u32 %v2723, 7
  %v2725 = vsub.s32 7, %v2724
  %v2726 = vrot.slane %v18, %v2725
  %v2727 = vmul.f32 %v2721, %v2726
  %v2728 = vmul.f32 %v2722, %v2726
  %v2729 = vlaneseq
  %v2730 = vshrl.u32 %v2729, 7
  %v2731 = vsub.s32 0, %v2730
  %v2732 = vrot.slane %v19, %v2731
  %v2733 = vadd.f32 %v2727, %v2732
  %v2734 = vadd.f32 %v2728, %v2732
  %v2735 = vlaneseq
  %v2736 = vshrl.u32 %v2735, 7
  %v2737 = vsub.s32 3, %v2736
  %v2738 = vrot.slane %v19, %v2737
  %v2740 = vrot.slane %v19, 1
  %v2742 = vsel %vm91, %v2733, 0
  %v2745 = vsel %vm91, %v2734, 0
  %v2747 = vsel %vm91, %v2740, 0
  %2749 = vmatprep.subr.mxu0 0.0
  %2750 = vmatpush1.xpose.msra.mxu0 0.0
  %2751 = vmatprep.subr.mxu0 0.0
  %2752 = vmatpush1.xpose.msra.mxu0 0.0
  %2753 = vmatprep.subr.mxu0 0.0
  %2754 = vmatpush1.xpose.msra.mxu0 0.0
  %2755 = vmatprep.subr.mxu0 0.0
  %2756 = vmatpush1.xpose.msra.mxu0 0.0
  %2757 = vmatprep.subr.mxu0 0.0
  %2758 = vmatpush1.xpose.msra.mxu0 0.0
  %2759 = vmatprep.subr.mxu0 0.0
  %2760 = vmatpush1.xpose.msra.mxu0 0.0
  %2761 = vmatprep.subr.mxu0 0.0
  %2762 = vmatpush1.xpose.msra.mxu0 0.0
  %2763 = vmatprep.subr.mxu0 0.0
  %2764 = vmatpush1.xpose.msra.mxu0 0.0
  %2765 = vmatprep.subr.mxu0 0.0
  %2766 = vmatpush1.xpose.msra.mxu0 0.0
  %2767 = vmatprep.subr.mxu0 0.0
  %2768 = vmatpush1.xpose.msra.mxu0 0.0
  %2769 = vmatprep.subr.mxu0 0.0
  %2770 = vmatpush1.xpose.msra.mxu0 0.0
  %2771 = vmatprep.subr.mxu0 0.0
  %2772 = vmatpush1.xpose.msra.mxu0 0.0
  %2773 = vmatprep.subr.mxu0 0.0
  %2774 = vmatpush1.xpose.msra.mxu0 0.0
  %2775 = vmatprep.subr.mxu0 0.0
  %2776 = vmatpush1.xpose.msra.mxu0 0.0
  %2777 = vmatprep.subr.mxu0 0.0
  %2778 = vmatpush1.xpose.msra.mxu0 0.0
  %2779 = vmatprep.subr.mxu0 0.0
  %2780 = vmatpush1.xpose.msra.mxu0 %v2747
  %2781 = vmatprep.subr.mxu0 0.0
  %2782 = vmatpush2.xpose.msra.mxu0 0.0
  %2783 = vmatprep.subr.mxu0 0.0
  %2784 = vmatpush2.xpose.msra.mxu0 0.0
  %2785 = vmatprep.subr.mxu0 0.0
  %2786 = vmatpush2.xpose.msra.mxu0 0.0
  %2787 = vmatprep.subr.mxu0 0.0
  %2788 = vmatpush2.xpose.msra.mxu0 0.0
  %2789 = vmatprep.subr.mxu0 0.0
  %2790 = vmatpush2.xpose.msra.mxu0 0.0
  %2791 = vmatprep.subr.mxu0 0.0
  %2792 = vmatpush2.xpose.msra.mxu0 0.0
  %2793 = vmatprep.subr.mxu0 0.0
  %2794 = vmatpush2.xpose.msra.mxu0 0.0
  %2795 = vmatprep.subr.mxu0 0.0
  %2796 = vmatpush2.xpose.msra.mxu0 0.0
  %2797 = vmatprep.subr.mxu0 0.0
  %2798 = vmatpush2.xpose.msra.mxu0 0.0
  %2799 = vmatprep.subr.mxu0 0.0
  %2800 = vmatpush2.xpose.msra.mxu0 0.0
  %2801 = vmatprep.subr.mxu0 0.0
  %2802 = vmatpush2.xpose.msra.mxu0 0.0
  %2803 = vmatprep.subr.mxu0 0.0
  %2804 = vmatpush2.xpose.msra.mxu0 0.0
  %2805 = vmatprep.subr.mxu0 0.0
  %2806 = vmatpush2.xpose.msra.mxu0 0.0
  %2807 = vmatprep.subr.mxu0 0.0
  %2808 = vmatpush2.xpose.msra.mxu0 0.0
  %2809 = vmatprep.subr.mxu0 0.0
  %2810 = vmatpush2.xpose.msra.mxu0 0.0
  %2811 = vmatprep.subr.mxu0 0.0
  %2812 = vmatpush2.xpose.msra.mxu0 0.0
  %2813 = vmatprep.mubr.f32.mxu0 0.0
  %2814 = vmatmul.mubr.f32.gmra.mxu0 %v2742
  %v2815 = vpop.f32.mrf.mxu0
  %v2816 = vadd.f32 %v2738, %v2815
  %v2817 = vpop.f32.mrf.mxu0
  %2818 = vmatprep.mubr.f32.mxu0 0.0
  %2819 = vmatmul.mubr.f32.gmra.mxu0 %v2745
  %v2820 = vpop.f32.mrf.mxu0
  %v2821 = vadd.f32 %v2738, %v2820
  %v2822 = vpop.f32.mrf.mxu0
  %2823 = vdwg.mxu0
  %vm2824 = vcmask 15360
  %2825 = vst.msk [vmem:[%s4] sm:$0xff] %vm2824, %v2816
  %2826 = vst.msk [vmem:[%s4 + $0x8] sm:$0xff] %vm2824, %v2821
  // Predicated region
  $region18: #{decoder_forward.1} parent=0 // pred_check
    _
  $region19: #{decoder_forward.1} parent=0 // pred_check_branch
    %2828 = sbr.rel (0) target = $region21
  $region20: #{decoder_forward.1} parent=0 // pred_region
    _
  $region21: #{decoder_forward.1} parent=0 // pred_fallthru
    _
  // Predicated region
  $region22: #{decoder_forward.1} parent=0 // pred_check
    _
  $region23: #{decoder_forward.1} parent=0 // pred_check_branch
    %2830 = sbr.rel (0) target = $region25
  $region24: #{decoder_forward.1} parent=0 // pred_region
    _
  $region25: #{decoder_forward.1} parent=0 // pred_fallthru
    _

</llo_original>
